<compile_context>
chip_gen: v7x
topology: tpu7x:2x2x1
jax: 0.10.0
libtpu: 0.0.40
codegen_flags: <defaults>
</compile_context>

<pallas_src>
import functools

import numpy as np
import jax
import jax.numpy as jnp
from jax.experimental import pallas as pl
from jax.experimental.pallas import tpu as pltpu


# ----------------------------------------------------------------------------
# Static neighborhood-attention bias construction (glue, numpy/JAX).
# bias[h, q, key] = rpb value inside the clamped k x k window of query q,
#                   -1e30 outside (NATTEN window semantics).
# ----------------------------------------------------------------------------
def build_attn_bias(rpb, H, W, k):
    r = k // 2

    def starts(length):
        i = np.arange(length)
        ni = np.clip(i - r, 0, length - k)                         # window start
        pi = (r
              + np.where(i < r, r - i, 0)
              + np.where(i + r >= length, length - i - 1 - r, 0))  # rpb start
        return ni, pi

    ni_h, pi_h = starts(H)
    ni_w, pi_w = starts(W)

    qi, qj = np.meshgrid(np.arange(H), np.arange(W), indexing="ij")
    qi, qj = qi.reshape(-1), qj.reshape(-1)        # query coords (L,)
    ka, kb = qi.copy(), qj.copy()                  # key coords   (L,)

    di = ka[None, :] - ni_h[qi][:, None]           # (L, L) offset inside window
    dj = kb[None, :] - ni_w[qj][:, None]
    mask = (di >= 0) & (di < k) & (dj >= 0) & (dj < k)

    bi = np.clip(pi_h[qi][:, None] + di, 0, 2 * k - 2)
    bj = np.clip(pi_w[qj][:, None] + dj, 0, 2 * k - 2)

    bias_vals = rpb[:, jnp.asarray(bi), jnp.asarray(bj)]           # (heads, L, L)
    return jnp.where(jnp.asarray(mask)[None], bias_vals,
                     jnp.float32(-1e30)).astype(jnp.float32)


def _gelu_tanh(x):
    # tanh-approx GELU: the tanh goes to the EUP slot instead of a long VALU
    # polynomial.  Matches jax.nn.gelu(approximate=True).
    c = np.float32(np.sqrt(2.0 / np.pi))
    return 0.5 * x * (1.0 + jnp.tanh(c * (x + np.float32(0.044715) * x * x * x)))


# ----------------------------------------------------------------------------
# Kernel 1: fused GroupNorm-apply + QKV projection -> head-major bf16 q/k/v.
# ----------------------------------------------------------------------------
def gn_qkv_kernel(x_ref, scale_ref, shift_ref, qkv_w_ref, qkv_b_ref,
                  q_ref, k_ref, v_ref, *, heads, head_dim, q_scale):
    C = heads * head_dim
    # GroupNorm folded to a single per-channel FMA (scale/shift precomputed per sample).
    xg = x_ref[0] * scale_ref[0] + shift_ref[0]                     # (tq, C) f32

    # One big MXU matmul, bf16 operands, f32 accumulation.
    qkv = jnp.dot(xg.astype(jnp.bfloat16), qkv_w_ref[...],
                  preferred_element_type=jnp.float32) + qkv_b_ref[...]   # (tq, 3C)

    # Pure data reorganization into head-major layout (static slices/stores).
    for h in range(heads):
        lo, hi = h * head_dim, (h + 1) * head_dim
        q_ref[0, h] = (qkv[:, lo:hi] * q_scale).astype(jnp.bfloat16)
        k_ref[0, h] = qkv[:, C + lo:C + hi].astype(jnp.bfloat16)
        v_ref[0, h] = qkv[:, 2 * C + lo:2 * C + hi].astype(jnp.bfloat16)


# ----------------------------------------------------------------------------
# Kernel 2: flash-style neighborhood attention + proj + residual + LN + MLP.
# ----------------------------------------------------------------------------
def na_mlp_kernel(q_ref, k_ref, v_ref, bias_ref, x_ref,
                  proj_w_ref, proj_b_ref, ln_w_ref, ln_b_ref,
                  fc1_w_ref, fc1_b_ref, fc2_w_ref, fc2_b_ref,
                  out_ref, m_scr, l_scr, acc_scr, *, heads):
    eps = 1e-5
    kj = pl.program_id(2)

    @pl.when(kj == 0)
    def _():
        m_scr[...] = jnp.full(m_scr.shape, -jnp.inf, dtype=m_scr.dtype)
        l_scr[...] = jnp.zeros(l_scr.shape, dtype=l_scr.dtype)
        acc_scr[...] = jnp.zeros(acc_scr.shape, dtype=acc_scr.dtype)

    q = q_ref[0]                      # (heads, tq, dh) bf16, already scaled
    k = k_ref[0]                      # (heads, tk, dh) bf16
    v = v_ref[0]                      # (heads, tk, dh) bf16

    # All-head logits in one batched MXU contraction (no per-head lane slicing).
    s = jnp.einsum('hqd,hkd->hqk', q, k, preferred_element_type=jnp.float32)
    s = s + bias_ref[...].astype(jnp.float32)             # (heads, tq, tk)

    # Online softmax (normalization deferred to the finalize step).
    m_prev = m_scr[...]
    m_new = jnp.maximum(m_prev, jnp.max(s, axis=-1, keepdims=True))
    alpha = jnp.exp(m_prev - m_new)
    p = jnp.exp(s - m_new)
    l_scr[...] = alpha * l_scr[...] + jnp.sum(p, axis=-1, keepdims=True)
    acc_scr[...] = alpha * acc_scr[...] + jnp.einsum(
        'hqk,hkd->hqd', p.astype(v.dtype), v, preferred_element_type=jnp.float32)
    m_scr[...] = m_new

    @pl.when(kj == pl.num_programs(2) - 1)
    def _():
        # Deferred normalization: heads*tq*dh multiplies instead of heads*tq*tk.
        inv_l = pl.reciprocal(l_scr[...], approx=True)      # (heads, tq, 1), EUP
        o = acc_scr[...] * inv_l                            # (heads, tq, dh) f32

        # Concatenate heads -> one full-C output projection (contraction depth C).
        o_tok = jnp.concatenate([o[h] for h in range(heads)], axis=-1)  # (tq, C)
        attn = jnp.dot(o_tok.astype(jnp.bfloat16), proj_w_ref[...],
                       preferred_element_type=jnp.float32) + proj_b_ref[...]

        xres = attn + x_ref[0]                              # residual with original x

        # LayerNorm over channels (f32).
        mu = jnp.mean(xres, axis=-1, keepdims=True)
        var = jnp.mean((xres - mu) ** 2, axis=-1, keepdims=True)
        xl = (xres - mu) * jax.lax.rsqrt(var + eps)
        xl = xl * ln_w_ref[...] + ln_b_ref[...]

        # MLP: fc1 -> tanh-GELU -> fc2 (bf16 MXU operands, f32 elementwise).
        h1 = jnp.dot(xl.astype(jnp.bfloat16), fc1_w_ref[...],
                     preferred_element_type=jnp.float32) + fc1_b_ref[...]
        h1 = _gelu_tanh(h1)
        h2 = jnp.dot(h1.astype(jnp.bfloat16), fc2_w_ref[...],
                     preferred_element_type=jnp.float32) + fc2_b_ref[...]

        out_ref[0] = (xres + h2).astype(out_ref.dtype)      # lane-dense (tq, C) store


# ----------------------------------------------------------------------------
# Wrapper
# ----------------------------------------------------------------------------
def na_layer_forward(x_nchw, params, heads, window_size, tq=128, tk=128):
    N, C, H, W = x_nchw.shape
    L = H * W
    dh = C // heads
    assert heads * dh == C
    tq = min(tq, L)
    tk = min(tk, L)
    assert L % tq == 0 and L % tk == 0
    eps = 1e-5
    f32, bf16 = jnp.float32, jnp.bfloat16

    # NCHW -> token layout (row-major over (h, w)), matching the PyTorch rearranges.
    x_tok = jnp.transpose(x_nchw, (0, 2, 3, 1)).reshape(N, L, C).astype(f32)

    # GroupNorm(1, C): per-sample stats (cheap glue) folded with the affine into a
    # single per-sample (1, C) scale/shift so kernel 1 does one FMA.
    gn_w = params["gn_w"].reshape(1, 1, C).astype(f32)
    gn_b = params["gn_b"].reshape(1, 1, C).astype(f32)
    mean = jnp.mean(x_tok, axis=(1, 2), keepdims=True)                  # (N,1,1)
    var = jnp.mean((x_tok - mean) ** 2, axis=(1, 2), keepdims=True)
    rstd = jax.lax.rsqrt(var + eps)
    gn_scale = (rstd * gn_w).astype(f32)                                # (N,1,C)
    gn_shift = (gn_b - mean * rstd * gn_w).astype(f32)                  # (N,1,C)

    # Parameter packing: matmul weights in bf16, biases / affine params in f32.
    qkv_w = params["qkv_w"].astype(bf16)
    qkv_b = params["qkv_b"].reshape(1, 3 * C).astype(f32)
    proj_w = params["proj_w"].astype(bf16)
    proj_b = params["proj_b"].reshape(1, C).astype(f32)
    ln_w = params["ln_w"].reshape(1, C).astype(f32)
    ln_b = params["ln_b"].reshape(1, C).astype(f32)
    fc1_w = params["fc1_w"].astype(bf16)
    fc1_b = params["fc1_b"].reshape(1, 2 * C).astype(f32)
    fc2_w = params["fc2_w"].astype(bf16)
    fc2_b = params["fc2_b"].reshape(1, C).astype(f32)
    attn_bias = build_attn_bias(params["rpb"], H, W, window_size).astype(bf16)

    scale = float(dh) ** -0.5
    cparams1 = pltpu.CompilerParams(
        dimension_semantics=("parallel", "parallel"),
        vmem_limit_bytes=32 * 1024 * 1024)
    cparams2 = pltpu.CompilerParams(
        dimension_semantics=("parallel", "parallel", "arbitrary"),
        vmem_limit_bytes=32 * 1024 * 1024)   # safe on v5e/v6e/v7x at these tile sizes

    # ---- kernel 1: GroupNorm-apply + QKV -> head-major bf16 q/k/v ------------
    q, k, v = pl.pallas_call(
        functools.partial(gn_qkv_kernel, heads=heads, head_dim=dh, q_scale=scale),
        grid=(N, L // tq),
        in_specs=[
            pl.BlockSpec((1, tq, C), lambda n, i: (n, i, 0)),     # x
            pl.BlockSpec((1, 1, C), lambda n, i: (n, 0, 0)),      # gn scale
            pl.BlockSpec((1, 1, C), lambda n, i: (n, 0, 0)),      # gn shift
            pl.BlockSpec((C, 3 * C), lambda n, i: (0, 0)),        # qkv_w
            pl.BlockSpec((1, 3 * C), lambda n, i: (0, 0)),        # qkv_b
        ],
        out_specs=(
            pl.BlockSpec((1, heads, tq, dh), lambda n, i: (n, 0, i, 0)),
            pl.BlockSpec((1, heads, tq, dh), lambda n, i: (n, 0, i, 0)),
            pl.BlockSpec((1, heads, tq, dh), lambda n, i: (n, 0, i, 0)),
        ),
        out_shape=(
            jax.ShapeDtypeStruct((N, heads, L, dh), bf16),
            jax.ShapeDtypeStruct((N, heads, L, dh), bf16),
            jax.ShapeDtypeStruct((N, heads, L, dh), bf16),
        ),
        compiler_params=cparams1,
    )(x_tok, gn_scale, gn_shift, qkv_w, qkv_b)

    # ---- kernel 2: tiled neighborhood attention + proj + residual + LN + MLP -
    out_tok = pl.pallas_call(
        functools.partial(na_mlp_kernel, heads=heads),
        grid=(N, L // tq, L // tk),
        in_specs=[
            pl.BlockSpec((1, heads, tq, dh), lambda n, i, j: (n, 0, i, 0)),  # q
            pl.BlockSpec((1, heads, tk, dh), lambda n, i, j: (n, 0, j, 0)),  # k
            pl.BlockSpec((1, heads, tk, dh), lambda n, i, j: (n, 0, j, 0)),  # v
            pl.BlockSpec((heads, tq, tk), lambda n, i, j: (0, i, j)),        # bias tile
            pl.BlockSpec((1, tq, C), lambda n, i, j: (n, i, 0)),             # x residual
            pl.BlockSpec((C, C), lambda n, i, j: (0, 0)),                    # proj_w
            pl.BlockSpec((1, C), lambda n, i, j: (0, 0)),                    # proj_b
            pl.BlockSpec((1, C), lambda n, i, j: (0, 0)),                    # ln_w
            pl.BlockSpec((1, C), lambda n, i, j: (0, 0)),                    # ln_b
            pl.BlockSpec((C, 2 * C), lambda n, i, j: (0, 0)),                # fc1_w
            pl.BlockSpec((1, 2 * C), lambda n, i, j: (0, 0)),                # fc1_b
            pl.BlockSpec((2 * C, C), lambda n, i, j: (0, 0)),                # fc2_w
            pl.BlockSpec((1, C), lambda n, i, j: (0, 0)),                    # fc2_b
        ],
        out_specs=pl.BlockSpec((1, tq, C), lambda n, i, j: (n, i, 0)),
        out_shape=jax.ShapeDtypeStruct((N, L, C), jnp.float32),
        scratch_shapes=[
            pltpu.VMEM((heads, tq, 1), jnp.float32),    # running max
            pltpu.VMEM((heads, tq, 1), jnp.float32),    # running denom
            pltpu.VMEM((heads, tq, dh), jnp.float32),   # running PV accumulator
        ],
        compiler_params=cparams2,
    )(q, k, v, attn_bias, x_tok,
      proj_w, proj_b, ln_w, ln_b, fc1_w, fc1_b, fc2_w, fc2_b)

    return jnp.transpose(out_tok.reshape(N, H, W, C), (0, 3, 1, 2))


# ----------------------------------------------------------------------------
# Pure-JAX reference mirroring the kernel's precision policy (bf16 MXU operands,
# f32 accumulation/elementwise, tanh-GELU) for a correctness spot-check.
# ----------------------------------------------------------------------------
def na_layer_reference(x_nchw, params, heads, window_size):
    N, C, H, W = x_nchw.shape
    L, dh, eps = H * W, C // heads, 1e-5
    f32, bf16 = jnp.float32, jnp.bfloat16
    x = jnp.transpose(x_nchw, (0, 2, 3, 1)).reshape(N, L, C).astype(f32)

    mean = jnp.mean(x, axis=(1, 2), keepdims=True)
    var = jnp.mean((x - mean) ** 2, axis=(1, 2), keepdims=True)
    xg = (x - mean) * jax.lax.rsqrt(var + eps) * params["gn_w"] + params["gn_b"]

    qkv = jnp.einsum("nlc,cd->nld", xg.astype(bf16), params["qkv_w"].astype(bf16),
                     preferred_element_type=f32) + params["qkv_b"]
    q, k, v = qkv[..., :C], qkv[..., C:2 * C], qkv[..., 2 * C:]
    q = (q * (dh ** -0.5)).reshape(N, L, heads, dh).astype(bf16)
    k = k.reshape(N, L, heads, dh).astype(bf16)
    v = v.reshape(N, L, heads, dh).astype(bf16)

    bias = build_attn_bias(params["rpb"], H, W, window_size).astype(bf16).astype(f32)
    logits = jnp.einsum("nqhd,nkhd->nhqk", q, k, preferred_element_type=f32) + bias[None]
    p = jax.nn.softmax(logits, axis=-1)
    o = jnp.einsum("nhqk,nkhd->nqhd", p.astype(bf16), v,
                   preferred_element_type=f32).reshape(N, L, C)
    attn = jnp.einsum("nlc,cd->nld", o.astype(bf16), params["proj_w"].astype(bf16),
                      preferred_element_type=f32) + params["proj_b"]
    xres = attn + x

    mu = jnp.mean(xres, axis=-1, keepdims=True)
    v2 = jnp.mean((xres - mu) ** 2, axis=-1, keepdims=True)
    xl = (xres - mu) * jax.lax.rsqrt(v2 + eps) * params["ln_w"] + params["ln_b"]
    h1 = jnp.einsum("nlc,cd->nld", xl.astype(bf16), params["fc1_w"].astype(bf16),
                    preferred_element_type=f32) + params["fc1_b"]
    h1 = jax.nn.gelu(h1, approximate=True)
    h2 = jnp.einsum("nld,dc->nlc", h1.astype(bf16), params["fc2_w"].astype(bf16),
                    preferred_element_type=f32) + params["fc2_b"]
    y = xres + h2
    return jnp.transpose(y.reshape(N, H, W, C), (0, 3, 1, 2))


# ----------------------------------------------------------------------------
if __name__ == "__main__":
    # Small but TPU-friendly shapes: C=128 keeps the kernel I/O lane-dense,
    # L = 16*16 = 256 gives 2x2 query/key tiles so the flash-style tiling and the
    # online softmax across key tiles are actually exercised.
    N, C, H, W = 2, 128, 16, 16
    heads, window = 4, 7

    key = jax.random.PRNGKey(0)
    ks = jax.random.split(key, 14)
    f32 = jnp.float32
    params = {
        "gn_w":  1.0 + 0.1 * jax.random.normal(ks[0], (C,), f32),
        "gn_b":  0.1 * jax.random.normal(ks[1], (C,), f32),
        "qkv_w": 0.05 * jax.random.normal(ks[2], (C, 3 * C), f32),
        "qkv_b": 0.05 * jax.random.normal(ks[3], (3 * C,), f32),
        "rpb":   0.1 * jax.random.normal(ks[4], (heads, 2 * window - 1, 2 * window - 1), f32),
        "proj_w": 0.05 * jax.random.normal(ks[5], (C, C), f32),
        "proj_b": 0.05 * jax.random.normal(ks[6], (C,), f32),
        "ln_w":  1.0 + 0.1 * jax.random.normal(ks[7], (C,), f32),
        "ln_b":  0.1 * jax.random.normal(ks[8], (C,), f32),
        "fc1_w": 0.05 * jax.random.normal(ks[9], (C, 2 * C), f32),
        "fc1_b": 0.05 * jax.random.normal(ks[10], (2 * C,), f32),
        "fc2_w": 0.05 * jax.random.normal(ks[11], (2 * C, C), f32),
        "fc2_b": 0.05 * jax.random.normal(ks[12], (C,), f32),
    }
    x = jax.random.normal(ks[13], (N, C, H, W), f32)

    y = jax.block_until_ready(na_layer_forward(x, params, heads, window))
    y_ref = jax.block_until_ready(na_layer_reference(x, params, heads, window))

    assert y.shape == (N, C, H, W)
    # Tolerance accounts for bf16 MXU operands + approx reciprocal.
    if not np.allclose(np.asarray(y), np.asarray(y_ref), atol=1e-2, rtol=1e-2):
        raise RuntimeError(
            f"mismatch: max abs diff {np.max(np.abs(np.asarray(y) - np.asarray(y_ref)))}")
    print("KERNEL_OK")
</pallas_src>

<mosaic_0001>
module attributes {stable_mosaic.version = 11 : i64} {
  func.func @gn_qkv_kernel(%arg0: i32, %arg1: i32, %arg2: memref<1x128x128xf32, #tpu.memory_space<vmem>>, %arg3: memref<1x1x128xf32, #tpu.memory_space<vmem>>, %arg4: memref<1x1x128xf32, #tpu.memory_space<vmem>>, %arg5: memref<128x384xbf16, #tpu.memory_space<vmem>>, %arg6: memref<1x384xf32, #tpu.memory_space<vmem>>, %arg7: memref<1x4x128x32xbf16, #tpu.memory_space<vmem>>, %arg8: memref<1x4x128x32xbf16, #tpu.memory_space<vmem>>, %arg9: memref<1x4x128x32xbf16, #tpu.memory_space<vmem>>) attributes {dimension_semantics = [#tpu.dimension_semantics<parallel>, #tpu.dimension_semantics<parallel>], iteration_bounds = array<i64: 2, 2>, scalar_prefetch = 0 : i64, scratch_operands = 0 : i64, tpu.core_type = #tpu.core_type<tc>, window_params = [{transform_indices = @transform_0, window_bounds = array<i64: 1, 128, 128>}, {transform_indices = @transform_1, window_bounds = array<i64: 1, 1, 128>}, {transform_indices = @transform_2, window_bounds = array<i64: 1, 1, 128>}, {pipeline_mode = #tpu.pipeline_mode<synchronous>, transform_indices = @transform_3, window_bounds = array<i64: 128, 384>}, {pipeline_mode = #tpu.pipeline_mode<synchronous>, transform_indices = @transform_4, window_bounds = array<i64: 1, 384>}, {transform_indices = @transform_5, window_bounds = array<i64: 1, 4, 128, 32>}, {transform_indices = @transform_6, window_bounds = array<i64: 1, 4, 128, 32>}, {transform_indices = @transform_7, window_bounds = array<i64: 1, 4, 128, 32>}]} {
    %c0 = arith.constant 0 : index
    %c0_0 = arith.constant 0 : index
    %c0_1 = arith.constant 0 : index
    %0 = vector.load %arg2[%c0, %c0_0, %c0_1] : memref<1x128x128xf32, #tpu.memory_space<vmem>>, vector<1x128x128xf32>
    %1 = vector.shape_cast %0 : vector<1x128x128xf32> to vector<128x128xf32>
    %c0_2 = arith.constant 0 : index
    %c0_3 = arith.constant 0 : index
    %c0_4 = arith.constant 0 : index
    %2 = vector.load %arg3[%c0_2, %c0_3, %c0_4] : memref<1x1x128xf32, #tpu.memory_space<vmem>>, vector<1x1x128xf32>
    %3 = vector.shape_cast %2 : vector<1x1x128xf32> to vector<1x128xf32>
    %4 = vector.broadcast %3 : vector<1x128xf32> to vector<128x128xf32>
    %5 = arith.mulf %1, %4 : vector<128x128xf32>
    %c0_5 = arith.constant 0 : index
    %c0_6 = arith.constant 0 : index
    %c0_7 = arith.constant 0 : index
    %6 = vector.load %arg4[%c0_5, %c0_6, %c0_7] : memref<1x1x128xf32, #tpu.memory_space<vmem>>, vector<1x1x128xf32>
    %7 = vector.shape_cast %6 : vector<1x1x128xf32> to vector<1x128xf32>
    %8 = vector.broadcast %7 : vector<1x128xf32> to vector<128x128xf32>
    %9 = arith.addf %5, %8 : vector<128x128xf32>
    %10 = arith.truncf %9 : vector<128x128xf32> to vector<128x128xbf16>
    %c0_8 = arith.constant 0 : index
    %c0_9 = arith.constant 0 : index
    %11 = vector.load %arg5[%c0_8, %c0_9] : memref<128x384xbf16, #tpu.memory_space<vmem>>, vector<128x384xbf16>
    %cst = arith.constant dense<0.000000e+00> : vector<128x384xf32>
    %12 = tpu.matmul %10, %11, %cst {dimension_numbers = #tpu.dot_dimension_numbers<[1], [0], [0], [1], [0, 0, 1, 1], [], []>} : vector<128x128xbf16>, vector<128x384xbf16>, vector<128x384xf32> -> vector<128x384xf32>
    %c0_10 = arith.constant 0 : index
    %c0_11 = arith.constant 0 : index
    %13 = vector.load %arg6[%c0_10, %c0_11] : memref<1x384xf32, #tpu.memory_space<vmem>>, vector<1x384xf32>
    %14 = vector.broadcast %13 : vector<1x384xf32> to vector<128x384xf32>
    %15 = arith.addf %12, %14 : vector<128x384xf32>
    %16 = vector.extract_strided_slice %15 {offsets = [0, 0], sizes = [128, 32], strides = [1, 1]} : vector<128x384xf32> to vector<128x32xf32>
    %cst_12 = arith.constant 0.176776692 : f32
    %17 = vector.broadcast %cst_12 : f32 to vector<128x32xf32>
    %18 = arith.mulf %16, %17 : vector<128x32xf32>
    %19 = arith.truncf %18 : vector<128x32xf32> to vector<128x32xbf16>
    %c0_13 = arith.constant 0 : index
    %c0_14 = arith.constant 0 : index
    %c0_15 = arith.constant 0 : index
    %c0_16 = arith.constant 0 : index
    %20 = vector.load %arg7[%c0_13, %c0_14, %c0_15, %c0_16] : memref<1x4x128x32xbf16, #tpu.memory_space<vmem>>, vector<1x1x128x32xbf16>
    %21 = vector.shape_cast %20 : vector<1x1x128x32xbf16> to vector<128x32xbf16>
    %22 = vector.shape_cast %19 : vector<128x32xbf16> to vector<1x1x128x32xbf16>
    tpu.vector_store %arg7[%c0_13, %c0_14, %c0_15, %c0_16], %22 {strides = array<i32>} : memref<1x4x128x32xbf16, #tpu.memory_space<vmem>>, vector<1x1x128x32xbf16>,
    %23 = vector.extract_strided_slice %15 {offsets = [0, 128], sizes = [128, 32], strides = [1, 1]} : vector<128x384xf32> to vector<128x32xf32>
    %24 = arith.truncf %23 : vector<128x32xf32> to vector<128x32xbf16>
    %c0_17 = arith.constant 0 : index
    %c0_18 = arith.constant 0 : index
    %c0_19 = arith.constant 0 : index
    %c0_20 = arith.constant 0 : index
    %25 = vector.load %arg8[%c0_17, %c0_18, %c0_19, %c0_20] : memref<1x4x128x32xbf16, #tpu.memory_space<vmem>>, vector<1x1x128x32xbf16>
    %26 = vector.shape_cast %25 : vector<1x1x128x32xbf16> to vector<128x32xbf16>
    %27 = vector.shape_cast %24 : vector<128x32xbf16> to vector<1x1x128x32xbf16>
    tpu.vector_store %arg8[%c0_17, %c0_18, %c0_19, %c0_20], %27 {strides = array<i32>} : memref<1x4x128x32xbf16, #tpu.memory_space<vmem>>, vector<1x1x128x32xbf16>,
    %28 = vector.extract_strided_slice %15 {offsets = [0, 256], sizes = [128, 32], strides = [1, 1]} : vector<128x384xf32> to vector<128x32xf32>
    %29 = arith.truncf %28 : vector<128x32xf32> to vector<128x32xbf16>
    %c0_21 = arith.constant 0 : index
    %c0_22 = arith.constant 0 : index
    %c0_23 = arith.constant 0 : index
    %c0_24 = arith.constant 0 : index
    %30 = vector.load %arg9[%c0_21, %c0_22, %c0_23, %c0_24] : memref<1x4x128x32xbf16, #tpu.memory_space<vmem>>, vector<1x1x128x32xbf16>
    %31 = vector.shape_cast %30 : vector<1x1x128x32xbf16> to vector<128x32xbf16>
    %32 = vector.shape_cast %29 : vector<128x32xbf16> to vector<1x1x128x32xbf16>
    tpu.vector_store %arg9[%c0_21, %c0_22, %c0_23, %c0_24], %32 {strides = array<i32>} : memref<1x4x128x32xbf16, #tpu.memory_space<vmem>>, vector<1x1x128x32xbf16>,
    %33 = vector.extract_strided_slice %15 {offsets = [0, 32], sizes = [128, 32], strides = [1, 1]} : vector<128x384xf32> to vector<128x32xf32>
    %cst_25 = arith.constant 0.176776692 : f32
    %34 = vector.broadcast %cst_25 : f32 to vector<128x32xf32>
    %35 = arith.mulf %33, %34 : vector<128x32xf32>
    %36 = arith.truncf %35 : vector<128x32xf32> to vector<128x32xbf16>
    %c0_26 = arith.constant 0 : index
    %c1 = arith.constant 1 : index
    %c0_27 = arith.constant 0 : index
    %c0_28 = arith.constant 0 : index
    %37 = vector.load %arg7[%c0_26, %c1, %c0_27, %c0_28] : memref<1x4x128x32xbf16, #tpu.memory_space<vmem>>, vector<1x1x128x32xbf16>
    %38 = vector.shape_cast %37 : vector<1x1x128x32xbf16> to vector<128x32xbf16>
    %39 = vector.shape_cast %36 : vector<128x32xbf16> to vector<1x1x128x32xbf16>
    tpu.vector_store %arg7[%c0_26, %c1, %c0_27, %c0_28], %39 {strides = array<i32>} : memref<1x4x128x32xbf16, #tpu.memory_space<vmem>>, vector<1x1x128x32xbf16>,
    %40 = vector.extract_strided_slice %15 {offsets = [0, 160], sizes = [128, 32], strides = [1, 1]} : vector<128x384xf32> to vector<128x32xf32>
    %41 = arith.truncf %40 : vector<128x32xf32> to vector<128x32xbf16>
    %c0_29 = arith.constant 0 : index
    %c1_30 = arith.constant 1 : index
    %c0_31 = arith.constant 0 : index
    %c0_32 = arith.constant 0 : index
    %42 = vector.load %arg8[%c0_29, %c1_30, %c0_31, %c0_32] : memref<1x4x128x32xbf16, #tpu.memory_space<vmem>>, vector<1x1x128x32xbf16>
    %43 = vector.shape_cast %42 : vector<1x1x128x32xbf16> to vector<128x32xbf16>
    %44 = vector.shape_cast %41 : vector<128x32xbf16> to vector<1x1x128x32xbf16>
    tpu.vector_store %arg8[%c0_29, %c1_30, %c0_31, %c0_32], %44 {strides = array<i32>} : memref<1x4x128x32xbf16, #tpu.memory_space<vmem>>, vector<1x1x128x32xbf16>,
    %45 = vector.extract_strided_slice %15 {offsets = [0, 288], sizes = [128, 32], strides = [1, 1]} : vector<128x384xf32> to vector<128x32xf32>
    %46 = arith.truncf %45 : vector<128x32xf32> to vector<128x32xbf16>
    %c0_33 = arith.constant 0 : index
    %c1_34 = arith.constant 1 : index
    %c0_35 = arith.constant 0 : index
    %c0_36 = arith.constant 0 : index
    %47 = vector.load %arg9[%c0_33, %c1_34, %c0_35, %c0_36] : memref<1x4x128x32xbf16, #tpu.memory_space<vmem>>, vector<1x1x128x32xbf16>
    %48 = vector.shape_cast %47 : vector<1x1x128x32xbf16> to vector<128x32xbf16>
    %49 = vector.shape_cast %46 : vector<128x32xbf16> to vector<1x1x128x32xbf16>
    tpu.vector_store %arg9[%c0_33, %c1_34, %c0_35, %c0_36], %49 {strides = array<i32>} : memref<1x4x128x32xbf16, #tpu.memory_space<vmem>>, vector<1x1x128x32xbf16>,
    %50 = vector.extract_strided_slice %15 {offsets = [0, 64], sizes = [128, 32], strides = [1, 1]} : vector<128x384xf32> to vector<128x32xf32>
    %cst_37 = arith.constant 0.176776692 : f32
    %51 = vector.broadcast %cst_37 : f32 to vector<128x32xf32>
    %52 = arith.mulf %50, %51 : vector<128x32xf32>
    %53 = arith.truncf %52 : vector<128x32xf32> to vector<128x32xbf16>
    %c0_38 = arith.constant 0 : index
    %c2 = arith.constant 2 : index
    %c0_39 = arith.constant 0 : index
    %c0_40 = arith.constant 0 : index
    %54 = vector.load %arg7[%c0_38, %c2, %c0_39, %c0_40] : memref<1x4x128x32xbf16, #tpu.memory_space<vmem>>, vector<1x1x128x32xbf16>
    %55 = vector.shape_cast %54 : vector<1x1x128x32xbf16> to vector<128x32xbf16>
    %56 = vector.shape_cast %53 : vector<128x32xbf16> to vector<1x1x128x32xbf16>
    tpu.vector_store %arg7[%c0_38, %c2, %c0_39, %c0_40], %56 {strides = array<i32>} : memref<1x4x128x32xbf16, #tpu.memory_space<vmem>>, vector<1x1x128x32xbf16>,
    %57 = vector.extract_strided_slice %15 {offsets = [0, 192], sizes = [128, 32], strides = [1, 1]} : vector<128x384xf32> to vector<128x32xf32>
    %58 = arith.truncf %57 : vector<128x32xf32> to vector<128x32xbf16>
    %c0_41 = arith.constant 0 : index
    %c2_42 = arith.constant 2 : index
    %c0_43 = arith.constant 0 : index
    %c0_44 = arith.constant 0 : index
    %59 = vector.load %arg8[%c0_41, %c2_42, %c0_43, %c0_44] : memref<1x4x128x32xbf16, #tpu.memory_space<vmem>>, vector<1x1x128x32xbf16>
    %60 = vector.shape_cast %59 : vector<1x1x128x32xbf16> to vector<128x32xbf16>
    %61 = vector.shape_cast %58 : vector<128x32xbf16> to vector<1x1x128x32xbf16>
    tpu.vector_store %arg8[%c0_41, %c2_42, %c0_43, %c0_44], %61 {strides = array<i32>} : memref<1x4x128x32xbf16, #tpu.memory_space<vmem>>, vector<1x1x128x32xbf16>,
    %62 = vector.extract_strided_slice %15 {offsets = [0, 320], sizes = [128, 32], strides = [1, 1]} : vector<128x384xf32> to vector<128x32xf32>
    %63 = arith.truncf %62 : vector<128x32xf32> to vector<128x32xbf16>
    %c0_45 = arith.constant 0 : index
    %c2_46 = arith.constant 2 : index
    %c0_47 = arith.constant 0 : index
    %c0_48 = arith.constant 0 : index
    %64 = vector.load %arg9[%c0_45, %c2_46, %c0_47, %c0_48] : memref<1x4x128x32xbf16, #tpu.memory_space<vmem>>, vector<1x1x128x32xbf16>
    %65 = vector.shape_cast %64 : vector<1x1x128x32xbf16> to vector<128x32xbf16>
    %66 = vector.shape_cast %63 : vector<128x32xbf16> to vector<1x1x128x32xbf16>
    tpu.vector_store %arg9[%c0_45, %c2_46, %c0_47, %c0_48], %66 {strides = array<i32>} : memref<1x4x128x32xbf16, #tpu.memory_space<vmem>>, vector<1x1x128x32xbf16>,
    %67 = vector.extract_strided_slice %15 {offsets = [0, 96], sizes = [128, 32], strides = [1, 1]} : vector<128x384xf32> to vector<128x32xf32>
    %cst_49 = arith.constant 0.176776692 : f32
    %68 = vector.broadcast %cst_49 : f32 to vector<128x32xf32>
    %69 = arith.mulf %67, %68 : vector<128x32xf32>
    %70 = arith.truncf %69 : vector<128x32xf32> to vector<128x32xbf16>
    %c0_50 = arith.constant 0 : index
    %c3 = arith.constant 3 : index
    %c0_51 = arith.constant 0 : index
    %c0_52 = arith.constant 0 : index
    %71 = vector.load %arg7[%c0_50, %c3, %c0_51, %c0_52] : memref<1x4x128x32xbf16, #tpu.memory_space<vmem>>, vector<1x1x128x32xbf16>
    %72 = vector.shape_cast %71 : vector<1x1x128x32xbf16> to vector<128x32xbf16>
    %73 = vector.shape_cast %70 : vector<128x32xbf16> to vector<1x1x128x32xbf16>
    tpu.vector_store %arg7[%c0_50, %c3, %c0_51, %c0_52], %73 {strides = array<i32>} : memref<1x4x128x32xbf16, #tpu.memory_space<vmem>>, vector<1x1x128x32xbf16>,
    %74 = vector.extract_strided_slice %15 {offsets = [0, 224], sizes = [128, 32], strides = [1, 1]} : vector<128x384xf32> to vector<128x32xf32>
    %75 = arith.truncf %74 : vector<128x32xf32> to vector<128x32xbf16>
    %c0_53 = arith.constant 0 : index
    %c3_54 = arith.constant 3 : index
    %c0_55 = arith.constant 0 : index
    %c0_56 = arith.constant 0 : index
    %76 = vector.load %arg8[%c0_53, %c3_54, %c0_55, %c0_56] : memref<1x4x128x32xbf16, #tpu.memory_space<vmem>>, vector<1x1x128x32xbf16>
    %77 = vector.shape_cast %76 : vector<1x1x128x32xbf16> to vector<128x32xbf16>
    %78 = vector.shape_cast %75 : vector<128x32xbf16> to vector<1x1x128x32xbf16>
    tpu.vector_store %arg8[%c0_53, %c3_54, %c0_55, %c0_56], %78 {strides = array<i32>} : memref<1x4x128x32xbf16, #tpu.memory_space<vmem>>, vector<1x1x128x32xbf16>,
    %79 = vector.extract_strided_slice %15 {offsets = [0, 352], sizes = [128, 32], strides = [1, 1]} : vector<128x384xf32> to vector<128x32xf32>
    %80 = arith.truncf %79 : vector<128x32xf32> to vector<128x32xbf16>
    %c0_57 = arith.constant 0 : index
    %c3_58 = arith.constant 3 : index
    %c0_59 = arith.constant 0 : index
    %c0_60 = arith.constant 0 : index
    %81 = vector.load %arg9[%c0_57, %c3_58, %c0_59, %c0_60] : memref<1x4x128x32xbf16, #tpu.memory_space<vmem>>, vector<1x1x128x32xbf16>
    %82 = vector.shape_cast %81 : vector<1x1x128x32xbf16> to vector<128x32xbf16>
    %83 = vector.shape_cast %80 : vector<128x32xbf16> to vector<1x1x128x32xbf16>
    tpu.vector_store %arg9[%c0_57, %c3_58, %c0_59, %c0_60], %83 {strides = array<i32>} : memref<1x4x128x32xbf16, #tpu.memory_space<vmem>>, vector<1x1x128x32xbf16>,
    return
  }
  func.func @transform_0(%arg0: i32, %arg1: i32) -> (i32, i32, i32) {
    %c0_i32 = arith.constant 0 : i32
    %c0_i32_0 = arith.constant 0 : i32
    return %arg0, %arg1, %c0_i32 : i32, i32, i32
  }
  func.func @transform_1(%arg0: i32, %arg1: i32) -> (i32, i32, i32) {
    %c0_i32 = arith.constant 0 : i32
    %c0_i32_0 = arith.constant 0 : i32
    %c0_i32_1 = arith.constant 0 : i32
    return %arg0, %c0_i32, %c0_i32_0 : i32, i32, i32
  }
  func.func @transform_2(%arg0: i32, %arg1: i32) -> (i32, i32, i32) {
    %c0_i32 = arith.constant 0 : i32
    %c0_i32_0 = arith.constant 0 : i32
    %c0_i32_1 = arith.constant 0 : i32
    return %arg0, %c0_i32, %c0_i32_0 : i32, i32, i32
  }
  func.func @transform_3(%arg0: i32, %arg1: i32) -> (i32, i32) {
    %c0_i32 = arith.constant 0 : i32
    %c0_i32_0 = arith.constant 0 : i32
    %c0_i32_1 = arith.constant 0 : i32
    return %c0_i32, %c0_i32_0 : i32, i32
  }
  func.func @transform_4(%arg0: i32, %arg1: i32) -> (i32, i32) {
    %c0_i32 = arith.constant 0 : i32
    %c0_i32_0 = arith.constant 0 : i32
    %c0_i32_1 = arith.constant 0 : i32
    return %c0_i32, %c0_i32_0 : i32, i32
  }
  func.func @transform_5(%arg0: i32, %arg1: i32) -> (i32, i32, i32, i32) {
    %c0_i32 = arith.constant 0 : i32
    %c0_i32_0 = arith.constant 0 : i32
    %c0_i32_1 = arith.constant 0 : i32
    return %arg0, %c0_i32, %arg1, %c0_i32_0 : i32, i32, i32, i32
  }
  func.func @transform_6(%arg0: i32, %arg1: i32) -> (i32, i32, i32, i32) {
    %c0_i32 = arith.constant 0 : i32
    %c0_i32_0 = arith.constant 0 : i32
    %c0_i32_1 = arith.constant 0 : i32
    return %arg0, %c0_i32, %arg1, %c0_i32_0 : i32, i32, i32, i32
  }
  func.func @transform_7(%arg0: i32, %arg1: i32) -> (i32, i32, i32, i32) {
    %c0_i32 = arith.constant 0 : i32
    %c0_i32_0 = arith.constant 0 : i32
    %c0_i32_1 = arith.constant 0 : i32
    return %arg0, %c0_i32, %arg1, %c0_i32_0 : i32, i32, i32, i32
  }
}

</mosaic_0001>

<llo_original>
// kernel: tpu_custom_call.1
$region0: #{tpu_custom_call.1}
  #allocation0 [shape = 'u32[]', space=smem, size = 0x4, offset = 0x4, fixed_abs, tag = 'smem constant byte address 0x4 - core index']
  #allocation1 [shape = 'u32[144,128]{1,0:T(1,128)}', space=vmem, size = 0x12000, scoped, tag = 'internal scratch']
  %s0 = inlined_call_operand.hbm [shape: f32[2,256,128], index: 0, kind: input, shape index: {}]
  %s1 = inlined_call_operand.vmem [shape: f32[2,1,128], index: 1, kind: input, shape index: {}]
  %s2 = inlined_call_operand.vmem [shape: f32[2,1,128], index: 2, kind: input, shape index: {}]
  %s3 = inlined_call_operand.hbm [shape: bf16[128,384], index: 3, kind: input, shape index: {}]
  %s4 = inlined_call_operand.vmem [shape: f32[1,384], index: 4, kind: input, shape index: {}]
  %s5 = inlined_call_operand.vmem [shape: bf16[2,4,256,32], index: 5, kind: output, shape index: {0}]
  %s6 = inlined_call_operand.vmem [shape: bf16[2,4,256,32], index: 6, kind: output, shape index: {1}]
  %s7 = inlined_call_operand.vmem [shape: bf16[2,4,256,32], index: 7, kind: output, shape index: {2}]
  %8 = xla_tuple %s5, %s6, %s7
  %s9 = sld [smem:[#allocation0]]
  $region188: #{tpu_custom_call.1} parent=0
    _
  %s11 = ssub.s32 1, %s9
  %s12 = scalar_select 0, %s11, %s9
  $region1: #{tpu_custom_call.1} parent=0
    #allocation2 [shape = 'u8[131072]{0}', space=vmem, size = 0x20000, scoped, tag = 'input window, operand 0']
    #allocation3 [shape = 's32[2]{0}', space=sflag, size = 0x8, scoped, tag = 'scoped memory for tpu_custom_call.1']
    #allocation4 [shape = 'u8[98304]{0}', space=vmem, size = 0x18000, scoped, tag = 'input window, operand 3, single buffered']
    #allocation5 [shape = 's32[1]{0}', space=sflag, size = 0x4, scoped, tag = 'scoped memory for tpu_custom_call.1']
    #allocation6 [shape = 'u8[262144]{0}', space=vmem, size = 0x40000, scoped, tag = 'output window, operand 0']
    #allocation7 [shape = 'u8[262144]{0}', space=vmem, size = 0x40000, scoped, tag = 'output window, operand 1']
    #allocation8 [shape = 'u8[262144]{0}', space=vmem, size = 0x40000, scoped, tag = 'output window, operand 2']
    %13 = vsyncpa [#allocation3], 0
    %s14 = scalar_lea.sflag [#allocation3], 1
    %15 = vsyncpa %s14, 0
    %16 = vsyncpa [#allocation5], 0
    loop: start=0, step=1, limit=6
    $region2: #{tpu_custom_call.1} parent=1 // loop_pre_header
      _
    $region3: #{tpu_custom_call.1} parent=1 // loop_header
      %s18 = sphi 0, %s22
      %p19 = scmp.ge.s32.totalorder %s18, 6
      %s25 = sphi 0, %s37
      %s26 = sphi 0, %s33
      %s27 = sphi 0, %s25
      %s28 = sphi 0, %s26
      %s29 = sphi 0, %s27
      %s30 = sphi 0, %s28
      %s42 = sphi 0, %s44
      %s45 = sphi 0, %s42
      %s46 = sphi 0, %s45
      %s62 = sphi 0, %s46
      %s68 = sphi 0, %s70
      %s71 = sphi 0, %s68
      %s72 = sphi 0, %s71
      %s88 = sphi 0, %s72
      %s94 = sphi 0, %s96
      %s97 = sphi 0, %s94
      %s98 = sphi 0, %s97
      %s114 = sphi 0, %s98
      %s118 = sphi 0, %s118
      %s120 = sphi 0, %s118
      %s121 = sphi 0, %s120
      %s135 = sphi 0, %s121
      %s139 = sphi 0, %s139
      %s141 = sphi 0, %s139
      %s142 = sphi 0, %s141
      %s156 = sphi 0, %s142
      %s164 = sphi 0, %s166
      %s167 = sphi 0, %s164
      %s168 = sphi 0, %s167
      %s184 = sphi 0, %s168
      %s192 = sphi 0, %s194
      %s195 = sphi 0, %s192
      %s196 = sphi 0, %s195
      %s212 = sphi 0, %s196
      %s220 = sphi 0, %s222
      %s223 = sphi 0, %s220
      %s224 = sphi 0, %s223
      %s240 = sphi 0, %s224
    $region4: #{tpu_custom_call.1} parent=1 // loop_header_branch
      %21 = sbr.rel (%p19) target = $region8
    $region5: #{tpu_custom_call.1} parent=1 // loop_body
      %s23 = ssub.s32 %s18, 1
      %s24 = ssub.s32 %s18, 2
      %s31 = sadd.s32 1, %s26
      %p32 = scmp.ge.s32.totalorder %s31, 2
      %s33 = scalar_select %p32, 0, %s31
      %s34 = sadd.s32 1, %s25
      %s35 = scalar_select %p32, %s34, %s25
      %p36 = scmp.ge.s32.totalorder %s35, 2
      %s37 = scalar_select %p36, 0, %s35
      %s38 = ssub.s32 %s25, %s37
      %s39 = ssub.s32 %s26, %s33
      %s40 = sor.u32 %s38, %s39
      %p41 = scmp.eq.s32.totalorder %s40, 0
      %s43 = sadd.s32 %s42, 1
      %s44 = scalar_select %p41, %s42, %s43
      %p47 = pneg %p41
      %p48 = scmp.eq.s32.totalorder %s18, 3
      %p49 = por %p47, %p48
      %p50 = scmp.ne.s32.totalorder %s42, %s45
      %p51 = scmp.eq.s32.totalorder %s18, 0
      %p52 = por %p50, %p51
      %p53 = scmp.ne.s32.totalorder %s42, %s45
      %p54 = scmp.eq.s32.totalorder %s23, 3
      %p55 = por %p53, %p54
      %p56 = scmp.ne.s32.totalorder %s45, %s46
      %p57 = scmp.eq.s32.totalorder %s23, 0
      %p58 = por %p56, %p57
      %p59 = scmp.ne.s32.totalorder %s45, %s46
      %p60 = scmp.eq.s32.totalorder %s24, 3
      %p61 = por %p59, %p60
      %p63 = scmp.ne.s32.totalorder %s46, %s62
      %p64 = scmp.eq.s32.totalorder %s24, 0
      %p65 = por %p63, %p64
      %s66 = ssub.s32 %s25, %s37
      %p67 = scmp.eq.s32.totalorder %s66, 0
      %s69 = sadd.s32 %s68, 1
      %s70 = scalar_select %p67, %s68, %s69
      %p73 = pneg %p67
      %p74 = scmp.eq.s32.totalorder %s18, 3
      %p75 = por %p73, %p74
      %p76 = scmp.ne.s32.totalorder %s68, %s71
      %p77 = scmp.eq.s32.totalorder %s18, 0
      %p78 = por %p76, %p77
      %p79 = scmp.ne.s32.totalorder %s68, %s71
      %p80 = scmp.eq.s32.totalorder %s23, 3
      %p81 = por %p79, %p80
      %p82 = scmp.ne.s32.totalorder %s71, %s72
      %p83 = scmp.eq.s32.totalorder %s23, 0
      %p84 = por %p82, %p83
      %p85 = scmp.ne.s32.totalorder %s71, %s72
      %p86 = scmp.eq.s32.totalorder %s24, 3
      %p87 = por %p85, %p86
      %p89 = scmp.ne.s32.totalorder %s72, %s88
      %p90 = scmp.eq.s32.totalorder %s24, 0
      %p91 = por %p89, %p90
      %s92 = ssub.s32 %s25, %s37
      %p93 = scmp.eq.s32.totalorder %s92, 0
      %s95 = sadd.s32 %s94, 1
      %s96 = scalar_select %p93, %s94, %s95
      %p99 = pneg %p93
      %p100 = scmp.eq.s32.totalorder %s18, 3
      %p101 = por %p99, %p100
      %p102 = scmp.ne.s32.totalorder %s94, %s97
      %p103 = scmp.eq.s32.totalorder %s18, 0
      %p104 = por %p102, %p103
      %p105 = scmp.ne.s32.totalorder %s94, %s97
      %p106 = scmp.eq.s32.totalorder %s23, 3
      %p107 = por %p105, %p106
      %p108 = scmp.ne.s32.totalorder %s97, %s98
      %p109 = scmp.eq.s32.totalorder %s23, 0
      %p110 = por %p108, %p109
      %p111 = scmp.ne.s32.totalorder %s97, %s98
      %p112 = scmp.eq.s32.totalorder %s24, 3
      %p113 = por %p111, %p112
      %p115 = scmp.ne.s32.totalorder %s98, %s114
      %p116 = scmp.eq.s32.totalorder %s24, 0
      %p117 = por %p115, %p116
      %s119 = sadd.s32 %s118, 1
      %p122 = scmp.eq.s32.totalorder %s18, 3
      %p123 = scmp.ne.s32.totalorder %s118, %s120
      %p124 = scmp.eq.s32.totalorder %s18, 0
      %p125 = por %p123, %p124
      %p126 = scmp.ne.s32.totalorder %s118, %s120
      %p127 = scmp.eq.s32.totalorder %s23, 3
      %p128 = por %p126, %p127
      %p129 = scmp.ne.s32.totalorder %s120, %s121
      %p130 = scmp.eq.s32.totalorder %s23, 0
      %p131 = por %p129, %p130
      %p132 = scmp.ne.s32.totalorder %s120, %s121
      %p133 = scmp.eq.s32.totalorder %s24, 3
      %p134 = por %p132, %p133
      %p136 = scmp.ne.s32.totalorder %s121, %s135
      %p137 = scmp.eq.s32.totalorder %s24, 0
      %p138 = por %p136, %p137
      %s140 = sadd.s32 %s139, 1
      %p143 = scmp.eq.s32.totalorder %s18, 3
      %p144 = scmp.ne.s32.totalorder %s139, %s141
      %p145 = scmp.eq.s32.totalorder %s18, 0
      %p146 = por %p144, %p145
      %p147 = scmp.ne.s32.totalorder %s139, %s141
      %p148 = scmp.eq.s32.totalorder %s23, 3
      %p149 = por %p147, %p148
      %p150 = scmp.ne.s32.totalorder %s141, %s142
      %p151 = scmp.eq.s32.totalorder %s23, 0
      %p152 = por %p150, %p151
      %p153 = scmp.ne.s32.totalorder %s141, %s142
      %p154 = scmp.eq.s32.totalorder %s24, 3
      %p155 = por %p153, %p154
      %p157 = scmp.ne.s32.totalorder %s142, %s156
      %p158 = scmp.eq.s32.totalorder %s24, 0
      %p159 = por %p157, %p158
      %s160 = ssub.s32 %s25, %s37
      %s161 = ssub.s32 %s26, %s33
      %s162 = sor.u32 %s160, %s161
      %p163 = scmp.eq.s32.totalorder %s162, 0
      %s165 = sadd.s32 %s164, 1
      %s166 = scalar_select %p163, %s164, %s165
      %p169 = pneg %p163
      %p170 = scmp.eq.s32.totalorder %s18, 3
      %p171 = por %p169, %p170
      %p172 = scmp.ne.s32.totalorder %s164, %s167
      %p173 = scmp.eq.s32.totalorder %s18, 0
      %p174 = por %p172, %p173
      %p175 = scmp.ne.s32.totalorder %s164, %s167
      %p176 = scmp.eq.s32.totalorder %s23, 3
      %p177 = por %p175, %p176
      %p178 = scmp.ne.s32.totalorder %s167, %s168
      %p179 = scmp.eq.s32.totalorder %s23, 0
      %p180 = por %p178, %p179
      %p181 = scmp.ne.s32.totalorder %s167, %s168
      %p182 = scmp.eq.s32.totalorder %s24, 3
      %p183 = por %p181, %p182
      %p185 = scmp.ne.s32.totalorder %s168, %s184
      %p186 = scmp.eq.s32.totalorder %s24, 0
      %p187 = por %p185, %p186
      %s188 = ssub.s32 %s25, %s37
      %s189 = ssub.s32 %s26, %s33
      %s190 = sor.u32 %s188, %s189
      %p191 = scmp.eq.s32.totalorder %s190, 0
      %s193 = sadd.s32 %s192, 1
      %s194 = scalar_select %p191, %s192, %s193
      %p197 = pneg %p191
      %p198 = scmp.eq.s32.totalorder %s18, 3
      %p199 = por %p197, %p198
      %p200 = scmp.ne.s32.totalorder %s192, %s195
      %p201 = scmp.eq.s32.totalorder %s18, 0
      %p202 = por %p200, %p201
      %p203 = scmp.ne.s32.totalorder %s192, %s195
      %p204 = scmp.eq.s32.totalorder %s23, 3
      %p205 = por %p203, %p204
      %p206 = scmp.ne.s32.totalorder %s195, %s196
      %p207 = scmp.eq.s32.totalorder %s23, 0
      %p208 = por %p206, %p207
      %p209 = scmp.ne.s32.totalorder %s195, %s196
      %p210 = scmp.eq.s32.totalorder %s24, 3
      %p211 = por %p209, %p210
      %p213 = scmp.ne.s32.totalorder %s196, %s212
      %p214 = scmp.eq.s32.totalorder %s24, 0
      %p215 = por %p213, %p214
      %s216 = ssub.s32 %s25, %s37
      %s217 = ssub.s32 %s26, %s33
      %s218 = sor.u32 %s216, %s217
      %p219 = scmp.eq.s32.totalorder %s218, 0
      %s221 = sadd.s32 %s220, 1
      %s222 = scalar_select %p219, %s220, %s221
      %p225 = pneg %p219
      %p226 = scmp.eq.s32.totalorder %s18, 3
      %p227 = por %p225, %p226
      %p228 = scmp.ne.s32.totalorder %s220, %s223
      %p229 = scmp.eq.s32.totalorder %s18, 0
      %p230 = por %p228, %p229
      %p231 = scmp.ne.s32.totalorder %s220, %s223
      %p232 = scmp.eq.s32.totalorder %s23, 3
      %p233 = por %p231, %p232
      %p234 = scmp.ne.s32.totalorder %s223, %s224
      %p235 = scmp.eq.s32.totalorder %s23, 0
      %p236 = por %p234, %p235
      %p237 = scmp.ne.s32.totalorder %s223, %s224
      %p238 = scmp.eq.s32.totalorder %s24, 3
      %p239 = por %p237, %p238
      %p241 = scmp.ne.s32.totalorder %s224, %s240
      %p242 = scmp.eq.s32.totalorder %s24, 0
      %p243 = por %p241, %p242
      %p244 = scmp.le.s32.totalorder 1, %s18
      %p245 = scmp.lt.s32.totalorder %s18, 5
      %p246 = pnand %p244, %p245
      %p247 = pneg %p246
      // Predicated region
      $region9: #{tpu_custom_call.1} parent=5 // pred_check
        _
      $region10: #{tpu_custom_call.1} parent=5 // pred_check_branch
        %249 = sbr.rel (%p246) target = $region12
      $region11: #{tpu_custom_call.1} parent=5 // pred_region
        %s250 = ssub.s32 %s18, 1
        // Predicated region
        $region13: #{tpu_custom_call.1} parent=11 // pred_check
          %p251 = pneg %p131
        $region14: #{tpu_custom_call.1} parent=11 // pred_check_branch
          %253 = sbr.rel (%p251) target = $region16
        $region15: #{tpu_custom_call.1} parent=11 // pred_region
          %s255 = ssub.s32 3072, 3072
          %256 = vsyncadd [#allocation5], %s255
          %s257 = sshll.u32 [#allocation4], 4
          %s258 = int_to_ptr.vmem [resolvable:$true] %s257
          %263 = dma.hbm_to_vmem [thread:$0]  %s3, 3072, %s258, [#allocation5], 192, 192, 12
        $region16: #{tpu_custom_call.1} parent=11 // pred_fallthru
          _
        // Predicated region
        $region17: #{tpu_custom_call.1} parent=11 // pred_check
          %p264 = pneg %p152
        $region18: #{tpu_custom_call.1} parent=11 // pred_check_branch
          %266 = sbr.rel (%p264) target = $region20
        $region19: #{tpu_custom_call.1} parent=11 // pred_region
          _
        $region20: #{tpu_custom_call.1} parent=11 // pred_fallthru
          _
      $region12: #{tpu_custom_call.1} parent=5 // pred_fallthru
        _
      %p267 = scmp.lt.s32.totalorder %s18, 4
      // Predicated region
      $region21: #{tpu_custom_call.1} parent=5 // pred_check
        %p268 = pneg %p267
      $region22: #{tpu_custom_call.1} parent=5 // pred_check_branch
        %270 = sbr.rel (%p268) target = $region24
      $region23: #{tpu_custom_call.1} parent=5 // pred_region
        // Predicated region
        $region25: #{tpu_custom_call.1} parent=23 // pred_check
          %p271 = pneg %p52
        $region26: #{tpu_custom_call.1} parent=23 // pred_check_branch
          %273 = sbr.rel (%p271) target = $region28
        $region27: #{tpu_custom_call.1} parent=23 // pred_region
          %s274 = sand.u32 %s42, 1
          %s275 = scalar_lea.sflag [#allocation3], %s274
          %s276 = sand.u32 %s42, 1
          %s277 = smul.addr %s276, 128
          %s278 = scalar_lea.vmem [#allocation2], %s277
          %s279 = smul.u32 16, %s26
          %s281 = ssub.s32 2048, 2048
          %282 = vsyncadd %s275, %s281
          %s283 = smul.addr %s25, 32
          %s284 = sadd.s32 %s279, %s283
          %s285 = smul.addr %s284, 128
          %s286 = scalar_lea.hbm %s0, %s285
          %s287 = sshll.u32 %s278, 4
          %s288 = int_to_ptr.vmem [resolvable:$true] %s287
          %293 = dma.hbm_to_vmem [thread:$0]  %s286, 2048, %s288, %s275, 128, 128, 8
        $region28: #{tpu_custom_call.1} parent=23 // pred_fallthru
          _
        // Predicated region
        $region29: #{tpu_custom_call.1} parent=23 // pred_check
          %p294 = pneg %p78
        $region30: #{tpu_custom_call.1} parent=23 // pred_check_branch
          %296 = sbr.rel (%p294) target = $region32
        $region31: #{tpu_custom_call.1} parent=23 // pred_region
          %p297 = scmp.lt.s32.totalorder %s25, 1
          %s298 = scalar_select %p297, %s25, 1
          %s299 = scalar_lea.vmem %s1, %s298
        $region32: #{tpu_custom_call.1} parent=23 // pred_fallthru
          _
        // Predicated region
        $region33: #{tpu_custom_call.1} parent=23 // pred_check
          %p300 = pneg %p104
        $region34: #{tpu_custom_call.1} parent=23 // pred_check_branch
          %302 = sbr.rel (%p300) target = $region36
        $region35: #{tpu_custom_call.1} parent=23 // pred_region
          %p303 = scmp.lt.s32.totalorder %s25, 1
          %s304 = scalar_select %p303, %s25, 1
          %s305 = scalar_lea.vmem %s2, %s304
        $region36: #{tpu_custom_call.1} parent=23 // pred_fallthru
          _
      $region24: #{tpu_custom_call.1} parent=5 // pred_fallthru
        _
      %p306 = scmp.le.s32.totalorder 1, %s18
      %p307 = scmp.lt.s32.totalorder %s18, 5
      %p308 = pnand %p306, %p307
      %p309 = pneg %p308
      // Predicated region
      $region37: #{tpu_custom_call.1} parent=5 // pred_check
        _
      $region38: #{tpu_custom_call.1} parent=5 // pred_check_branch
        %311 = sbr.rel (%p308) target = $region40
      $region39: #{tpu_custom_call.1} parent=5 // pred_region
        %s312 = ssub.s32 %s18, 1
        %s313 = sand.u32 %s45, 1
        %s314 = scalar_lea.sflag [#allocation3], %s313
        %s315 = sand.u32 %s45, 1
        %s316 = smul.addr %s315, 128
        %s317 = scalar_lea.vmem [#allocation2], %s316
        // Predicated region
        $region41: #{tpu_custom_call.1} parent=39 // pred_check
          %p318 = pneg %p58
        $region42: #{tpu_custom_call.1} parent=39 // pred_check_branch
          %320 = sbr.rel (%p318) target = $region44
        $region43: #{tpu_custom_call.1} parent=39 // pred_region
          %321 = dma.done %s314, 2048
        $region44: #{tpu_custom_call.1} parent=39 // pred_fallthru
          _
        // Predicated region
        $region45: #{tpu_custom_call.1} parent=39 // pred_check
          %p322 = pneg %p131
        $region46: #{tpu_custom_call.1} parent=39 // pred_check_branch
          %324 = sbr.rel (%p322) target = $region48
        $region47: #{tpu_custom_call.1} parent=39 // pred_region
          %325 = dma.done [#allocation5], 3072
        $region48: #{tpu_custom_call.1} parent=39 // pred_fallthru
          _
        %s326 = sand.u32 %s45, 1
        %s327 = scalar_lea.sflag [#allocation3], %s326
        %s328 = sand.u32 %s45, 1
        %s329 = smul.addr %s328, 128
        %s330 = scalar_lea.vmem [#allocation2], %s329
        %p331 = pneg %p58
        %p332 = pneg %p55
        %p333 = scmp.lt.s32.totalorder %s27, 1
        %s334 = scalar_select %p333, %s27, 1
        %s335 = scalar_lea.vmem %s1, %s334
        %p336 = pneg %p84
        %p337 = pneg %p81
        %p338 = scmp.lt.s32.totalorder %s27, 1
        %s339 = scalar_select %p338, %s27, 1
        %s340 = scalar_lea.vmem %s2, %s339
        %p341 = pneg %p110
        %p342 = pneg %p107
        %p343 = pneg %p131
        %p344 = pneg %p128
        %p345 = pneg %p152
        %p346 = pneg %p149
        %p347 = pneg %p180
        %p348 = pneg %p177
        %s349 = sand.u32 %s167, 1
        %s350 = sand.u32 %s167, 1
        %s351 = smul.addr %s350, 256
        %s352 = scalar_lea.vmem [#allocation6], %s351
        %p353 = pneg %p208
        %p354 = pneg %p205
        %s355 = sand.u32 %s195, 1
        %s356 = sand.u32 %s195, 1
        %s357 = smul.addr %s356, 256
        %s358 = scalar_lea.vmem [#allocation7], %s357
        %p359 = pneg %p236
        %p360 = pneg %p233
        %s361 = sand.u32 %s223, 1
        %s362 = sand.u32 %s223, 1
        %s363 = smul.addr %s362, 256
        %s364 = scalar_lea.vmem [#allocation8], %s363
        %s365 = smul.u32 16, %s28
        %p366 = scmp.lt.s32.totalorder %s27, 1
        %s367 = scalar_select %p366, %s27, 1
        %s368 = scalar_lea.vmem %s1, %s367
        %p369 = scmp.lt.s32.totalorder %s27, 1
        %s370 = scalar_select %p369, %s27, 1
        %s371 = scalar_lea.vmem %s2, %s370
        %s372 = smul.u32 16, %s28
        %s373 = smul.u32 16, %s28
        %s374 = smul.u32 16, %s28
        %v376 = vld [vmem:[%s317] sm:$0xff]
        %v377 = vld [vmem:[%s317 + $0x8] sm:$0xff]
        %v378 = vld [vmem:[%s317 + $0x10] sm:$0xff]
        %v379 = vld [vmem:[%s317 + $0x18] sm:$0xff]
        %v380 = vld [vmem:[%s317 + $0x20] sm:$0xff]
        %v381 = vld [vmem:[%s317 + $0x28] sm:$0xff]
        %v382 = vld [vmem:[%s317 + $0x30] sm:$0xff]
        %v383 = vld [vmem:[%s317 + $0x38] sm:$0xff]
        %v384 = vld [vmem:[%s317 + $0x40] sm:$0xff]
        %v385 = vld [vmem:[%s317 + $0x48] sm:$0xff]
        %v386 = vld [vmem:[%s317 + $0x50] sm:$0xff]
        %v387 = vld [vmem:[%s317 + $0x58] sm:$0xff]
        %v388 = vld [vmem:[%s317 + $0x60] sm:$0xff]
        %v389 = vld [vmem:[%s317 + $0x68] sm:$0xff]
        %v390 = vld [vmem:[%s317 + $0x70] sm:$0xff]
        %v391 = vld [vmem:[%s317 + $0x78] sm:$0xff]
        %v392 = vld [vmem:[%s368] sm:$0x1]
        %v394 = vlaneseq
        %v395 = vshrl.u32 %v394, 7
        %v396 = vsub.s32 0, %v395
        %v397 = vrot.slane %v392, %v396
        %v399 = vmul.f32 %v376, %v397
        %v400 = vmul.f32 %v377, %v397
        %v401 = vmul.f32 %v378, %v397
        %v402 = vmul.f32 %v379, %v397
        %v403 = vmul.f32 %v380, %v397
        %v404 = vmul.f32 %v381, %v397
        %v405 = vmul.f32 %v382, %v397
        %v406 = vmul.f32 %v383, %v397
        %v407 = vmul.f32 %v384, %v397
        %v408 = vmul.f32 %v385, %v397
        %v409 = vmul.f32 %v386, %v397
        %v410 = vmul.f32 %v387, %v397
        %v411 = vmul.f32 %v388, %v397
        %v412 = vmul.f32 %v389, %v397
        %v413 = vmul.f32 %v390, %v397
        %v414 = vmul.f32 %v391, %v397
        %v415 = vld [vmem:[%s371] sm:$0x1]
        %v417 = vlaneseq
        %v418 = vshrl.u32 %v417, 7
        %v419 = vsub.s32 0, %v418
        %v420 = vrot.slane %v415, %v419
        %v422 = vadd.f32 %v399, %v420
        %v423 = vadd.f32 %v400, %v420
        %v424 = vadd.f32 %v401, %v420
        %v425 = vadd.f32 %v402, %v420
        %v426 = vadd.f32 %v403, %v420
        %v427 = vadd.f32 %v404, %v420
        %v428 = vadd.f32 %v405, %v420
        %v429 = vadd.f32 %v406, %v420
        %v430 = vadd.f32 %v407, %v420
        %v431 = vadd.f32 %v408, %v420
        %v432 = vadd.f32 %v409, %v420
        %v433 = vadd.f32 %v410, %v420
        %v434 = vadd.f32 %v411, %v420
        %v435 = vadd.f32 %v412, %v420
        %v436 = vadd.f32 %v413, %v420
        %v437 = vadd.f32 %v414, %v420
        %v438 = vpack.c.bf16 %v423, %v422
        %v439 = vpack.c.bf16 %v425, %v424
        %v440 = vpack.c.bf16 %v427, %v426
        %v441 = vpack.c.bf16 %v429, %v428
        %v442 = vpack.c.bf16 %v431, %v430
        %v443 = vpack.c.bf16 %v433, %v432
        %v444 = vpack.c.bf16 %v435, %v434
        %v445 = vpack.c.bf16 %v437, %v436
        %v446 = vld [vmem:[#allocation4] sm:$0xff]
        %v447 = vld [vmem:[#allocation4 + $0x8] sm:$0xf]
        %v448 = vld [vmem:[#allocation4 + $0xc] sm:$0xff]
        %v449 = vld [vmem:[#allocation4 + $0x14] sm:$0xf]
        %v450 = vld [vmem:[#allocation4 + $0x18] sm:$0xff]
        %v451 = vld [vmem:[#allocation4 + $0x20] sm:$0xf]
        %v452 = vld [vmem:[#allocation4 + $0x24] sm:$0xff]
        %v453 = vld [vmem:[#allocation4 + $0x2c] sm:$0xf]
        %v454 = vld [vmem:[#allocation4 + $0x30] sm:$0xff]
        %v455 = vld [vmem:[#allocation4 + $0x38] sm:$0xf]
        %v456 = vld [vmem:[#allocation4 + $0x3c] sm:$0xff]
        %v457 = vld [vmem:[#allocation4 + $0x44] sm:$0xf]
        %v458 = vld [vmem:[#allocation4 + $0x48] sm:$0xff]
        %v459 = vld [vmem:[#allocation4 + $0x50] sm:$0xf]
        %v460 = vld [vmem:[#allocation4 + $0x54] sm:$0xff]
        %v461 = vld [vmem:[#allocation4 + $0x5c] sm:$0xf]
        %v462 = vld [vmem:[#allocation4 + $0x60] sm:$0xff]
        %v463 = vld [vmem:[#allocation4 + $0x68] sm:$0xf]
        %v464 = vld [vmem:[#allocation4 + $0x6c] sm:$0xff]
        %v465 = vld [vmem:[#allocation4 + $0x74] sm:$0xf]
        %v466 = vld [vmem:[#allocation4 + $0x78] sm:$0xff]
        %v467 = vld [vmem:[#allocation4 + $0x80] sm:$0xf]
        %v468 = vld [vmem:[#allocation4 + $0x84] sm:$0xff]
        %v469 = vld [vmem:[#allocation4 + $0x8c] sm:$0xf]
        %v470 = vld [vmem:[#allocation4 + $0x90] sm:$0xff]
        %v471 = vld [vmem:[#allocation4 + $0x98] sm:$0xf]
        %v472 = vld [vmem:[#allocation4 + $0x9c] sm:$0xff]
        %v473 = vld [vmem:[#allocation4 + $0xa4] sm:$0xf]
        %v474 = vld [vmem:[#allocation4 + $0xa8] sm:$0xff]
        %v475 = vld [vmem:[#allocation4 + $0xb0] sm:$0xf]
        %v476 = vld [vmem:[#allocation4 + $0xb4] sm:$0xff]
        %v477 = vld [vmem:[#allocation4 + $0xbc] sm:$0xf]
        %v478 = vld [vmem:[%s4] sm:$0x7]
        %v480 = vlaneseq
        %v481 = vshrl.u32 %v480, 7
        %v482 = vsub.s32 0, %v481
        %v483 = vrot.slane %v478, %v482
        %v484 = vlaneseq
        %v485 = vshrl.u32 %v484, 7
        %v486 = vsub.s32 1, %v485
        %v487 = vrot.slane %v478, %v486
        %v488 = vlaneseq
        %v489 = vshrl.u32 %v488, 7
        %v490 = vsub.s32 2, %v489
        %v491 = vrot.slane %v478, %v490
        %v527 = vunpack.c.l.b16 %v446
        %v528 = vunpack.c.h.b16 %v446
        %v529 = vunpack.c.l.b16 %v447
        %v530 = vunpack.c.l.b16 %v448
        %v531 = vunpack.c.h.b16 %v448
        %v532 = vunpack.c.l.b16 %v449
        %v533 = vunpack.c.l.b16 %v450
        %v534 = vunpack.c.h.b16 %v450
        %v535 = vunpack.c.l.b16 %v451
        %v536 = vunpack.c.l.b16 %v452
        %v537 = vunpack.c.h.b16 %v452
        %v538 = vunpack.c.l.b16 %v453
        %v539 = vunpack.c.l.b16 %v454
        %v540 = vunpack.c.h.b16 %v454
        %v541 = vunpack.c.l.b16 %v455
        %v542 = vunpack.c.l.b16 %v456
        %v543 = vunpack.c.h.b16 %v456
        %v544 = vunpack.c.l.b16 %v457
        %v545 = vunpack.c.l.b16 %v458
        %v546 = vunpack.c.h.b16 %v458
        %v547 = vunpack.c.l.b16 %v459
        %v548 = vunpack.c.l.b16 %v460
        %v549 = vunpack.c.h.b16 %v460
        %v550 = vunpack.c.l.b16 %v461
        %v551 = vunpack.c.l.b16 %v462
        %v552 = vunpack.c.h.b16 %v462
        %v553 = vunpack.c.l.b16 %v463
        %v554 = vunpack.c.l.b16 %v464
        %v555 = vunpack.c.h.b16 %v464
        %v556 = vunpack.c.l.b16 %v465
        %v557 = vunpack.c.l.b16 %v466
        %v558 = vunpack.c.h.b16 %v466
        %v559 = vunpack.c.l.b16 %v467
        %v560 = vunpack.c.l.b16 %v468
        %v561 = vunpack.c.h.b16 %v468
        %v562 = vunpack.c.l.b16 %v469
        %v563 = vunpack.c.l.b16 %v470
        %v564 = vunpack.c.h.b16 %v470
        %v565 = vunpack.c.l.b16 %v471
        %v566 = vunpack.c.l.b16 %v472
        %v567 = vunpack.c.h.b16 %v472
        %v568 = vunpack.c.l.b16 %v473
        %v569 = vunpack.c.l.b16 %v474
        %v570 = vunpack.c.h.b16 %v474
        %v571 = vunpack.c.l.b16 %v475
        %v572 = vunpack.c.l.b16 %v476
        %v573 = vunpack.c.h.b16 %v476
        %v574 = vunpack.c.l.b16 %v477
        %v575 = vpack.c.b16 %v530, %v527
        %v576 = vpack.c.b16 %v531, %v528
        %v577 = vpack.c.b16 %v532, %v529
        %v578 = vpack.c.b16 %v536, %v533
        %v579 = vpack.c.b16 %v537, %v534
        %v580 = vpack.c.b16 %v538, %v535
        %v581 = vpack.c.b16 %v542, %v539
        %v582 = vpack.c.b16 %v543, %v540
        %v583 = vpack.c.b16 %v544, %v541
        %v584 = vpack.c.b16 %v548, %v545
        %v585 = vpack.c.b16 %v549, %v546
        %v586 = vpack.c.b16 %v550, %v547
        %v587 = vpack.c.b16 %v554, %v551
        %v588 = vpack.c.b16 %v555, %v552
        %v589 = vpack.c.b16 %v556, %v553
        %v590 = vpack.c.b16 %v560, %v557
        %v591 = vpack.c.b16 %v561, %v558
        %v592 = vpack.c.b16 %v562, %v559
        %v593 = vpack.c.b16 %v566, %v563
        %v594 = vpack.c.b16 %v567, %v564
        %v595 = vpack.c.b16 %v568, %v565
        %v596 = vpack.c.b16 %v572, %v569
        %v597 = vpack.c.b16 %v573, %v570
        %v598 = vpack.c.b16 %v574, %v571
        %623 = vmatprep.subr.bf16.mxu0 %v576
        %624 = vmatpush1.bf16.msra.mxu0 %v575
        %625 = vmatprep.subr.bf16.mxu0 %v579
        %626 = vmatpush1.bf16.msra.mxu0 %v578
        %627 = vmatprep.subr.bf16.mxu0 %v582
        %628 = vmatpush1.bf16.msra.mxu0 %v581
        %629 = vmatprep.subr.bf16.mxu0 %v585
        %630 = vmatpush1.bf16.msra.mxu0 %v584
        %631 = vmatprep.subr.bf16.mxu0 %v588
        %632 = vmatpush1.bf16.msra.mxu0 %v587
        %633 = vmatprep.subr.bf16.mxu0 %v591
        %634 = vmatpush1.bf16.msra.mxu0 %v590
        %635 = vmatprep.subr.bf16.mxu0 %v594
        %636 = vmatpush1.bf16.msra.mxu0 %v593
        %637 = vmatprep.subr.bf16.mxu0 %v597
        %638 = vmatpush1.bf16.msra.mxu0 %v596
        %639 = vmatprep.subr.bf16.mxu0 0
        %640 = vmatpush1.bf16.msra.mxu0 0
        %641 = vmatprep.subr.bf16.mxu0 0
        %642 = vmatpush1.bf16.msra.mxu0 0
        %643 = vmatprep.subr.bf16.mxu0 0
        %644 = vmatpush1.bf16.msra.mxu0 0
        %645 = vmatprep.subr.bf16.mxu0 0
        %646 = vmatpush1.bf16.msra.mxu0 0
        %647 = vmatprep.subr.bf16.mxu0 0
        %648 = vmatpush1.bf16.msra.mxu0 0
        %649 = vmatprep.subr.bf16.mxu0 0
        %650 = vmatpush1.bf16.msra.mxu0 0
        %651 = vmatprep.subr.bf16.mxu0 0
        %652 = vmatpush1.bf16.msra.mxu0 0
        %653 = vmatprep.subr.bf16.mxu0 0
        %654 = vmatpush1.bf16.msra.mxu0 0
        %655 = vmatprep.mubr.bf16.mxu0 0
        %656 = vmatmul.mubr.bf16.gmra.mrb[0].mxu0 %v438
        %v657 = vpop.f32.mrb[0].mxu0
        %v658 = vadd.f32 %v483, %v657
        %v659 = vpop.f32.mrb[0].mxu0
        %v660 = vadd.f32 %v487, %v659
        %v661 = vpop.f32.mrb[0].mxu0
        %v662 = vadd.f32 %v483, %v661
        %v663 = vpop.f32.mrb[0].mxu0
        %v664 = vadd.f32 %v487, %v663
        %665 = vmatprep.mubr.bf16.mxu0 0
        %666 = vmatmul.mubr.bf16.gmra.mrb[0].mxu0 %v439
        %v667 = vpop.f32.mrb[0].mxu0
        %v668 = vadd.f32 %v483, %v667
        %v669 = vpop.f32.mrb[0].mxu0
        %v670 = vadd.f32 %v487, %v669
        %v671 = vpop.f32.mrb[0].mxu0
        %v672 = vadd.f32 %v483, %v671
        %v673 = vpop.f32.mrb[0].mxu0
        %v674 = vadd.f32 %v487, %v673
        %675 = vmatprep.mubr.bf16.mxu0 0
        %676 = vmatmul.mubr.bf16.gmra.mrb[0].mxu0 %v440
        %v677 = vpop.f32.mrb[0].mxu0
        %v678 = vadd.f32 %v483, %v677
        %v679 = vpop.f32.mrb[0].mxu0
        %v680 = vadd.f32 %v487, %v679
        %v681 = vpop.f32.mrb[0].mxu0
        %v682 = vadd.f32 %v483, %v681
        %v683 = vpop.f32.mrb[0].mxu0
        %v684 = vadd.f32 %v487, %v683
        %685 = vmatprep.mubr.bf16.mxu0 0
        %686 = vmatmul.mubr.bf16.gmra.mrb[0].mxu0 %v441
        %v687 = vpop.f32.mrb[0].mxu0
        %v688 = vadd.f32 %v483, %v687
        %v689 = vpop.f32.mrb[0].mxu0
        %v690 = vadd.f32 %v487, %v689
        %v691 = vpop.f32.mrb[0].mxu0
        %v692 = vadd.f32 %v483, %v691
        %v693 = vpop.f32.mrb[0].mxu0
        %v694 = vadd.f32 %v487, %v693
        %695 = vmatprep.mubr.bf16.mxu0 0
        %696 = vmatmul.mubr.bf16.gmra.mrb[0].mxu0 %v442
        %v697 = vpop.f32.mrb[0].mxu0
        %v698 = vadd.f32 %v483, %v697
        %v699 = vpop.f32.mrb[0].mxu0
        %v700 = vadd.f32 %v487, %v699
        %v701 = vpop.f32.mrb[0].mxu0
        %v702 = vadd.f32 %v483, %v701
        %v703 = vpop.f32.mrb[0].mxu0
        %v704 = vadd.f32 %v487, %v703
        %705 = vmatprep.mubr.bf16.mxu0 0
        %706 = vmatmul.mubr.bf16.gmra.mrb[0].mxu0 %v443
        %v707 = vpop.f32.mrb[0].mxu0
        %v708 = vadd.f32 %v483, %v707
        %v709 = vpop.f32.mrb[0].mxu0
        %v710 = vadd.f32 %v487, %v709
        %v711 = vpop.f32.mrb[0].mxu0
        %v712 = vadd.f32 %v483, %v711
        %v713 = vpop.f32.mrb[0].mxu0
        %v714 = vadd.f32 %v487, %v713
        %715 = vmatprep.mubr.bf16.mxu0 0
        %716 = vmatmul.mubr.bf16.gmra.mrb[0].mxu0 %v444
        %v717 = vpop.f32.mrb[0].mxu0
        %v718 = vadd.f32 %v483, %v717
        %v719 = vpop.f32.mrb[0].mxu0
        %v720 = vadd.f32 %v487, %v719
        %v721 = vpop.f32.mrb[0].mxu0
        %v722 = vadd.f32 %v483, %v721
        %v723 = vpop.f32.mrb[0].mxu0
        %v724 = vadd.f32 %v487, %v723
        %725 = vmatprep.mubr.bf16.mxu0 0
        %726 = vmatmul.mubr.bf16.gmra.mrb[0].mxu0 %v445
        %v727 = vpop.f32.mrb[0].mxu0
        %v728 = vadd.f32 %v483, %v727
        %v729 = vpop.f32.mrb[0].mxu0
        %v730 = vadd.f32 %v487, %v729
        %v731 = vpop.f32.mrb[0].mxu0
        %v732 = vadd.f32 %v483, %v731
        %v733 = vpop.f32.mrb[0].mxu0
        %v734 = vadd.f32 %v487, %v733
        %735 = vdwg.mxu0
        %736 = vmatprep.subr.bf16.mxu0 0
        %737 = vmatpush1.bf16.msra.mxu0 %v577
        %738 = vmatprep.subr.bf16.mxu0 0
        %739 = vmatpush1.bf16.msra.mxu0 %v580
        %740 = vmatprep.subr.bf16.mxu0 0
        %741 = vmatpush1.bf16.msra.mxu0 %v583
        %742 = vmatprep.subr.bf16.mxu0 0
        %743 = vmatpush1.bf16.msra.mxu0 %v586
        %744 = vmatprep.subr.bf16.mxu0 0
        %745 = vmatpush1.bf16.msra.mxu0 %v589
        %746 = vmatprep.subr.bf16.mxu0 0
        %747 = vmatpush1.bf16.msra.mxu0 %v592
        %748 = vmatprep.subr.bf16.mxu0 0
        %749 = vmatpush1.bf16.msra.mxu0 %v595
        %750 = vmatprep.subr.bf16.mxu0 0
        %751 = vmatpush1.bf16.msra.mxu0 %v598
        %752 = vmatprep.subr.bf16.mxu0 0
        %753 = vmatpush1.bf16.msra.mxu0 0
        %754 = vmatprep.subr.bf16.mxu0 0
        %755 = vmatpush1.bf16.msra.mxu0 0
        %756 = vmatprep.subr.bf16.mxu0 0
        %757 = vmatpush1.bf16.msra.mxu0 0
        %758 = vmatprep.subr.bf16.mxu0 0
        %759 = vmatpush1.bf16.msra.mxu0 0
        %760 = vmatprep.subr.bf16.mxu0 0
        %761 = vmatpush1.bf16.msra.mxu0 0
        %762 = vmatprep.subr.bf16.mxu0 0
        %763 = vmatpush1.bf16.msra.mxu0 0
        %764 = vmatprep.subr.bf16.mxu0 0
        %765 = vmatpush1.bf16.msra.mxu0 0
        %766 = vmatprep.subr.bf16.mxu0 0
        %767 = vmatpush1.bf16.msra.mxu0 0
        %768 = vmatprep.mubr.bf16.mxu0 0
        %769 = vmatmul.mubr.bf16.gmra.mrb[0].mxu0 %v438
        %v770 = vpop.f32.mrb[0].mxu0
        %v771 = vadd.f32 %v491, %v770
        %v772 = vpop.f32.mrb[0].mxu0
        %v773 = vpop.f32.mrb[0].mxu0
        %v774 = vadd.f32 %v491, %v773
        %v775 = vpop.f32.mrb[0].mxu0
        %776 = vmatprep.mubr.bf16.mxu0 0
        %777 = vmatmul.mubr.bf16.gmra.mrb[0].mxu0 %v439
        %v778 = vpop.f32.mrb[0].mxu0
        %v779 = vadd.f32 %v491, %v778
        %v780 = vpop.f32.mrb[0].mxu0
        %v781 = vpop.f32.mrb[0].mxu0
        %v782 = vadd.f32 %v491, %v781
        %v783 = vpop.f32.mrb[0].mxu0
        %784 = vmatprep.mubr.bf16.mxu0 0
        %785 = vmatmul.mubr.bf16.gmra.mrb[0].mxu0 %v440
        %v786 = vpop.f32.mrb[0].mxu0
        %v787 = vadd.f32 %v491, %v786
        %v788 = vpop.f32.mrb[0].mxu0
        %v789 = vpop.f32.mrb[0].mxu0
        %v790 = vadd.f32 %v491, %v789
        %v791 = vpop.f32.mrb[0].mxu0
        %792 = vmatprep.mubr.bf16.mxu0 0
        %793 = vmatmul.mubr.bf16.gmra.mrb[0].mxu0 %v441
        %v794 = vpop.f32.mrb[0].mxu0
        %v795 = vadd.f32 %v491, %v794
        %v796 = vpop.f32.mrb[0].mxu0
        %v797 = vpop.f32.mrb[0].mxu0
        %v798 = vadd.f32 %v491, %v797
        %v799 = vpop.f32.mrb[0].mxu0
        %800 = vmatprep.mubr.bf16.mxu0 0
        %801 = vmatmul.mubr.bf16.gmra.mrb[0].mxu0 %v442
        %v802 = vpop.f32.mrb[0].mxu0
        %v803 = vadd.f32 %v491, %v802
        %v804 = vpop.f32.mrb[0].mxu0
        %v805 = vpop.f32.mrb[0].mxu0
        %v806 = vadd.f32 %v491, %v805
        %v807 = vpop.f32.mrb[0].mxu0
        %808 = vmatprep.mubr.bf16.mxu0 0
        %809 = vmatmul.mubr.bf16.gmra.mrb[0].mxu0 %v443
        %v810 = vpop.f32.mrb[0].mxu0
        %v811 = vadd.f32 %v491, %v810
        %v812 = vpop.f32.mrb[0].mxu0
        %v813 = vpop.f32.mrb[0].mxu0
        %v814 = vadd.f32 %v491, %v813
        %v815 = vpop.f32.mrb[0].mxu0
        %816 = vmatprep.mubr.bf16.mxu0 0
        %817 = vmatmul.mubr.bf16.gmra.mrb[0].mxu0 %v444
        %v818 = vpop.f32.mrb[0].mxu0
        %v819 = vadd.f32 %v491, %v818
        %v820 = vpop.f32.mrb[0].mxu0
        %v821 = vpop.f32.mrb[0].mxu0
        %v822 = vadd.f32 %v491, %v821
        %v823 = vpop.f32.mrb[0].mxu0
        %824 = vmatprep.mubr.bf16.mxu0 0
        %825 = vmatmul.mubr.bf16.gmra.mrb[0].mxu0 %v445
        %v826 = vpop.f32.mrb[0].mxu0
        %v827 = vadd.f32 %v491, %v826
        %v828 = vpop.f32.mrb[0].mxu0
        %v829 = vpop.f32.mrb[0].mxu0
        %v830 = vadd.f32 %v491, %v829
        %v831 = vpop.f32.mrb[0].mxu0
        %832 = vdwg.mxu0
        %v833 = vmul.f32 %v658, 0.17677669
        %v834 = vmul.f32 %v662, 0.17677669
        %v835 = vmul.f32 %v668, 0.17677669
        %v836 = vmul.f32 %v672, 0.17677669
        %v837 = vmul.f32 %v678, 0.17677669
        %v838 = vmul.f32 %v682, 0.17677669
        %v839 = vmul.f32 %v688, 0.17677669
        %v840 = vmul.f32 %v692, 0.17677669
        %v841 = vmul.f32 %v698, 0.17677669
        %v842 = vmul.f32 %v702, 0.17677669
        %v843 = vmul.f32 %v708, 0.17677669
        %v844 = vmul.f32 %v712, 0.17677669
        %v845 = vmul.f32 %v718, 0.17677669
        %v846 = vmul.f32 %v722, 0.17677669
        %v847 = vmul.f32 %v728, 0.17677669
        %v848 = vmul.f32 %v732, 0.17677669
        %v849 = vpack.c.bf16 %v834, %v833
        %v850 = vpack.c.bf16 %v836, %v835
        %v851 = vpack.c.bf16 %v838, %v837
        %v852 = vpack.c.bf16 %v840, %v839
        %v853 = vpack.c.bf16 %v842, %v841
        %v854 = vpack.c.bf16 %v844, %v843
        %v855 = vpack.c.bf16 %v846, %v845
        %v856 = vpack.c.bf16 %v848, %v847
        %v865 = vunpack.c.l.b16 %v849
        %v866 = vunpack.c.h.b16 %v849
        %v867 = vunpack.c.l.b16 %v850
        %v868 = vunpack.c.h.b16 %v850
        %v869 = vunpack.c.l.b16 %v851
        %v870 = vunpack.c.h.b16 %v851
        %v871 = vunpack.c.l.b16 %v852
        %v872 = vunpack.c.h.b16 %v852
        %v873 = vunpack.c.l.b16 %v853
        %v874 = vunpack.c.h.b16 %v853
        %v875 = vunpack.c.l.b16 %v854
        %v876 = vunpack.c.h.b16 %v854
        %v877 = vunpack.c.l.b16 %v855
        %v878 = vunpack.c.h.b16 %v855
        %v879 = vunpack.c.l.b16 %v856
        %v880 = vunpack.c.h.b16 %v856
        %v881 = vpack.c.b16 %v865, %v865
        %v882 = vpack.c.b16 %v866, %v866
        %v883 = vpack.c.b16 %v867, %v867
        %v884 = vpack.c.b16 %v868, %v868
        %v885 = vpack.c.b16 %v869, %v869
        %v886 = vpack.c.b16 %v870, %v870
        %v887 = vpack.c.b16 %v871, %v871
        %v888 = vpack.c.b16 %v872, %v872
        %v889 = vpack.c.b16 %v873, %v873
        %v890 = vpack.c.b16 %v874, %v874
        %v891 = vpack.c.b16 %v875, %v875
        %v892 = vpack.c.b16 %v876, %v876
        %v893 = vpack.c.b16 %v877, %v877
        %v894 = vpack.c.b16 %v878, %v878
        %v895 = vpack.c.b16 %v879, %v879
        %v896 = vpack.c.b16 %v880, %v880
        %vm913 = vcmask 257024
        %914 = vst.msk [vmem:[%s352] sm:$0xf] %vm913, %v881
        %915 = vst.msk [vmem:[%s352 + $0x4] sm:$0xf] %vm913, %v882
        %916 = vst.msk [vmem:[%s352 + $0x8] sm:$0xf] %vm913, %v883
        %917 = vst.msk [vmem:[%s352 + $0xc] sm:$0xf] %vm913, %v884
        %918 = vst.msk [vmem:[%s352 + $0x10] sm:$0xf] %vm913, %v885
        %919 = vst.msk [vmem:[%s352 + $0x14] sm:$0xf] %vm913, %v886
        %920 = vst.msk [vmem:[%s352 + $0x18] sm:$0xf] %vm913, %v887
        %921 = vst.msk [vmem:[%s352 + $0x1c] sm:$0xf] %vm913, %v888
        %922 = vst.msk [vmem:[%s352 + $0x20] sm:$0xf] %vm913, %v889
        %923 = vst.msk [vmem:[%s352 + $0x24] sm:$0xf] %vm913, %v890
        %924 = vst.msk [vmem:[%s352 + $0x28] sm:$0xf] %vm913, %v891
        %925 = vst.msk [vmem:[%s352 + $0x2c] sm:$0xf] %vm913, %v892
        %926 = vst.msk [vmem:[%s352 + $0x30] sm:$0xf] %vm913, %v893
        %927 = vst.msk [vmem:[%s352 + $0x34] sm:$0xf] %vm913, %v894
        %928 = vst.msk [vmem:[%s352 + $0x38] sm:$0xf] %vm913, %v895
        %929 = vst.msk [vmem:[%s352 + $0x3c] sm:$0xf] %vm913, %v896
        %v930 = vpack.c.bf16 %v664, %v660
        %v931 = vpack.c.bf16 %v674, %v670
        %v932 = vpack.c.bf16 %v684, %v680
        %v933 = vpack.c.bf16 %v694, %v690
        %v934 = vpack.c.bf16 %v704, %v700
        %v935 = vpack.c.bf16 %v714, %v710
        %v936 = vpack.c.bf16 %v724, %v720
        %v937 = vpack.c.bf16 %v734, %v730
        %v946 = vunpack.c.l.b16 %v930
        %v947 = vunpack.c.h.b16 %v930
        %v948 = vunpack.c.l.b16 %v931
        %v949 = vunpack.c.h.b16 %v931
        %v950 = vunpack.c.l.b16 %v932
        %v951 = vunpack.c.h.b16 %v932
        %v952 = vunpack.c.l.b16 %v933
        %v953 = vunpack.c.h.b16 %v933
        %v954 = vunpack.c.l.b16 %v934
        %v955 = vunpack.c.h.b16 %v934
        %v956 = vunpack.c.l.b16 %v935
        %v957 = vunpack.c.h.b16 %v935
        %v958 = vunpack.c.l.b16 %v936
        %v959 = vunpack.c.h.b16 %v936
        %v960 = vunpack.c.l.b16 %v937
        %v961 = vunpack.c.h.b16 %v937
        %v962 = vpack.c.b16 %v946, %v946
        %v963 = vpack.c.b16 %v947, %v947
        %v964 = vpack.c.b16 %v948, %v948
        %v965 = vpack.c.b16 %v949, %v949
        %v966 = vpack.c.b16 %v950, %v950
        %v967 = vpack.c.b16 %v951, %v951
        %v968 = vpack.c.b16 %v952, %v952
        %v969 = vpack.c.b16 %v953, %v953
        %v970 = vpack.c.b16 %v954, %v954
        %v971 = vpack.c.b16 %v955, %v955
        %v972 = vpack.c.b16 %v956, %v956
        %v973 = vpack.c.b16 %v957, %v957
        %v974 = vpack.c.b16 %v958, %v958
        %v975 = vpack.c.b16 %v959, %v959
        %v976 = vpack.c.b16 %v960, %v960
        %v977 = vpack.c.b16 %v961, %v961
        %994 = vst.msk [vmem:[%s358] sm:$0xf] %vm913, %v962
        %995 = vst.msk [vmem:[%s358 + $0x4] sm:$0xf] %vm913, %v963
        %996 = vst.msk [vmem:[%s358 + $0x8] sm:$0xf] %vm913, %v964
        %997 = vst.msk [vmem:[%s358 + $0xc] sm:$0xf] %vm913, %v965
        %998 = vst.msk [vmem:[%s358 + $0x10] sm:$0xf] %vm913, %v966
        %999 = vst.msk [vmem:[%s358 + $0x14] sm:$0xf] %vm913, %v967
        %1000 = vst.msk [vmem:[%s358 + $0x18] sm:$0xf] %vm913, %v968
        %1001 = vst.msk [vmem:[%s358 + $0x1c] sm:$0xf] %vm913, %v969
        %1002 = vst.msk [vmem:[%s358 + $0x20] sm:$0xf] %vm913, %v970
        %1003 = vst.msk [vmem:[%s358 + $0x24] sm:$0xf] %vm913, %v971
        %1004 = vst.msk [vmem:[%s358 + $0x28] sm:$0xf] %vm913, %v972
        %1005 = vst.msk [vmem:[%s358 + $0x2c] sm:$0xf] %vm913, %v973
        %1006 = vst.msk [vmem:[%s358 + $0x30] sm:$0xf] %vm913, %v974
        %1007 = vst.msk [vmem:[%s358 + $0x34] sm:$0xf] %vm913, %v975
        %1008 = vst.msk [vmem:[%s358 + $0x38] sm:$0xf] %vm913, %v976
        %1009 = vst.msk [vmem:[%s358 + $0x3c] sm:$0xf] %vm913, %v977
        %v1010 = vpack.c.bf16 %v774, %v771
        %v1011 = vpack.c.bf16 %v782, %v779
        %v1012 = vpack.c.bf16 %v790, %v787
        %v1013 = vpack.c.bf16 %v798, %v795
        %v1014 = vpack.c.bf16 %v806, %v803
        %v1015 = vpack.c.bf16 %v814, %v811
        %v1016 = vpack.c.bf16 %v822, %v819
        %v1017 = vpack.c.bf16 %v830, %v827
        %v1026 = vunpack.c.l.b16 %v1010
        %v1027 = vunpack.c.h.b16 %v1010
        %v1028 = vunpack.c.l.b16 %v1011
        %v1029 = vunpack.c.h.b16 %v1011
        %v1030 = vunpack.c.l.b16 %v1012
        %v1031 = vunpack.c.h.b16 %v1012
        %v1032 = vunpack.c.l.b16 %v1013
        %v1033 = vunpack.c.h.b16 %v1013
        %v1034 = vunpack.c.l.b16 %v1014
        %v1035 = vunpack.c.h.b16 %v1014
        %v1036 = vunpack.c.l.b16 %v1015
        %v1037 = vunpack.c.h.b16 %v1015
        %v1038 = vunpack.c.l.b16 %v1016
        %v1039 = vunpack.c.h.b16 %v1016
        %v1040 = vunpack.c.l.b16 %v1017
        %v1041 = vunpack.c.h.b16 %v1017
        %v1042 = vpack.c.b16 %v1026, %v1026
        %v1043 = vpack.c.b16 %v1027, %v1027
        %v1044 = vpack.c.b16 %v1028, %v1028
        %v1045 = vpack.c.b16 %v1029, %v1029
        %v1046 = vpack.c.b16 %v1030, %v1030
        %v1047 = vpack.c.b16 %v1031, %v1031
        %v1048 = vpack.c.b16 %v1032, %v1032
        %v1049 = vpack.c.b16 %v1033, %v1033
        %v1050 = vpack.c.b16 %v1034, %v1034
        %v1051 = vpack.c.b16 %v1035, %v1035
        %v1052 = vpack.c.b16 %v1036, %v1036
        %v1053 = vpack.c.b16 %v1037, %v1037
        %v1054 = vpack.c.b16 %v1038, %v1038
        %v1055 = vpack.c.b16 %v1039, %v1039
        %v1056 = vpack.c.b16 %v1040, %v1040
        %v1057 = vpack.c.b16 %v1041, %v1041
        %1074 = vst.msk [vmem:[%s364] sm:$0xf] %vm913, %v1042
        %1075 = vst.msk [vmem:[%s364 + $0x4] sm:$0xf] %vm913, %v1043
        %1076 = vst.msk [vmem:[%s364 + $0x8] sm:$0xf] %vm913, %v1044
        %1077 = vst.msk [vmem:[%s364 + $0xc] sm:$0xf] %vm913, %v1045
        %1078 = vst.msk [vmem:[%s364 + $0x10] sm:$0xf] %vm913, %v1046
        %1079 = vst.msk [vmem:[%s364 + $0x14] sm:$0xf] %vm913, %v1047
        %1080 = vst.msk [vmem:[%s364 + $0x18] sm:$0xf] %vm913, %v1048
        %1081 = vst.msk [vmem:[%s364 + $0x1c] sm:$0xf] %vm913, %v1049
        %1082 = vst.msk [vmem:[%s364 + $0x20] sm:$0xf] %vm913, %v1050
        %1083 = vst.msk [vmem:[%s364 + $0x24] sm:$0xf] %vm913, %v1051
        %1084 = vst.msk [vmem:[%s364 + $0x28] sm:$0xf] %vm913, %v1052
        %1085 = vst.msk [vmem:[%s364 + $0x2c] sm:$0xf] %vm913, %v1053
        %1086 = vst.msk [vmem:[%s364 + $0x30] sm:$0xf] %vm913, %v1054
        %1087 = vst.msk [vmem:[%s364 + $0x34] sm:$0xf] %vm913, %v1055
        %1088 = vst.msk [vmem:[%s364 + $0x38] sm:$0xf] %vm913, %v1056
        %1089 = vst.msk [vmem:[%s364 + $0x3c] sm:$0xf] %vm913, %v1057
        %1090 = vrot.lane.b32.xlu0 %v881, 96
        %v1091 = vpop.permute.xlu0 %1090
        %1092 = vrot.lane.b32.xlu0 %v882, 96
        %v1093 = vpop.permute.xlu0 %1092
        %1094 = vrot.lane.b32.xlu0 %v883, 96
        %v1095 = vpop.permute.xlu0 %1094
        %1096 = vrot.lane.b32.xlu0 %v884, 96
        %v1097 = vpop.permute.xlu0 %1096
        %1098 = vrot.lane.b32.xlu0 %v885, 96
        %v1099 = vpop.permute.xlu0 %1098
        %1100 = vrot.lane.b32.xlu0 %v886, 96
        %v1101 = vpop.permute.xlu0 %1100
        %1102 = vrot.lane.b32.xlu0 %v887, 96
        %v1103 = vpop.permute.xlu0 %1102
        %1104 = vrot.lane.b32.xlu0 %v888, 96
        %v1105 = vpop.permute.xlu0 %1104
        %1106 = vrot.lane.b32.xlu0 %v889, 96
        %v1107 = vpop.permute.xlu0 %1106
        %1108 = vrot.lane.b32.xlu0 %v890, 96
        %v1109 = vpop.permute.xlu0 %1108
        %1110 = vrot.lane.b32.xlu0 %v891, 96
        %v1111 = vpop.permute.xlu0 %1110
        %1112 = vrot.lane.b32.xlu0 %v892, 96
        %v1113 = vpop.permute.xlu0 %1112
        %1114 = vrot.lane.b32.xlu0 %v893, 96
        %v1115 = vpop.permute.xlu0 %1114
        %1116 = vrot.lane.b32.xlu0 %v894, 96
        %v1117 = vpop.permute.xlu0 %1116
        %1118 = vrot.lane.b32.xlu0 %v895, 96
        %v1119 = vpop.permute.xlu0 %1118
        %1120 = vrot.lane.b32.xlu0 %v896, 96
        %v1121 = vpop.permute.xlu0 %1120
        %s1138 = scalar_lea.vmem %s352, 64 [#allocation6]
        %1139 = vst.msk [vmem:[%s1138] sm:$0xf] %vm913, %v1091
        %1140 = vst.msk [vmem:[%s1138 + $0x4] sm:$0xf] %vm913, %v1093
        %1141 = vst.msk [vmem:[%s1138 + $0x8] sm:$0xf] %vm913, %v1095
        %1142 = vst.msk [vmem:[%s1138 + $0xc] sm:$0xf] %vm913, %v1097
        %1143 = vst.msk [vmem:[%s1138 + $0x10] sm:$0xf] %vm913, %v1099
        %1144 = vst.msk [vmem:[%s1138 + $0x14] sm:$0xf] %vm913, %v1101
        %1145 = vst.msk [vmem:[%s1138 + $0x18] sm:$0xf] %vm913, %v1103
        %1146 = vst.msk [vmem:[%s1138 + $0x1c] sm:$0xf] %vm913, %v1105
        %1147 = vst.msk [vmem:[%s1138 + $0x20] sm:$0xf] %vm913, %v1107
        %1148 = vst.msk [vmem:[%s1138 + $0x24] sm:$0xf] %vm913, %v1109
        %1149 = vst.msk [vmem:[%s1138 + $0x28] sm:$0xf] %vm913, %v1111
        %1150 = vst.msk [vmem:[%s1138 + $0x2c] sm:$0xf] %vm913, %v1113
        %1151 = vst.msk [vmem:[%s1138 + $0x30] sm:$0xf] %vm913, %v1115
        %1152 = vst.msk [vmem:[%s1138 + $0x34] sm:$0xf] %vm913, %v1117
        %1153 = vst.msk [vmem:[%s1138 + $0x38] sm:$0xf] %vm913, %v1119
        %1154 = vst.msk [vmem:[%s1138 + $0x3c] sm:$0xf] %vm913, %v1121
        %1155 = vrot.lane.b32.xlu0 %v962, 96
        %v1156 = vpop.permute.xlu0 %1155
        %1157 = vrot.lane.b32.xlu0 %v963, 96
        %v1158 = vpop.permute.xlu0 %1157
        %1159 = vrot.lane.b32.xlu0 %v964, 96
        %v1160 = vpop.permute.xlu0 %1159
        %1161 = vrot.lane.b32.xlu0 %v965, 96
        %v1162 = vpop.permute.xlu0 %1161
        %1163 = vrot.lane.b32.xlu0 %v966, 96
        %v1164 = vpop.permute.xlu0 %1163
        %1165 = vrot.lane.b32.xlu0 %v967, 96
        %v1166 = vpop.permute.xlu0 %1165
        %1167 = vrot.lane.b32.xlu0 %v968, 96
        %v1168 = vpop.permute.xlu0 %1167
        %1169 = vrot.lane.b32.xlu0 %v969, 96
        %v1170 = vpop.permute.xlu0 %1169
        %1171 = vrot.lane.b32.xlu0 %v970, 96
        %v1172 = vpop.permute.xlu0 %1171
        %1173 = vrot.lane.b32.xlu0 %v971, 96
        %v1174 = vpop.permute.xlu0 %1173
        %1175 = vrot.lane.b32.xlu0 %v972, 96
        %v1176 = vpop.permute.xlu0 %1175
        %1177 = vrot.lane.b32.xlu0 %v973, 96
        %v1178 = vpop.permute.xlu0 %1177
        %1179 = vrot.lane.b32.xlu0 %v974, 96
        %v1180 = vpop.permute.xlu0 %1179
        %1181 = vrot.lane.b32.xlu0 %v975, 96
        %v1182 = vpop.permute.xlu0 %1181
        %1183 = vrot.lane.b32.xlu0 %v976, 96
        %v1184 = vpop.permute.xlu0 %1183
        %1185 = vrot.lane.b32.xlu0 %v977, 96
        %v1186 = vpop.permute.xlu0 %1185
        %s1203 = scalar_lea.vmem %s358, 64 [#allocation7]
        %1204 = vst.msk [vmem:[%s1203] sm:$0xf] %vm913, %v1156
        %1205 = vst.msk [vmem:[%s1203 + $0x4] sm:$0xf] %vm913, %v1158
        %1206 = vst.msk [vmem:[%s1203 + $0x8] sm:$0xf] %vm913, %v1160
        %1207 = vst.msk [vmem:[%s1203 + $0xc] sm:$0xf] %vm913, %v1162
        %1208 = vst.msk [vmem:[%s1203 + $0x10] sm:$0xf] %vm913, %v1164
        %1209 = vst.msk [vmem:[%s1203 + $0x14] sm:$0xf] %vm913, %v1166
        %1210 = vst.msk [vmem:[%s1203 + $0x18] sm:$0xf] %vm913, %v1168
        %1211 = vst.msk [vmem:[%s1203 + $0x1c] sm:$0xf] %vm913, %v1170
        %1212 = vst.msk [vmem:[%s1203 + $0x20] sm:$0xf] %vm913, %v1172
        %1213 = vst.msk [vmem:[%s1203 + $0x24] sm:$0xf] %vm913, %v1174
        %1214 = vst.msk [vmem:[%s1203 + $0x28] sm:$0xf] %vm913, %v1176
        %1215 = vst.msk [vmem:[%s1203 + $0x2c] sm:$0xf] %vm913, %v1178
        %1216 = vst.msk [vmem:[%s1203 + $0x30] sm:$0xf] %vm913, %v1180
        %1217 = vst.msk [vmem:[%s1203 + $0x34] sm:$0xf] %vm913, %v1182
        %1218 = vst.msk [vmem:[%s1203 + $0x38] sm:$0xf] %vm913, %v1184
        %1219 = vst.msk [vmem:[%s1203 + $0x3c] sm:$0xf] %vm913, %v1186
        %1220 = vrot.lane.b32.xlu0 %v1042, 96
        %v1221 = vpop.permute.xlu0 %1220
        %1222 = vrot.lane.b32.xlu0 %v1043, 96
        %v1223 = vpop.permute.xlu0 %1222
        %1224 = vrot.lane.b32.xlu0 %v1044, 96
        %v1225 = vpop.permute.xlu0 %1224
        %1226 = vrot.lane.b32.xlu0 %v1045, 96
        %v1227 = vpop.permute.xlu0 %1226
        %1228 = vrot.lane.b32.xlu0 %v1046, 96
        %v1229 = vpop.permute.xlu0 %1228
        %1230 = vrot.lane.b32.xlu0 %v1047, 96
        %v1231 = vpop.permute.xlu0 %1230
        %1232 = vrot.lane.b32.xlu0 %v1048, 96
        %v1233 = vpop.permute.xlu0 %1232
        %1234 = vrot.lane.b32.xlu0 %v1049, 96
        %v1235 = vpop.permute.xlu0 %1234
        %1236 = vrot.lane.b32.xlu0 %v1050, 96
        %v1237 = vpop.permute.xlu0 %1236
        %1238 = vrot.lane.b32.xlu0 %v1051, 96
        %v1239 = vpop.permute.xlu0 %1238
        %1240 = vrot.lane.b32.xlu0 %v1052, 96
        %v1241 = vpop.permute.xlu0 %1240
        %1242 = vrot.lane.b32.xlu0 %v1053, 96
        %v1243 = vpop.permute.xlu0 %1242
        %1244 = vrot.lane.b32.xlu0 %v1054, 96
        %v1245 = vpop.permute.xlu0 %1244
        %1246 = vrot.lane.b32.xlu0 %v1055, 96
        %v1247 = vpop.permute.xlu0 %1246
        %1248 = vrot.lane.b32.xlu0 %v1056, 96
        %v1249 = vpop.permute.xlu0 %1248
        %1250 = vrot.lane.b32.xlu0 %v1057, 96
        %v1251 = vpop.permute.xlu0 %1250
        %s1268 = scalar_lea.vmem %s364, 64 [#allocation8]
        %1269 = vst.msk [vmem:[%s1268] sm:$0xf] %vm913, %v1221
        %1270 = vst.msk [vmem:[%s1268 + $0x4] sm:$0xf] %vm913, %v1223
        %1271 = vst.msk [vmem:[%s1268 + $0x8] sm:$0xf] %vm913, %v1225
        %1272 = vst.msk [vmem:[%s1268 + $0xc] sm:$0xf] %vm913, %v1227
        %1273 = vst.msk [vmem:[%s1268 + $0x10] sm:$0xf] %vm913, %v1229
        %1274 = vst.msk [vmem:[%s1268 + $0x14] sm:$0xf] %vm913, %v1231
        %1275 = vst.msk [vmem:[%s1268 + $0x18] sm:$0xf] %vm913, %v1233
        %1276 = vst.msk [vmem:[%s1268 + $0x1c] sm:$0xf] %vm913, %v1235
        %1277 = vst.msk [vmem:[%s1268 + $0x20] sm:$0xf] %vm913, %v1237
        %1278 = vst.msk [vmem:[%s1268 + $0x24] sm:$0xf] %vm913, %v1239
        %1279 = vst.msk [vmem:[%s1268 + $0x28] sm:$0xf] %vm913, %v1241
        %1280 = vst.msk [vmem:[%s1268 + $0x2c] sm:$0xf] %vm913, %v1243
        %1281 = vst.msk [vmem:[%s1268 + $0x30] sm:$0xf] %vm913, %v1245
        %1282 = vst.msk [vmem:[%s1268 + $0x34] sm:$0xf] %vm913, %v1247
        %1283 = vst.msk [vmem:[%s1268 + $0x38] sm:$0xf] %vm913, %v1249
        %1284 = vst.msk [vmem:[%s1268 + $0x3c] sm:$0xf] %vm913, %v1251
        %1285 = vrot.lane.b32.xlu0 %v881, 64
        %v1286 = vpop.permute.xlu0 %1285
        %1287 = vrot.lane.b32.xlu0 %v882, 64
        %v1288 = vpop.permute.xlu0 %1287
        %1289 = vrot.lane.b32.xlu0 %v883, 64
        %v1290 = vpop.permute.xlu0 %1289
        %1291 = vrot.lane.b32.xlu0 %v884, 64
        %v1292 = vpop.permute.xlu0 %1291
        %1293 = vrot.lane.b32.xlu0 %v885, 64
        %v1294 = vpop.permute.xlu0 %1293
        %1295 = vrot.lane.b32.xlu0 %v886, 64
        %v1296 = vpop.permute.xlu0 %1295
        %1297 = vrot.lane.b32.xlu0 %v887, 64
        %v1298 = vpop.permute.xlu0 %1297
        %1299 = vrot.lane.b32.xlu0 %v888, 64
        %v1300 = vpop.permute.xlu0 %1299
        %1301 = vrot.lane.b32.xlu0 %v889, 64
        %v1302 = vpop.permute.xlu0 %1301
        %1303 = vrot.lane.b32.xlu0 %v890, 64
        %v1304 = vpop.permute.xlu0 %1303
        %1305 = vrot.lane.b32.xlu0 %v891, 64
        %v1306 = vpop.permute.xlu0 %1305
        %1307 = vrot.lane.b32.xlu0 %v892, 64
        %v1308 = vpop.permute.xlu0 %1307
        %1309 = vrot.lane.b32.xlu0 %v893, 64
        %v1310 = vpop.permute.xlu0 %1309
        %1311 = vrot.lane.b32.xlu0 %v894, 64
        %v1312 = vpop.permute.xlu0 %1311
        %1313 = vrot.lane.b32.xlu0 %v895, 64
        %v1314 = vpop.permute.xlu0 %1313
        %1315 = vrot.lane.b32.xlu0 %v896, 64
        %v1316 = vpop.permute.xlu0 %1315
        %s1333 = scalar_lea.vmem %s352, 128 [#allocation6]
        %1334 = vst.msk [vmem:[%s1333] sm:$0xf] %vm913, %v1286
        %1335 = vst.msk [vmem:[%s1333 + $0x4] sm:$0xf] %vm913, %v1288
        %1336 = vst.msk [vmem:[%s1333 + $0x8] sm:$0xf] %vm913, %v1290
        %1337 = vst.msk [vmem:[%s1333 + $0xc] sm:$0xf] %vm913, %v1292
        %1338 = vst.msk [vmem:[%s1333 + $0x10] sm:$0xf] %vm913, %v1294
        %1339 = vst.msk [vmem:[%s1333 + $0x14] sm:$0xf] %vm913, %v1296
        %1340 = vst.msk [vmem:[%s1333 + $0x18] sm:$0xf] %vm913, %v1298
        %1341 = vst.msk [vmem:[%s1333 + $0x1c] sm:$0xf] %vm913, %v1300
        %1342 = vst.msk [vmem:[%s1333 + $0x20] sm:$0xf] %vm913, %v1302
        %1343 = vst.msk [vmem:[%s1333 + $0x24] sm:$0xf] %vm913, %v1304
        %1344 = vst.msk [vmem:[%s1333 + $0x28] sm:$0xf] %vm913, %v1306
        %1345 = vst.msk [vmem:[%s1333 + $0x2c] sm:$0xf] %vm913, %v1308
        %1346 = vst.msk [vmem:[%s1333 + $0x30] sm:$0xf] %vm913, %v1310
        %1347 = vst.msk [vmem:[%s1333 + $0x34] sm:$0xf] %vm913, %v1312
        %1348 = vst.msk [vmem:[%s1333 + $0x38] sm:$0xf] %vm913, %v1314
        %1349 = vst.msk [vmem:[%s1333 + $0x3c] sm:$0xf] %vm913, %v1316
        %1350 = vrot.lane.b32.xlu0 %v962, 64
        %v1351 = vpop.permute.xlu0 %1350
        %1352 = vrot.lane.b32.xlu0 %v963, 64
        %v1353 = vpop.permute.xlu0 %1352
        %1354 = vrot.lane.b32.xlu0 %v964, 64
        %v1355 = vpop.permute.xlu0 %1354
        %1356 = vrot.lane.b32.xlu0 %v965, 64
        %v1357 = vpop.permute.xlu0 %1356
        %1358 = vrot.lane.b32.xlu0 %v966, 64
        %v1359 = vpop.permute.xlu0 %1358
        %1360 = vrot.lane.b32.xlu0 %v967, 64
        %v1361 = vpop.permute.xlu0 %1360
        %1362 = vrot.lane.b32.xlu0 %v968, 64
        %v1363 = vpop.permute.xlu0 %1362
        %1364 = vrot.lane.b32.xlu0 %v969, 64
        %v1365 = vpop.permute.xlu0 %1364
        %1366 = vrot.lane.b32.xlu0 %v970, 64
        %v1367 = vpop.permute.xlu0 %1366
        %1368 = vrot.lane.b32.xlu0 %v971, 64
        %v1369 = vpop.permute.xlu0 %1368
        %1370 = vrot.lane.b32.xlu0 %v972, 64
        %v1371 = vpop.permute.xlu0 %1370
        %1372 = vrot.lane.b32.xlu0 %v973, 64
        %v1373 = vpop.permute.xlu0 %1372
        %1374 = vrot.lane.b32.xlu0 %v974, 64
        %v1375 = vpop.permute.xlu0 %1374
        %1376 = vrot.lane.b32.xlu0 %v975, 64
        %v1377 = vpop.permute.xlu0 %1376
        %1378 = vrot.lane.b32.xlu0 %v976, 64
        %v1379 = vpop.permute.xlu0 %1378
        %1380 = vrot.lane.b32.xlu0 %v977, 64
        %v1381 = vpop.permute.xlu0 %1380
        %s1398 = scalar_lea.vmem %s358, 128 [#allocation7]
        %1399 = vst.msk [vmem:[%s1398] sm:$0xf] %vm913, %v1351
        %1400 = vst.msk [vmem:[%s1398 + $0x4] sm:$0xf] %vm913, %v1353
        %1401 = vst.msk [vmem:[%s1398 + $0x8] sm:$0xf] %vm913, %v1355
        %1402 = vst.msk [vmem:[%s1398 + $0xc] sm:$0xf] %vm913, %v1357
        %1403 = vst.msk [vmem:[%s1398 + $0x10] sm:$0xf] %vm913, %v1359
        %1404 = vst.msk [vmem:[%s1398 + $0x14] sm:$0xf] %vm913, %v1361
        %1405 = vst.msk [vmem:[%s1398 + $0x18] sm:$0xf] %vm913, %v1363
        %1406 = vst.msk [vmem:[%s1398 + $0x1c] sm:$0xf] %vm913, %v1365
        %1407 = vst.msk [vmem:[%s1398 + $0x20] sm:$0xf] %vm913, %v1367
        %1408 = vst.msk [vmem:[%s1398 + $0x24] sm:$0xf] %vm913, %v1369
        %1409 = vst.msk [vmem:[%s1398 + $0x28] sm:$0xf] %vm913, %v1371
        %1410 = vst.msk [vmem:[%s1398 + $0x2c] sm:$0xf] %vm913, %v1373
        %1411 = vst.msk [vmem:[%s1398 + $0x30] sm:$0xf] %vm913, %v1375
        %1412 = vst.msk [vmem:[%s1398 + $0x34] sm:$0xf] %vm913, %v1377
        %1413 = vst.msk [vmem:[%s1398 + $0x38] sm:$0xf] %vm913, %v1379
        %1414 = vst.msk [vmem:[%s1398 + $0x3c] sm:$0xf] %vm913, %v1381
        %1415 = vrot.lane.b32.xlu0 %v1042, 64
        %v1416 = vpop.permute.xlu0 %1415
        %1417 = vrot.lane.b32.xlu0 %v1043, 64
        %v1418 = vpop.permute.xlu0 %1417
        %1419 = vrot.lane.b32.xlu0 %v1044, 64
        %v1420 = vpop.permute.xlu0 %1419
        %1421 = vrot.lane.b32.xlu0 %v1045, 64
        %v1422 = vpop.permute.xlu0 %1421
        %1423 = vrot.lane.b32.xlu0 %v1046, 64
        %v1424 = vpop.permute.xlu0 %1423
        %1425 = vrot.lane.b32.xlu0 %v1047, 64
        %v1426 = vpop.permute.xlu0 %1425
        %1427 = vrot.lane.b32.xlu0 %v1048, 64
        %v1428 = vpop.permute.xlu0 %1427
        %1429 = vrot.lane.b32.xlu0 %v1049, 64
        %v1430 = vpop.permute.xlu0 %1429
        %1431 = vrot.lane.b32.xlu0 %v1050, 64
        %v1432 = vpop.permute.xlu0 %1431
        %1433 = vrot.lane.b32.xlu0 %v1051, 64
        %v1434 = vpop.permute.xlu0 %1433
        %1435 = vrot.lane.b32.xlu0 %v1052, 64
        %v1436 = vpop.permute.xlu0 %1435
        %1437 = vrot.lane.b32.xlu0 %v1053, 64
        %v1438 = vpop.permute.xlu0 %1437
        %1439 = vrot.lane.b32.xlu0 %v1054, 64
        %v1440 = vpop.permute.xlu0 %1439
        %1441 = vrot.lane.b32.xlu0 %v1055, 64
        %v1442 = vpop.permute.xlu0 %1441
        %1443 = vrot.lane.b32.xlu0 %v1056, 64
        %v1444 = vpop.permute.xlu0 %1443
        %1445 = vrot.lane.b32.xlu0 %v1057, 64
        %v1446 = vpop.permute.xlu0 %1445
        %s1463 = scalar_lea.vmem %s364, 128 [#allocation8]
        %1464 = vst.msk [vmem:[%s1463] sm:$0xf] %vm913, %v1416
        %1465 = vst.msk [vmem:[%s1463 + $0x4] sm:$0xf] %vm913, %v1418
        %1466 = vst.msk [vmem:[%s1463 + $0x8] sm:$0xf] %vm913, %v1420
        %1467 = vst.msk [vmem:[%s1463 + $0xc] sm:$0xf] %vm913, %v1422
        %1468 = vst.msk [vmem:[%s1463 + $0x10] sm:$0xf] %vm913, %v1424
        %1469 = vst.msk [vmem:[%s1463 + $0x14] sm:$0xf] %vm913, %v1426
        %1470 = vst.msk [vmem:[%s1463 + $0x18] sm:$0xf] %vm913, %v1428
        %1471 = vst.msk [vmem:[%s1463 + $0x1c] sm:$0xf] %vm913, %v1430
        %1472 = vst.msk [vmem:[%s1463 + $0x20] sm:$0xf] %vm913, %v1432
        %1473 = vst.msk [vmem:[%s1463 + $0x24] sm:$0xf] %vm913, %v1434
        %1474 = vst.msk [vmem:[%s1463 + $0x28] sm:$0xf] %vm913, %v1436
        %1475 = vst.msk [vmem:[%s1463 + $0x2c] sm:$0xf] %vm913, %v1438
        %1476 = vst.msk [vmem:[%s1463 + $0x30] sm:$0xf] %vm913, %v1440
        %1477 = vst.msk [vmem:[%s1463 + $0x34] sm:$0xf] %vm913, %v1442
        %1478 = vst.msk [vmem:[%s1463 + $0x38] sm:$0xf] %vm913, %v1444
        %1479 = vst.msk [vmem:[%s1463 + $0x3c] sm:$0xf] %vm913, %v1446
        %1480 = vrot.lane.b32.xlu0 %v881, 32
        %v1481 = vpop.permute.xlu0 %1480
        %1482 = vrot.lane.b32.xlu0 %v882, 32
        %v1483 = vpop.permute.xlu0 %1482
        %1484 = vrot.lane.b32.xlu0 %v883, 32
        %v1485 = vpop.permute.xlu0 %1484
        %1486 = vrot.lane.b32.xlu0 %v884, 32
        %v1487 = vpop.permute.xlu0 %1486
        %1488 = vrot.lane.b32.xlu0 %v885, 32
        %v1489 = vpop.permute.xlu0 %1488
        %1490 = vrot.lane.b32.xlu0 %v886, 32
        %v1491 = vpop.permute.xlu0 %1490
        %1492 = vrot.lane.b32.xlu0 %v887, 32
        %v1493 = vpop.permute.xlu0 %1492
        %1494 = vrot.lane.b32.xlu0 %v888, 32
        %v1495 = vpop.permute.xlu0 %1494
        %1496 = vrot.lane.b32.xlu0 %v889, 32
        %v1497 = vpop.permute.xlu0 %1496
        %1498 = vrot.lane.b32.xlu0 %v890, 32
        %v1499 = vpop.permute.xlu0 %1498
        %1500 = vrot.lane.b32.xlu0 %v891, 32
        %v1501 = vpop.permute.xlu0 %1500
        %1502 = vrot.lane.b32.xlu0 %v892, 32
        %v1503 = vpop.permute.xlu0 %1502
        %1504 = vrot.lane.b32.xlu0 %v893, 32
        %v1505 = vpop.permute.xlu0 %1504
        %1506 = vrot.lane.b32.xlu0 %v894, 32
        %v1507 = vpop.permute.xlu0 %1506
        %1508 = vrot.lane.b32.xlu0 %v895, 32
        %v1509 = vpop.permute.xlu0 %1508
        %1510 = vrot.lane.b32.xlu0 %v896, 32
        %v1511 = vpop.permute.xlu0 %1510
        %s1528 = scalar_lea.vmem %s352, 192 [#allocation6]
        %1529 = vst.msk [vmem:[%s1528] sm:$0xf] %vm913, %v1481
        %1530 = vst.msk [vmem:[%s1528 + $0x4] sm:$0xf] %vm913, %v1483
        %1531 = vst.msk [vmem:[%s1528 + $0x8] sm:$0xf] %vm913, %v1485
        %1532 = vst.msk [vmem:[%s1528 + $0xc] sm:$0xf] %vm913, %v1487
        %1533 = vst.msk [vmem:[%s1528 + $0x10] sm:$0xf] %vm913, %v1489
        %1534 = vst.msk [vmem:[%s1528 + $0x14] sm:$0xf] %vm913, %v1491
        %1535 = vst.msk [vmem:[%s1528 + $0x18] sm:$0xf] %vm913, %v1493
        %1536 = vst.msk [vmem:[%s1528 + $0x1c] sm:$0xf] %vm913, %v1495
        %1537 = vst.msk [vmem:[%s1528 + $0x20] sm:$0xf] %vm913, %v1497
        %1538 = vst.msk [vmem:[%s1528 + $0x24] sm:$0xf] %vm913, %v1499
        %1539 = vst.msk [vmem:[%s1528 + $0x28] sm:$0xf] %vm913, %v1501
        %1540 = vst.msk [vmem:[%s1528 + $0x2c] sm:$0xf] %vm913, %v1503
        %1541 = vst.msk [vmem:[%s1528 + $0x30] sm:$0xf] %vm913, %v1505
        %1542 = vst.msk [vmem:[%s1528 + $0x34] sm:$0xf] %vm913, %v1507
        %1543 = vst.msk [vmem:[%s1528 + $0x38] sm:$0xf] %vm913, %v1509
        %1544 = vst.msk [vmem:[%s1528 + $0x3c] sm:$0xf] %vm913, %v1511
        %1545 = vrot.lane.b32.xlu0 %v962, 32
        %v1546 = vpop.permute.xlu0 %1545
        %1547 = vrot.lane.b32.xlu0 %v963, 32
        %v1548 = vpop.permute.xlu0 %1547
        %1549 = vrot.lane.b32.xlu0 %v964, 32
        %v1550 = vpop.permute.xlu0 %1549
        %1551 = vrot.lane.b32.xlu0 %v965, 32
        %v1552 = vpop.permute.xlu0 %1551
        %1553 = vrot.lane.b32.xlu0 %v966, 32
        %v1554 = vpop.permute.xlu0 %1553
        %1555 = vrot.lane.b32.xlu0 %v967, 32
        %v1556 = vpop.permute.xlu0 %1555
        %1557 = vrot.lane.b32.xlu0 %v968, 32
        %v1558 = vpop.permute.xlu0 %1557
        %1559 = vrot.lane.b32.xlu0 %v969, 32
        %v1560 = vpop.permute.xlu0 %1559
        %1561 = vrot.lane.b32.xlu0 %v970, 32
        %v1562 = vpop.permute.xlu0 %1561
        %1563 = vrot.lane.b32.xlu0 %v971, 32
        %v1564 = vpop.permute.xlu0 %1563
        %1565 = vrot.lane.b32.xlu0 %v972, 32
        %v1566 = vpop.permute.xlu0 %1565
        %1567 = vrot.lane.b32.xlu0 %v973, 32
        %v1568 = vpop.permute.xlu0 %1567
        %1569 = vrot.lane.b32.xlu0 %v974, 32
        %v1570 = vpop.permute.xlu0 %1569
        %1571 = vrot.lane.b32.xlu0 %v975, 32
        %v1572 = vpop.permute.xlu0 %1571
        %1573 = vrot.lane.b32.xlu0 %v976, 32
        %v1574 = vpop.permute.xlu0 %1573
        %1575 = vrot.lane.b32.xlu0 %v977, 32
        %v1576 = vpop.permute.xlu0 %1575
        %s1593 = scalar_lea.vmem %s358, 192 [#allocation7]
        %1594 = vst.msk [vmem:[%s1593] sm:$0xf] %vm913, %v1546
        %1595 = vst.msk [vmem:[%s1593 + $0x4] sm:$0xf] %vm913, %v1548
        %1596 = vst.msk [vmem:[%s1593 + $0x8] sm:$0xf] %vm913, %v1550
        %1597 = vst.msk [vmem:[%s1593 + $0xc] sm:$0xf] %vm913, %v1552
        %1598 = vst.msk [vmem:[%s1593 + $0x10] sm:$0xf] %vm913, %v1554
        %1599 = vst.msk [vmem:[%s1593 + $0x14] sm:$0xf] %vm913, %v1556
        %1600 = vst.msk [vmem:[%s1593 + $0x18] sm:$0xf] %vm913, %v1558
        %1601 = vst.msk [vmem:[%s1593 + $0x1c] sm:$0xf] %vm913, %v1560
        %1602 = vst.msk [vmem:[%s1593 + $0x20] sm:$0xf] %vm913, %v1562
        %1603 = vst.msk [vmem:[%s1593 + $0x24] sm:$0xf] %vm913, %v1564
        %1604 = vst.msk [vmem:[%s1593 + $0x28] sm:$0xf] %vm913, %v1566
        %1605 = vst.msk [vmem:[%s1593 + $0x2c] sm:$0xf] %vm913, %v1568
        %1606 = vst.msk [vmem:[%s1593 + $0x30] sm:$0xf] %vm913, %v1570
        %1607 = vst.msk [vmem:[%s1593 + $0x34] sm:$0xf] %vm913, %v1572
        %1608 = vst.msk [vmem:[%s1593 + $0x38] sm:$0xf] %vm913, %v1574
        %1609 = vst.msk [vmem:[%s1593 + $0x3c] sm:$0xf] %vm913, %v1576
        %1610 = vrot.lane.b32.xlu0 %v1042, 32
        %v1611 = vpop.permute.xlu0 %1610
        %1612 = vrot.lane.b32.xlu0 %v1043, 32
        %v1613 = vpop.permute.xlu0 %1612
        %1614 = vrot.lane.b32.xlu0 %v1044, 32
        %v1615 = vpop.permute.xlu0 %1614
        %1616 = vrot.lane.b32.xlu0 %v1045, 32
        %v1617 = vpop.permute.xlu0 %1616
        %1618 = vrot.lane.b32.xlu0 %v1046, 32
        %v1619 = vpop.permute.xlu0 %1618
        %1620 = vrot.lane.b32.xlu0 %v1047, 32
        %v1621 = vpop.permute.xlu0 %1620
        %1622 = vrot.lane.b32.xlu0 %v1048, 32
        %v1623 = vpop.permute.xlu0 %1622
        %1624 = vrot.lane.b32.xlu0 %v1049, 32
        %v1625 = vpop.permute.xlu0 %1624
        %1626 = vrot.lane.b32.xlu0 %v1050, 32
        %v1627 = vpop.permute.xlu0 %1626
        %1628 = vrot.lane.b32.xlu0 %v1051, 32
        %v1629 = vpop.permute.xlu0 %1628
        %1630 = vrot.lane.b32.xlu0 %v1052, 32
        %v1631 = vpop.permute.xlu0 %1630
        %1632 = vrot.lane.b32.xlu0 %v1053, 32
        %v1633 = vpop.permute.xlu0 %1632
        %1634 = vrot.lane.b32.xlu0 %v1054, 32
        %v1635 = vpop.permute.xlu0 %1634
        %1636 = vrot.lane.b32.xlu0 %v1055, 32
        %v1637 = vpop.permute.xlu0 %1636
        %1638 = vrot.lane.b32.xlu0 %v1056, 32
        %v1639 = vpop.permute.xlu0 %1638
        %1640 = vrot.lane.b32.xlu0 %v1057, 32
        %v1641 = vpop.permute.xlu0 %1640
        %s1658 = scalar_lea.vmem %s364, 192 [#allocation8]
        %1659 = vst.msk [vmem:[%s1658] sm:$0xf] %vm913, %v1611
        %1660 = vst.msk [vmem:[%s1658 + $0x4] sm:$0xf] %vm913, %v1613
        %1661 = vst.msk [vmem:[%s1658 + $0x8] sm:$0xf] %vm913, %v1615
        %1662 = vst.msk [vmem:[%s1658 + $0xc] sm:$0xf] %vm913, %v1617
        %1663 = vst.msk [vmem:[%s1658 + $0x10] sm:$0xf] %vm913, %v1619
        %1664 = vst.msk [vmem:[%s1658 + $0x14] sm:$0xf] %vm913, %v1621
        %1665 = vst.msk [vmem:[%s1658 + $0x18] sm:$0xf] %vm913, %v1623
        %1666 = vst.msk [vmem:[%s1658 + $0x1c] sm:$0xf] %vm913, %v1625
        %1667 = vst.msk [vmem:[%s1658 + $0x20] sm:$0xf] %vm913, %v1627
        %1668 = vst.msk [vmem:[%s1658 + $0x24] sm:$0xf] %vm913, %v1629
        %1669 = vst.msk [vmem:[%s1658 + $0x28] sm:$0xf] %vm913, %v1631
        %1670 = vst.msk [vmem:[%s1658 + $0x2c] sm:$0xf] %vm913, %v1633
        %1671 = vst.msk [vmem:[%s1658 + $0x30] sm:$0xf] %vm913, %v1635
        %1672 = vst.msk [vmem:[%s1658 + $0x34] sm:$0xf] %vm913, %v1637
        %1673 = vst.msk [vmem:[%s1658 + $0x38] sm:$0xf] %vm913, %v1639
        %1674 = vst.msk [vmem:[%s1658 + $0x3c] sm:$0xf] %vm913, %v1641
        %s1675 = sand.u32 %s167, 1
        %s1676 = sand.u32 %s167, 1
        %s1677 = smul.addr %s1676, 256
        %s1678 = scalar_lea.vmem [#allocation6], %s1677
        %s1679 = sand.u32 %s195, 1
        %s1680 = sand.u32 %s195, 1
        %s1681 = smul.addr %s1680, 256
        %s1682 = scalar_lea.vmem [#allocation7], %s1681
        %s1683 = sand.u32 %s223, 1
        %s1684 = sand.u32 %s223, 1
        %s1685 = smul.addr %s1684, 256
        %s1686 = scalar_lea.vmem [#allocation8], %s1685
        // Predicated region
        $region49: #{tpu_custom_call.1} parent=39 // pred_check
          %p1687 = pneg %p177
        $region50: #{tpu_custom_call.1} parent=39 // pred_check_branch
          %1689 = sbr.rel (%p1687) target = $region52
        $region51: #{tpu_custom_call.1} parent=39 // pred_region
          %s1690 = smul.u32 16, %s28
          %s1691 = smul.addr %s27, 128
          %s1692 = sadd.s32 %s1690, %s1691
          %s1693 = smul.addr %s1692, 4
          %s1694 = scalar_lea.vmem %s5, %s1693
          // Predicated region
          $region53: #{tpu_custom_call.1} parent=51 // pred_check
            _
          $region54: #{tpu_custom_call.1} parent=51 // pred_check_branch
            %1696 = sbr.rel (0) target = $region56
          $region55: #{tpu_custom_call.1} parent=51 // pred_region
            // Predicated region
            $region57: #{tpu_custom_call.1} parent=55 // pred_check
              _
            $region58: #{tpu_custom_call.1} parent=55 // pred_check_branch
              %1698 = sbr.rel target = $region60
            $region59: #{tpu_custom_call.1} parent=55 // pred_region
              // Predicated region
              $region72: #{tpu_custom_call.1} parent=59 // pred_check
                _
              $region73: #{tpu_custom_call.1} parent=59 // pred_check_branch
                %1839 = sbr.rel (0) target = $region75
              $region74: #{tpu_custom_call.1} parent=59 // pred_region
                loop: start=0, step=1, limit=1
                $region76: #{tpu_custom_call.1} parent=74 // loop_pre_header
                  _
                $region77: #{tpu_custom_call.1} parent=74 // loop_header
                  %s1841 = sphi 0, %s1845
                  %p1842 = scmp.ge.s32.totalorder %s1841, 1
                  %s1846 = sphi %s1678, %s1678
                  %s1847 = sphi %s1694, %s1694
                $region78: #{tpu_custom_call.1} parent=74 // loop_header_branch
                  %1844 = sbr.rel (%p1842) target = $region82
                $region79: #{tpu_custom_call.1} parent=74 // loop_body
                  _
                $region80: #{tpu_custom_call.1} parent=74 // loop_footer
                  %s1845 = sadd.s32 1, %s1841
                $region81: #{tpu_custom_call.1} parent=74 // loop_footer_branch
                  %1840 = sbr.rel target = $region77
                $region82: #{tpu_custom_call.1} parent=74 // loop_exit
                  _
                loop: start=0, step=1, limit=1
                $region83: #{tpu_custom_call.1} parent=74 // loop_pre_header
                  _
                $region84: #{tpu_custom_call.1} parent=74 // loop_header
                  %s1850 = sphi 0, %s1854
                  %p1851 = scmp.ge.s32.totalorder %s1850, 1
                  %s1855 = sphi %s1678, %s1678
                  %s1856 = sphi %s1694, %s1694
                $region85: #{tpu_custom_call.1} parent=74 // loop_header_branch
                  %1853 = sbr.rel (%p1851) target = $region89
                $region86: #{tpu_custom_call.1} parent=74 // loop_body
                  %v1857 = vld [vmem:[%s1855] sm:$0xf]
                  %1858 = vst [vmem:[%s1856] sm:$0xf] %v1857
                  %v1859 = vld [vmem:[%s1855 + $0x4] sm:$0xf]
                  %1860 = vst [vmem:[%s1856 + $0x4] sm:$0xf] %v1859
                  %v1861 = vld [vmem:[%s1855 + $0x8] sm:$0xf]
                  %1862 = vst [vmem:[%s1856 + $0x8] sm:$0xf] %v1861
                  %v1863 = vld [vmem:[%s1855 + $0xc] sm:$0xf]
                  %1864 = vst [vmem:[%s1856 + $0xc] sm:$0xf] %v1863
                  %v1865 = vld [vmem:[%s1855 + $0x10] sm:$0xf]
                  %1866 = vst [vmem:[%s1856 + $0x10] sm:$0xf] %v1865
                  %v1867 = vld [vmem:[%s1855 + $0x14] sm:$0xf]
                  %1868 = vst [vmem:[%s1856 + $0x14] sm:$0xf] %v1867
                  %v1869 = vld [vmem:[%s1855 + $0x18] sm:$0xf]
                  %1870 = vst [vmem:[%s1856 + $0x18] sm:$0xf] %v1869
                  %v1871 = vld [vmem:[%s1855 + $0x1c] sm:$0xf]
                  %1872 = vst [vmem:[%s1856 + $0x1c] sm:$0xf] %v1871
                  %v1873 = vld [vmem:[%s1855 + $0x20] sm:$0xf]
                  %1874 = vst [vmem:[%s1856 + $0x20] sm:$0xf] %v1873
                  %v1875 = vld [vmem:[%s1855 + $0x24] sm:$0xf]
                  %1876 = vst [vmem:[%s1856 + $0x24] sm:$0xf] %v1875
                  %v1877 = vld [vmem:[%s1855 + $0x28] sm:$0xf]
                  %1878 = vst [vmem:[%s1856 + $0x28] sm:$0xf] %v1877
                  %v1879 = vld [vmem:[%s1855 + $0x2c] sm:$0xf]
                  %1880 = vst [vmem:[%s1856 + $0x2c] sm:$0xf] %v1879
                  %v1881 = vld [vmem:[%s1855 + $0x30] sm:$0xf]
                  %1882 = vst [vmem:[%s1856 + $0x30] sm:$0xf] %v1881
                  %v1883 = vld [vmem:[%s1855 + $0x34] sm:$0xf]
                  %1884 = vst [vmem:[%s1856 + $0x34] sm:$0xf] %v1883
                  %v1885 = vld [vmem:[%s1855 + $0x38] sm:$0xf]
                  %1886 = vst [vmem:[%s1856 + $0x38] sm:$0xf] %v1885
                  %v1887 = vld [vmem:[%s1855 + $0x3c] sm:$0xf]
                  %1888 = vst [vmem:[%s1856 + $0x3c] sm:$0xf] %v1887
                  %v1889 = vld [vmem:[%s1855 + $0x40] sm:$0xf]
                  %1890 = vst [vmem:[%s1856 + $0x80] sm:$0xf] %v1889
                  %v1891 = vld [vmem:[%s1855 + $0x44] sm:$0xf]
                  %1892 = vst [vmem:[%s1856 + $0x84] sm:$0xf] %v1891
                  %v1893 = vld [vmem:[%s1855 + $0x48] sm:$0xf]
                  %1894 = vst [vmem:[%s1856 + $0x88] sm:$0xf] %v1893
                  %v1895 = vld [vmem:[%s1855 + $0x4c] sm:$0xf]
                  %1896 = vst [vmem:[%s1856 + $0x8c] sm:$0xf] %v1895
                  %v1897 = vld [vmem:[%s1855 + $0x50] sm:$0xf]
                  %1898 = vst [vmem:[%s1856 + $0x90] sm:$0xf] %v1897
                  %v1899 = vld [vmem:[%s1855 + $0x54] sm:$0xf]
                  %1900 = vst [vmem:[%s1856 + $0x94] sm:$0xf] %v1899
                  %v1901 = vld [vmem:[%s1855 + $0x58] sm:$0xf]
                  %1902 = vst [vmem:[%s1856 + $0x98] sm:$0xf] %v1901
                  %v1903 = vld [vmem:[%s1855 + $0x5c] sm:$0xf]
                  %1904 = vst [vmem:[%s1856 + $0x9c] sm:$0xf] %v1903
                  %v1905 = vld [vmem:[%s1855 + $0x60] sm:$0xf]
                  %1906 = vst [vmem:[%s1856 + $0xa0] sm:$0xf] %v1905
                  %v1907 = vld [vmem:[%s1855 + $0x64] sm:$0xf]
                  %1908 = vst [vmem:[%s1856 + $0xa4] sm:$0xf] %v1907
                  %v1909 = vld [vmem:[%s1855 + $0x68] sm:$0xf]
                  %1910 = vst [vmem:[%s1856 + $0xa8] sm:$0xf] %v1909
                  %v1911 = vld [vmem:[%s1855 + $0x6c] sm:$0xf]
                  %1912 = vst [vmem:[%s1856 + $0xac] sm:$0xf] %v1911
                  %v1913 = vld [vmem:[%s1855 + $0x70] sm:$0xf]
                  %1914 = vst [vmem:[%s1856 + $0xb0] sm:$0xf] %v1913
                  %v1915 = vld [vmem:[%s1855 + $0x74] sm:$0xf]
                  %1916 = vst [vmem:[%s1856 + $0xb4] sm:$0xf] %v1915
                  %v1917 = vld [vmem:[%s1855 + $0x78] sm:$0xf]
                  %1918 = vst [vmem:[%s1856 + $0xb8] sm:$0xf] %v1917
                  %v1919 = vld [vmem:[%s1855 + $0x7c] sm:$0xf]
                  %1920 = vst [vmem:[%s1856 + $0xbc] sm:$0xf] %v1919
                  %v1921 = vld [vmem:[%s1855 + $0x80] sm:$0xf]
                  %1922 = vst [vmem:[%s1856 + $0x100] sm:$0xf] %v1921
                  %v1923 = vld [vmem:[%s1855 + $0x84] sm:$0xf]
                  %1924 = vst [vmem:[%s1856 + $0x104] sm:$0xf] %v1923
                  %v1925 = vld [vmem:[%s1855 + $0x88] sm:$0xf]
                  %1926 = vst [vmem:[%s1856 + $0x108] sm:$0xf] %v1925
                  %v1927 = vld [vmem:[%s1855 + $0x8c] sm:$0xf]
                  %1928 = vst [vmem:[%s1856 + $0x10c] sm:$0xf] %v1927
                  %v1929 = vld [vmem:[%s1855 + $0x90] sm:$0xf]
                  %1930 = vst [vmem:[%s1856 + $0x110] sm:$0xf] %v1929
                  %v1931 = vld [vmem:[%s1855 + $0x94] sm:$0xf]
                  %1932 = vst [vmem:[%s1856 + $0x114] sm:$0xf] %v1931
                  %v1933 = vld [vmem:[%s1855 + $0x98] sm:$0xf]
                  %1934 = vst [vmem:[%s1856 + $0x118] sm:$0xf] %v1933
                  %v1935 = vld [vmem:[%s1855 + $0x9c] sm:$0xf]
                  %1936 = vst [vmem:[%s1856 + $0x11c] sm:$0xf] %v1935
                  %v1937 = vld [vmem:[%s1855 + $0xa0] sm:$0xf]
                  %1938 = vst [vmem:[%s1856 + $0x120] sm:$0xf] %v1937
                  %v1939 = vld [vmem:[%s1855 + $0xa4] sm:$0xf]
                  %1940 = vst [vmem:[%s1856 + $0x124] sm:$0xf] %v1939
                  %v1941 = vld [vmem:[%s1855 + $0xa8] sm:$0xf]
                  %1942 = vst [vmem:[%s1856 + $0x128] sm:$0xf] %v1941
                  %v1943 = vld [vmem:[%s1855 + $0xac] sm:$0xf]
                  %1944 = vst [vmem:[%s1856 + $0x12c] sm:$0xf] %v1943
                  %v1945 = vld [vmem:[%s1855 + $0xb0] sm:$0xf]
                  %1946 = vst [vmem:[%s1856 + $0x130] sm:$0xf] %v1945
                  %v1947 = vld [vmem:[%s1855 + $0xb4] sm:$0xf]
                  %1948 = vst [vmem:[%s1856 + $0x134] sm:$0xf] %v1947
                  %v1949 = vld [vmem:[%s1855 + $0xb8] sm:$0xf]
                  %1950 = vst [vmem:[%s1856 + $0x138] sm:$0xf] %v1949
                  %v1951 = vld [vmem:[%s1855 + $0xbc] sm:$0xf]
                  %1952 = vst [vmem:[%s1856 + $0x13c] sm:$0xf] %v1951
                  %v1953 = vld [vmem:[%s1855 + $0xc0] sm:$0xf]
                  %1954 = vst [vmem:[%s1856 + $0x180] sm:$0xf] %v1953
                  %v1955 = vld [vmem:[%s1855 + $0xc4] sm:$0xf]
                  %1956 = vst [vmem:[%s1856 + $0x184] sm:$0xf] %v1955
                  %v1957 = vld [vmem:[%s1855 + $0xc8] sm:$0xf]
                  %1958 = vst [vmem:[%s1856 + $0x188] sm:$0xf] %v1957
                  %v1959 = vld [vmem:[%s1855 + $0xcc] sm:$0xf]
                  %1960 = vst [vmem:[%s1856 + $0x18c] sm:$0xf] %v1959
                  %v1961 = vld [vmem:[%s1855 + $0xd0] sm:$0xf]
                  %1962 = vst [vmem:[%s1856 + $0x190] sm:$0xf] %v1961
                  %v1963 = vld [vmem:[%s1855 + $0xd4] sm:$0xf]
                  %1964 = vst [vmem:[%s1856 + $0x194] sm:$0xf] %v1963
                  %v1965 = vld [vmem:[%s1855 + $0xd8] sm:$0xf]
                  %1966 = vst [vmem:[%s1856 + $0x198] sm:$0xf] %v1965
                  %v1967 = vld [vmem:[%s1855 + $0xdc] sm:$0xf]
                  %1968 = vst [vmem:[%s1856 + $0x19c] sm:$0xf] %v1967
                  %v1969 = vld [vmem:[%s1855 + $0xe0] sm:$0xf]
                  %1970 = vst [vmem:[%s1856 + $0x1a0] sm:$0xf] %v1969
                  %v1971 = vld [vmem:[%s1855 + $0xe4] sm:$0xf]
                  %1972 = vst [vmem:[%s1856 + $0x1a4] sm:$0xf] %v1971
                  %v1973 = vld [vmem:[%s1855 + $0xe8] sm:$0xf]
                  %1974 = vst [vmem:[%s1856 + $0x1a8] sm:$0xf] %v1973
                  %v1975 = vld [vmem:[%s1855 + $0xec] sm:$0xf]
                  %1976 = vst [vmem:[%s1856 + $0x1ac] sm:$0xf] %v1975
                  %v1977 = vld [vmem:[%s1855 + $0xf0] sm:$0xf]
                  %1978 = vst [vmem:[%s1856 + $0x1b0] sm:$0xf] %v1977
                  %v1979 = vld [vmem:[%s1855 + $0xf4] sm:$0xf]
                  %1980 = vst [vmem:[%s1856 + $0x1b4] sm:$0xf] %v1979
                  %v1981 = vld [vmem:[%s1855 + $0xf8] sm:$0xf]
                  %1982 = vst [vmem:[%s1856 + $0x1b8] sm:$0xf] %v1981
                  %v1983 = vld [vmem:[%s1855 + $0xfc] sm:$0xf]
                  %1984 = vst [vmem:[%s1856 + $0x1bc] sm:$0xf] %v1983
                $region87: #{tpu_custom_call.1} parent=74 // loop_footer
                  %s1854 = sadd.s32 1, %s1850
                $region88: #{tpu_custom_call.1} parent=74 // loop_footer_branch
                  %1849 = sbr.rel target = $region84
                $region89: #{tpu_custom_call.1} parent=74 // loop_exit
                  _
              $region75: #{tpu_custom_call.1} parent=59 // pred_fallthru
                _
            $region60: #{tpu_custom_call.1} parent=55 // pred_fallthru
              _
            // Predicated region
            $region61: #{tpu_custom_call.1} parent=55 // pred_check
              _
            $region62: #{tpu_custom_call.1} parent=55 // pred_check_branch
              %1700 = sbr.rel (0) target = $region64
            $region63: #{tpu_custom_call.1} parent=55 // pred_region
              loop: start=0, step=1, limit=1
              $region65: #{tpu_custom_call.1} parent=63 // loop_pre_header
                _
              $region66: #{tpu_custom_call.1} parent=63 // loop_header
                %s1703 = sphi 0, %s1707
                %p1704 = scmp.ge.s32.totalorder %s1703, 1
                %s1708 = sphi %s1678, %s1678
                %s1709 = sphi %s1694, %s1694
              $region67: #{tpu_custom_call.1} parent=63 // loop_header_branch
                %1706 = sbr.rel (%p1704) target = $region71
              $region68: #{tpu_custom_call.1} parent=63 // loop_body
                %v1710 = vld [vmem:[%s1708] sm:$0xf]
                %1711 = vst [vmem:[%s1709] sm:$0xf] %v1710
                %v1712 = vld [vmem:[%s1708 + $0x4] sm:$0xf]
                %1713 = vst [vmem:[%s1709 + $0x4] sm:$0xf] %v1712
                %v1714 = vld [vmem:[%s1708 + $0x8] sm:$0xf]
                %1715 = vst [vmem:[%s1709 + $0x8] sm:$0xf] %v1714
                %v1716 = vld [vmem:[%s1708 + $0xc] sm:$0xf]
                %1717 = vst [vmem:[%s1709 + $0xc] sm:$0xf] %v1716
                %v1718 = vld [vmem:[%s1708 + $0x10] sm:$0xf]
                %1719 = vst [vmem:[%s1709 + $0x10] sm:$0xf] %v1718
                %v1720 = vld [vmem:[%s1708 + $0x14] sm:$0xf]
                %1721 = vst [vmem:[%s1709 + $0x14] sm:$0xf] %v1720
                %v1722 = vld [vmem:[%s1708 + $0x18] sm:$0xf]
                %1723 = vst [vmem:[%s1709 + $0x18] sm:$0xf] %v1722
                %v1724 = vld [vmem:[%s1708 + $0x1c] sm:$0xf]
                %1725 = vst [vmem:[%s1709 + $0x1c] sm:$0xf] %v1724
                %v1726 = vld [vmem:[%s1708 + $0x20] sm:$0xf]
                %1727 = vst [vmem:[%s1709 + $0x20] sm:$0xf] %v1726
                %v1728 = vld [vmem:[%s1708 + $0x24] sm:$0xf]
                %1729 = vst [vmem:[%s1709 + $0x24] sm:$0xf] %v1728
                %v1730 = vld [vmem:[%s1708 + $0x28] sm:$0xf]
                %1731 = vst [vmem:[%s1709 + $0x28] sm:$0xf] %v1730
                %v1732 = vld [vmem:[%s1708 + $0x2c] sm:$0xf]
                %1733 = vst [vmem:[%s1709 + $0x2c] sm:$0xf] %v1732
                %v1734 = vld [vmem:[%s1708 + $0x30] sm:$0xf]
                %1735 = vst [vmem:[%s1709 + $0x30] sm:$0xf] %v1734
                %v1736 = vld [vmem:[%s1708 + $0x34] sm:$0xf]
                %1737 = vst [vmem:[%s1709 + $0x34] sm:$0xf] %v1736
                %v1738 = vld [vmem:[%s1708 + $0x38] sm:$0xf]
                %1739 = vst [vmem:[%s1709 + $0x38] sm:$0xf] %v1738
                %v1740 = vld [vmem:[%s1708 + $0x3c] sm:$0xf]
                %1741 = vst [vmem:[%s1709 + $0x3c] sm:$0xf] %v1740
                %v1742 = vld [vmem:[%s1708 + $0x40] sm:$0xf]
                %1743 = vst [vmem:[%s1709 + $0x80] sm:$0xf] %v1742
                %v1744 = vld [vmem:[%s1708 + $0x44] sm:$0xf]
                %1745 = vst [vmem:[%s1709 + $0x84] sm:$0xf] %v1744
                %v1746 = vld [vmem:[%s1708 + $0x48] sm:$0xf]
                %1747 = vst [vmem:[%s1709 + $0x88] sm:$0xf] %v1746
                %v1748 = vld [vmem:[%s1708 + $0x4c] sm:$0xf]
                %1749 = vst [vmem:[%s1709 + $0x8c] sm:$0xf] %v1748
                %v1750 = vld [vmem:[%s1708 + $0x50] sm:$0xf]
                %1751 = vst [vmem:[%s1709 + $0x90] sm:$0xf] %v1750
                %v1752 = vld [vmem:[%s1708 + $0x54] sm:$0xf]
                %1753 = vst [vmem:[%s1709 + $0x94] sm:$0xf] %v1752
                %v1754 = vld [vmem:[%s1708 + $0x58] sm:$0xf]
                %1755 = vst [vmem:[%s1709 + $0x98] sm:$0xf] %v1754
                %v1756 = vld [vmem:[%s1708 + $0x5c] sm:$0xf]
                %1757 = vst [vmem:[%s1709 + $0x9c] sm:$0xf] %v1756
                %v1758 = vld [vmem:[%s1708 + $0x60] sm:$0xf]
                %1759 = vst [vmem:[%s1709 + $0xa0] sm:$0xf] %v1758
                %v1760 = vld [vmem:[%s1708 + $0x64] sm:$0xf]
                %1761 = vst [vmem:[%s1709 + $0xa4] sm:$0xf] %v1760
                %v1762 = vld [vmem:[%s1708 + $0x68] sm:$0xf]
                %1763 = vst [vmem:[%s1709 + $0xa8] sm:$0xf] %v1762
                %v1764 = vld [vmem:[%s1708 + $0x6c] sm:$0xf]
                %1765 = vst [vmem:[%s1709 + $0xac] sm:$0xf] %v1764
                %v1766 = vld [vmem:[%s1708 + $0x70] sm:$0xf]
                %1767 = vst [vmem:[%s1709 + $0xb0] sm:$0xf] %v1766
                %v1768 = vld [vmem:[%s1708 + $0x74] sm:$0xf]
                %1769 = vst [vmem:[%s1709 + $0xb4] sm:$0xf] %v1768
                %v1770 = vld [vmem:[%s1708 + $0x78] sm:$0xf]
                %1771 = vst [vmem:[%s1709 + $0xb8] sm:$0xf] %v1770
                %v1772 = vld [vmem:[%s1708 + $0x7c] sm:$0xf]
                %1773 = vst [vmem:[%s1709 + $0xbc] sm:$0xf] %v1772
                %v1774 = vld [vmem:[%s1708 + $0x80] sm:$0xf]
                %1775 = vst [vmem:[%s1709 + $0x100] sm:$0xf] %v1774
                %v1776 = vld [vmem:[%s1708 + $0x84] sm:$0xf]
                %1777 = vst [vmem:[%s1709 + $0x104] sm:$0xf] %v1776
                %v1778 = vld [vmem:[%s1708 + $0x88] sm:$0xf]
                %1779 = vst [vmem:[%s1709 + $0x108] sm:$0xf] %v1778
                %v1780 = vld [vmem:[%s1708 + $0x8c] sm:$0xf]
                %1781 = vst [vmem:[%s1709 + $0x10c] sm:$0xf] %v1780
                %v1782 = vld [vmem:[%s1708 + $0x90] sm:$0xf]
                %1783 = vst [vmem:[%s1709 + $0x110] sm:$0xf] %v1782
                %v1784 = vld [vmem:[%s1708 + $0x94] sm:$0xf]
                %1785 = vst [vmem:[%s1709 + $0x114] sm:$0xf] %v1784
                %v1786 = vld [vmem:[%s1708 + $0x98] sm:$0xf]
                %1787 = vst [vmem:[%s1709 + $0x118] sm:$0xf] %v1786
                %v1788 = vld [vmem:[%s1708 + $0x9c] sm:$0xf]
                %1789 = vst [vmem:[%s1709 + $0x11c] sm:$0xf] %v1788
                %v1790 = vld [vmem:[%s1708 + $0xa0] sm:$0xf]
                %1791 = vst [vmem:[%s1709 + $0x120] sm:$0xf] %v1790
                %v1792 = vld [vmem:[%s1708 + $0xa4] sm:$0xf]
                %1793 = vst [vmem:[%s1709 + $0x124] sm:$0xf] %v1792
                %v1794 = vld [vmem:[%s1708 + $0xa8] sm:$0xf]
                %1795 = vst [vmem:[%s1709 + $0x128] sm:$0xf] %v1794
                %v1796 = vld [vmem:[%s1708 + $0xac] sm:$0xf]
                %1797 = vst [vmem:[%s1709 + $0x12c] sm:$0xf] %v1796
                %v1798 = vld [vmem:[%s1708 + $0xb0] sm:$0xf]
                %1799 = vst [vmem:[%s1709 + $0x130] sm:$0xf] %v1798
                %v1800 = vld [vmem:[%s1708 + $0xb4] sm:$0xf]
                %1801 = vst [vmem:[%s1709 + $0x134] sm:$0xf] %v1800
                %v1802 = vld [vmem:[%s1708 + $0xb8] sm:$0xf]
                %1803 = vst [vmem:[%s1709 + $0x138] sm:$0xf] %v1802
                %v1804 = vld [vmem:[%s1708 + $0xbc] sm:$0xf]
                %1805 = vst [vmem:[%s1709 + $0x13c] sm:$0xf] %v1804
                %v1806 = vld [vmem:[%s1708 + $0xc0] sm:$0xf]
                %1807 = vst [vmem:[%s1709 + $0x180] sm:$0xf] %v1806
                %v1808 = vld [vmem:[%s1708 + $0xc4] sm:$0xf]
                %1809 = vst [vmem:[%s1709 + $0x184] sm:$0xf] %v1808
                %v1810 = vld [vmem:[%s1708 + $0xc8] sm:$0xf]
                %1811 = vst [vmem:[%s1709 + $0x188] sm:$0xf] %v1810
                %v1812 = vld [vmem:[%s1708 + $0xcc] sm:$0xf]
                %1813 = vst [vmem:[%s1709 + $0x18c] sm:$0xf] %v1812
                %v1814 = vld [vmem:[%s1708 + $0xd0] sm:$0xf]
                %1815 = vst [vmem:[%s1709 + $0x190] sm:$0xf] %v1814
                %v1816 = vld [vmem:[%s1708 + $0xd4] sm:$0xf]
                %1817 = vst [vmem:[%s1709 + $0x194] sm:$0xf] %v1816
                %v1818 = vld [vmem:[%s1708 + $0xd8] sm:$0xf]
                %1819 = vst [vmem:[%s1709 + $0x198] sm:$0xf] %v1818
                %v1820 = vld [vmem:[%s1708 + $0xdc] sm:$0xf]
                %1821 = vst [vmem:[%s1709 + $0x19c] sm:$0xf] %v1820
                %v1822 = vld [vmem:[%s1708 + $0xe0] sm:$0xf]
                %1823 = vst [vmem:[%s1709 + $0x1a0] sm:$0xf] %v1822
                %v1824 = vld [vmem:[%s1708 + $0xe4] sm:$0xf]
                %1825 = vst [vmem:[%s1709 + $0x1a4] sm:$0xf] %v1824
                %v1826 = vld [vmem:[%s1708 + $0xe8] sm:$0xf]
                %1827 = vst [vmem:[%s1709 + $0x1a8] sm:$0xf] %v1826
                %v1828 = vld [vmem:[%s1708 + $0xec] sm:$0xf]
                %1829 = vst [vmem:[%s1709 + $0x1ac] sm:$0xf] %v1828
                %v1830 = vld [vmem:[%s1708 + $0xf0] sm:$0xf]
                %1831 = vst [vmem:[%s1709 + $0x1b0] sm:$0xf] %v1830
                %v1832 = vld [vmem:[%s1708 + $0xf4] sm:$0xf]
                %1833 = vst [vmem:[%s1709 + $0x1b4] sm:$0xf] %v1832
                %v1834 = vld [vmem:[%s1708 + $0xf8] sm:$0xf]
                %1835 = vst [vmem:[%s1709 + $0x1b8] sm:$0xf] %v1834
                %v1836 = vld [vmem:[%s1708 + $0xfc] sm:$0xf]
                %1837 = vst [vmem:[%s1709 + $0x1bc] sm:$0xf] %v1836
              $region69: #{tpu_custom_call.1} parent=63 // loop_footer
                %s1707 = sadd.s32 1, %s1703
              $region70: #{tpu_custom_call.1} parent=63 // loop_footer_branch
                %1702 = sbr.rel target = $region66
              $region71: #{tpu_custom_call.1} parent=63 // loop_exit
                _
            $region64: #{tpu_custom_call.1} parent=55 // pred_fallthru
              _
          $region56: #{tpu_custom_call.1} parent=51 // pred_fallthru
            _
          %1985 = vnop
        $region52: #{tpu_custom_call.1} parent=39 // pred_fallthru
          _
        // Predicated region
        $region90: #{tpu_custom_call.1} parent=39 // pred_check
          %p1986 = pneg %p205
        $region91: #{tpu_custom_call.1} parent=39 // pred_check_branch
          %1988 = sbr.rel (%p1986) target = $region93
        $region92: #{tpu_custom_call.1} parent=39 // pred_region
          %s1989 = smul.u32 16, %s28
          %s1990 = smul.addr %s27, 128
          %s1991 = sadd.s32 %s1989, %s1990
          %s1992 = smul.addr %s1991, 4
          %s1993 = scalar_lea.vmem %s6, %s1992
          // Predicated region
          $region94: #{tpu_custom_call.1} parent=92 // pred_check
            _
          $region95: #{tpu_custom_call.1} parent=92 // pred_check_branch
            %1995 = sbr.rel (0) target = $region97
          $region96: #{tpu_custom_call.1} parent=92 // pred_region
            // Predicated region
            $region98: #{tpu_custom_call.1} parent=96 // pred_check
              _
            $region99: #{tpu_custom_call.1} parent=96 // pred_check_branch
              %1997 = sbr.rel target = $region101
            $region100: #{tpu_custom_call.1} parent=96 // pred_region
              // Predicated region
              $region113: #{tpu_custom_call.1} parent=100 // pred_check
                _
              $region114: #{tpu_custom_call.1} parent=100 // pred_check_branch
                %2138 = sbr.rel (0) target = $region116
              $region115: #{tpu_custom_call.1} parent=100 // pred_region
                loop: start=0, step=1, limit=1
                $region117: #{tpu_custom_call.1} parent=115 // loop_pre_header
                  _
                $region118: #{tpu_custom_call.1} parent=115 // loop_header
                  %s2140 = sphi 0, %s2144
                  %p2141 = scmp.ge.s32.totalorder %s2140, 1
                  %s2145 = sphi %s1682, %s1682
                  %s2146 = sphi %s1993, %s1993
                $region119: #{tpu_custom_call.1} parent=115 // loop_header_branch
                  %2143 = sbr.rel (%p2141) target = $region123
                $region120: #{tpu_custom_call.1} parent=115 // loop_body
                  _
                $region121: #{tpu_custom_call.1} parent=115 // loop_footer
                  %s2144 = sadd.s32 1, %s2140
                $region122: #{tpu_custom_call.1} parent=115 // loop_footer_branch
                  %2139 = sbr.rel target = $region118
                $region123: #{tpu_custom_call.1} parent=115 // loop_exit
                  _
                loop: start=0, step=1, limit=1
                $region124: #{tpu_custom_call.1} parent=115 // loop_pre_header
                  _
                $region125: #{tpu_custom_call.1} parent=115 // loop_header
                  %s2149 = sphi 0, %s2153
                  %p2150 = scmp.ge.s32.totalorder %s2149, 1
                  %s2154 = sphi %s1682, %s1682
                  %s2155 = sphi %s1993, %s1993
                $region126: #{tpu_custom_call.1} parent=115 // loop_header_branch
                  %2152 = sbr.rel (%p2150) target = $region130
                $region127: #{tpu_custom_call.1} parent=115 // loop_body
                  %v2156 = vld [vmem:[%s2154] sm:$0xf]
                  %2157 = vst [vmem:[%s2155] sm:$0xf] %v2156
                  %v2158 = vld [vmem:[%s2154 + $0x4] sm:$0xf]
                  %2159 = vst [vmem:[%s2155 + $0x4] sm:$0xf] %v2158
                  %v2160 = vld [vmem:[%s2154 + $0x8] sm:$0xf]
                  %2161 = vst [vmem:[%s2155 + $0x8] sm:$0xf] %v2160
                  %v2162 = vld [vmem:[%s2154 + $0xc] sm:$0xf]
                  %2163 = vst [vmem:[%s2155 + $0xc] sm:$0xf] %v2162
                  %v2164 = vld [vmem:[%s2154 + $0x10] sm:$0xf]
                  %2165 = vst [vmem:[%s2155 + $0x10] sm:$0xf] %v2164
                  %v2166 = vld [vmem:[%s2154 + $0x14] sm:$0xf]
                  %2167 = vst [vmem:[%s2155 + $0x14] sm:$0xf] %v2166
                  %v2168 = vld [vmem:[%s2154 + $0x18] sm:$0xf]
                  %2169 = vst [vmem:[%s2155 + $0x18] sm:$0xf] %v2168
                  %v2170 = vld [vmem:[%s2154 + $0x1c] sm:$0xf]
                  %2171 = vst [vmem:[%s2155 + $0x1c] sm:$0xf] %v2170
                  %v2172 = vld [vmem:[%s2154 + $0x20] sm:$0xf]
                  %2173 = vst [vmem:[%s2155 + $0x20] sm:$0xf] %v2172
                  %v2174 = vld [vmem:[%s2154 + $0x24] sm:$0xf]
                  %2175 = vst [vmem:[%s2155 + $0x24] sm:$0xf] %v2174
                  %v2176 = vld [vmem:[%s2154 + $0x28] sm:$0xf]
                  %2177 = vst [vmem:[%s2155 + $0x28] sm:$0xf] %v2176
                  %v2178 = vld [vmem:[%s2154 + $0x2c] sm:$0xf]
                  %2179 = vst [vmem:[%s2155 + $0x2c] sm:$0xf] %v2178
                  %v2180 = vld [vmem:[%s2154 + $0x30] sm:$0xf]
                  %2181 = vst [vmem:[%s2155 + $0x30] sm:$0xf] %v2180
                  %v2182 = vld [vmem:[%s2154 + $0x34] sm:$0xf]
                  %2183 = vst [vmem:[%s2155 + $0x34] sm:$0xf] %v2182
                  %v2184 = vld [vmem:[%s2154 + $0x38] sm:$0xf]
                  %2185 = vst [vmem:[%s2155 + $0x38] sm:$0xf] %v2184
                  %v2186 = vld [vmem:[%s2154 + $0x3c] sm:$0xf]
                  %2187 = vst [vmem:[%s2155 + $0x3c] sm:$0xf] %v2186
                  %v2188 = vld [vmem:[%s2154 + $0x40] sm:$0xf]
                  %2189 = vst [vmem:[%s2155 + $0x80] sm:$0xf] %v2188
                  %v2190 = vld [vmem:[%s2154 + $0x44] sm:$0xf]
                  %2191 = vst [vmem:[%s2155 + $0x84] sm:$0xf] %v2190
                  %v2192 = vld [vmem:[%s2154 + $0x48] sm:$0xf]
                  %2193 = vst [vmem:[%s2155 + $0x88] sm:$0xf] %v2192
                  %v2194 = vld [vmem:[%s2154 + $0x4c] sm:$0xf]
                  %2195 = vst [vmem:[%s2155 + $0x8c] sm:$0xf] %v2194
                  %v2196 = vld [vmem:[%s2154 + $0x50] sm:$0xf]
                  %2197 = vst [vmem:[%s2155 + $0x90] sm:$0xf] %v2196
                  %v2198 = vld [vmem:[%s2154 + $0x54] sm:$0xf]
                  %2199 = vst [vmem:[%s2155 + $0x94] sm:$0xf] %v2198
                  %v2200 = vld [vmem:[%s2154 + $0x58] sm:$0xf]
                  %2201 = vst [vmem:[%s2155 + $0x98] sm:$0xf] %v2200
                  %v2202 = vld [vmem:[%s2154 + $0x5c] sm:$0xf]
                  %2203 = vst [vmem:[%s2155 + $0x9c] sm:$0xf] %v2202
                  %v2204 = vld [vmem:[%s2154 + $0x60] sm:$0xf]
                  %2205 = vst [vmem:[%s2155 + $0xa0] sm:$0xf] %v2204
                  %v2206 = vld [vmem:[%s2154 + $0x64] sm:$0xf]
                  %2207 = vst [vmem:[%s2155 + $0xa4] sm:$0xf] %v2206
                  %v2208 = vld [vmem:[%s2154 + $0x68] sm:$0xf]
                  %2209 = vst [vmem:[%s2155 + $0xa8] sm:$0xf] %v2208
                  %v2210 = vld [vmem:[%s2154 + $0x6c] sm:$0xf]
                  %2211 = vst [vmem:[%s2155 + $0xac] sm:$0xf] %v2210
                  %v2212 = vld [vmem:[%s2154 + $0x70] sm:$0xf]
                  %2213 = vst [vmem:[%s2155 + $0xb0] sm:$0xf] %v2212
                  %v2214 = vld [vmem:[%s2154 + $0x74] sm:$0xf]
                  %2215 = vst [vmem:[%s2155 + $0xb4] sm:$0xf] %v2214
                  %v2216 = vld [vmem:[%s2154 + $0x78] sm:$0xf]
                  %2217 = vst [vmem:[%s2155 + $0xb8] sm:$0xf] %v2216
                  %v2218 = vld [vmem:[%s2154 + $0x7c] sm:$0xf]
                  %2219 = vst [vmem:[%s2155 + $0xbc] sm:$0xf] %v2218
                  %v2220 = vld [vmem:[%s2154 + $0x80] sm:$0xf]
                  %2221 = vst [vmem:[%s2155 + $0x100] sm:$0xf] %v2220
                  %v2222 = vld [vmem:[%s2154 + $0x84] sm:$0xf]
                  %2223 = vst [vmem:[%s2155 + $0x104] sm:$0xf] %v2222
                  %v2224 = vld [vmem:[%s2154 + $0x88] sm:$0xf]
                  %2225 = vst [vmem:[%s2155 + $0x108] sm:$0xf] %v2224
                  %v2226 = vld [vmem:[%s2154 + $0x8c] sm:$0xf]
                  %2227 = vst [vmem:[%s2155 + $0x10c] sm:$0xf] %v2226
                  %v2228 = vld [vmem:[%s2154 + $0x90] sm:$0xf]
                  %2229 = vst [vmem:[%s2155 + $0x110] sm:$0xf] %v2228
                  %v2230 = vld [vmem:[%s2154 + $0x94] sm:$0xf]
                  %2231 = vst [vmem:[%s2155 + $0x114] sm:$0xf] %v2230
                  %v2232 = vld [vmem:[%s2154 + $0x98] sm:$0xf]
                  %2233 = vst [vmem:[%s2155 + $0x118] sm:$0xf] %v2232
                  %v2234 = vld [vmem:[%s2154 + $0x9c] sm:$0xf]
                  %2235 = vst [vmem:[%s2155 + $0x11c] sm:$0xf] %v2234
                  %v2236 = vld [vmem:[%s2154 + $0xa0] sm:$0xf]
                  %2237 = vst [vmem:[%s2155 + $0x120] sm:$0xf] %v2236
                  %v2238 = vld [vmem:[%s2154 + $0xa4] sm:$0xf]
                  %2239 = vst [vmem:[%s2155 + $0x124] sm:$0xf] %v2238
                  %v2240 = vld [vmem:[%s2154 + $0xa8] sm:$0xf]
                  %2241 = vst [vmem:[%s2155 + $0x128] sm:$0xf] %v2240
                  %v2242 = vld [vmem:[%s2154 + $0xac] sm:$0xf]
                  %2243 = vst [vmem:[%s2155 + $0x12c] sm:$0xf] %v2242
                  %v2244 = vld [vmem:[%s2154 + $0xb0] sm:$0xf]
                  %2245 = vst [vmem:[%s2155 + $0x130] sm:$0xf] %v2244
                  %v2246 = vld [vmem:[%s2154 + $0xb4] sm:$0xf]
                  %2247 = vst [vmem:[%s2155 + $0x134] sm:$0xf] %v2246
                  %v2248 = vld [vmem:[%s2154 + $0xb8] sm:$0xf]
                  %2249 = vst [vmem:[%s2155 + $0x138] sm:$0xf] %v2248
                  %v2250 = vld [vmem:[%s2154 + $0xbc] sm:$0xf]
                  %2251 = vst [vmem:[%s2155 + $0x13c] sm:$0xf] %v2250
                  %v2252 = vld [vmem:[%s2154 + $0xc0] sm:$0xf]
                  %2253 = vst [vmem:[%s2155 + $0x180] sm:$0xf] %v2252
                  %v2254 = vld [vmem:[%s2154 + $0xc4] sm:$0xf]
                  %2255 = vst [vmem:[%s2155 + $0x184] sm:$0xf] %v2254
                  %v2256 = vld [vmem:[%s2154 + $0xc8] sm:$0xf]
                  %2257 = vst [vmem:[%s2155 + $0x188] sm:$0xf] %v2256
                  %v2258 = vld [vmem:[%s2154 + $0xcc] sm:$0xf]
                  %2259 = vst [vmem:[%s2155 + $0x18c] sm:$0xf] %v2258
                  %v2260 = vld [vmem:[%s2154 + $0xd0] sm:$0xf]
                  %2261 = vst [vmem:[%s2155 + $0x190] sm:$0xf] %v2260
                  %v2262 = vld [vmem:[%s2154 + $0xd4] sm:$0xf]
                  %2263 = vst [vmem:[%s2155 + $0x194] sm:$0xf] %v2262
                  %v2264 = vld [vmem:[%s2154 + $0xd8] sm:$0xf]
                  %2265 = vst [vmem:[%s2155 + $0x198] sm:$0xf] %v2264
                  %v2266 = vld [vmem:[%s2154 + $0xdc] sm:$0xf]
                  %2267 = vst [vmem:[%s2155 + $0x19c] sm:$0xf] %v2266
                  %v2268 = vld [vmem:[%s2154 + $0xe0] sm:$0xf]
                  %2269 = vst [vmem:[%s2155 + $0x1a0] sm:$0xf] %v2268
                  %v2270 = vld [vmem:[%s2154 + $0xe4] sm:$0xf]
                  %2271 = vst [vmem:[%s2155 + $0x1a4] sm:$0xf] %v2270
                  %v2272 = vld [vmem:[%s2154 + $0xe8] sm:$0xf]
                  %2273 = vst [vmem:[%s2155 + $0x1a8] sm:$0xf] %v2272
                  %v2274 = vld [vmem:[%s2154 + $0xec] sm:$0xf]
                  %2275 = vst [vmem:[%s2155 + $0x1ac] sm:$0xf] %v2274
                  %v2276 = vld [vmem:[%s2154 + $0xf0] sm:$0xf]
                  %2277 = vst [vmem:[%s2155 + $0x1b0] sm:$0xf] %v2276
                  %v2278 = vld [vmem:[%s2154 + $0xf4] sm:$0xf]
                  %2279 = vst [vmem:[%s2155 + $0x1b4] sm:$0xf] %v2278
                  %v2280 = vld [vmem:[%s2154 + $0xf8] sm:$0xf]
                  %2281 = vst [vmem:[%s2155 + $0x1b8] sm:$0xf] %v2280
                  %v2282 = vld [vmem:[%s2154 + $0xfc] sm:$0xf]
                  %2283 = vst [vmem:[%s2155 + $0x1bc] sm:$0xf] %v2282
                $region128: #{tpu_custom_call.1} parent=115 // loop_footer
                  %s2153 = sadd.s32 1, %s2149
                $region129: #{tpu_custom_call.1} parent=115 // loop_footer_branch
                  %2148 = sbr.rel target = $region125
                $region130: #{tpu_custom_call.1} parent=115 // loop_exit
                  _
              $region116: #{tpu_custom_call.1} parent=100 // pred_fallthru
                _
            $region101: #{tpu_custom_call.1} parent=96 // pred_fallthru
              _
            // Predicated region
            $region102: #{tpu_custom_call.1} parent=96 // pred_check
              _
            $region103: #{tpu_custom_call.1} parent=96 // pred_check_branch
              %1999 = sbr.rel (0) target = $region105
            $region104: #{tpu_custom_call.1} parent=96 // pred_region
              loop: start=0, step=1, limit=1
              $region106: #{tpu_custom_call.1} parent=104 // loop_pre_header
                _
              $region107: #{tpu_custom_call.1} parent=104 // loop_header
                %s2002 = sphi 0, %s2006
                %p2003 = scmp.ge.s32.totalorder %s2002, 1
                %s2007 = sphi %s1682, %s1682
                %s2008 = sphi %s1993, %s1993
              $region108: #{tpu_custom_call.1} parent=104 // loop_header_branch
                %2005 = sbr.rel (%p2003) target = $region112
              $region109: #{tpu_custom_call.1} parent=104 // loop_body
                %v2009 = vld [vmem:[%s2007] sm:$0xf]
                %2010 = vst [vmem:[%s2008] sm:$0xf] %v2009
                %v2011 = vld [vmem:[%s2007 + $0x4] sm:$0xf]
                %2012 = vst [vmem:[%s2008 + $0x4] sm:$0xf] %v2011
                %v2013 = vld [vmem:[%s2007 + $0x8] sm:$0xf]
                %2014 = vst [vmem:[%s2008 + $0x8] sm:$0xf] %v2013
                %v2015 = vld [vmem:[%s2007 + $0xc] sm:$0xf]
                %2016 = vst [vmem:[%s2008 + $0xc] sm:$0xf] %v2015
                %v2017 = vld [vmem:[%s2007 + $0x10] sm:$0xf]
                %2018 = vst [vmem:[%s2008 + $0x10] sm:$0xf] %v2017
                %v2019 = vld [vmem:[%s2007 + $0x14] sm:$0xf]
                %2020 = vst [vmem:[%s2008 + $0x14] sm:$0xf] %v2019
                %v2021 = vld [vmem:[%s2007 + $0x18] sm:$0xf]
                %2022 = vst [vmem:[%s2008 + $0x18] sm:$0xf] %v2021
                %v2023 = vld [vmem:[%s2007 + $0x1c] sm:$0xf]
                %2024 = vst [vmem:[%s2008 + $0x1c] sm:$0xf] %v2023
                %v2025 = vld [vmem:[%s2007 + $0x20] sm:$0xf]
                %2026 = vst [vmem:[%s2008 + $0x20] sm:$0xf] %v2025
                %v2027 = vld [vmem:[%s2007 + $0x24] sm:$0xf]
                %2028 = vst [vmem:[%s2008 + $0x24] sm:$0xf] %v2027
                %v2029 = vld [vmem:[%s2007 + $0x28] sm:$0xf]
                %2030 = vst [vmem:[%s2008 + $0x28] sm:$0xf] %v2029
                %v2031 = vld [vmem:[%s2007 + $0x2c] sm:$0xf]
                %2032 = vst [vmem:[%s2008 + $0x2c] sm:$0xf] %v2031
                %v2033 = vld [vmem:[%s2007 + $0x30] sm:$0xf]
                %2034 = vst [vmem:[%s2008 + $0x30] sm:$0xf] %v2033
                %v2035 = vld [vmem:[%s2007 + $0x34] sm:$0xf]
                %2036 = vst [vmem:[%s2008 + $0x34] sm:$0xf] %v2035
                %v2037 = vld [vmem:[%s2007 + $0x38] sm:$0xf]
                %2038 = vst [vmem:[%s2008 + $0x38] sm:$0xf] %v2037
                %v2039 = vld [vmem:[%s2007 + $0x3c] sm:$0xf]
                %2040 = vst [vmem:[%s2008 + $0x3c] sm:$0xf] %v2039
                %v2041 = vld [vmem:[%s2007 + $0x40] sm:$0xf]
                %2042 = vst [vmem:[%s2008 + $0x80] sm:$0xf] %v2041
                %v2043 = vld [vmem:[%s2007 + $0x44] sm:$0xf]
                %2044 = vst [vmem:[%s2008 + $0x84] sm:$0xf] %v2043
                %v2045 = vld [vmem:[%s2007 + $0x48] sm:$0xf]
                %2046 = vst [vmem:[%s2008 + $0x88] sm:$0xf] %v2045
                %v2047 = vld [vmem:[%s2007 + $0x4c] sm:$0xf]
                %2048 = vst [vmem:[%s2008 + $0x8c] sm:$0xf] %v2047
                %v2049 = vld [vmem:[%s2007 + $0x50] sm:$0xf]
                %2050 = vst [vmem:[%s2008 + $0x90] sm:$0xf] %v2049
                %v2051 = vld [vmem:[%s2007 + $0x54] sm:$0xf]
                %2052 = vst [vmem:[%s2008 + $0x94] sm:$0xf] %v2051
                %v2053 = vld [vmem:[%s2007 + $0x58] sm:$0xf]
                %2054 = vst [vmem:[%s2008 + $0x98] sm:$0xf] %v2053
                %v2055 = vld [vmem:[%s2007 + $0x5c] sm:$0xf]
                %2056 = vst [vmem:[%s2008 + $0x9c] sm:$0xf] %v2055
                %v2057 = vld [vmem:[%s2007 + $0x60] sm:$0xf]
                %2058 = vst [vmem:[%s2008 + $0xa0] sm:$0xf] %v2057
                %v2059 = vld [vmem:[%s2007 + $0x64] sm:$0xf]
                %2060 = vst [vmem:[%s2008 + $0xa4] sm:$0xf] %v2059
                %v2061 = vld [vmem:[%s2007 + $0x68] sm:$0xf]
                %2062 = vst [vmem:[%s2008 + $0xa8] sm:$0xf] %v2061
                %v2063 = vld [vmem:[%s2007 + $0x6c] sm:$0xf]
                %2064 = vst [vmem:[%s2008 + $0xac] sm:$0xf] %v2063
                %v2065 = vld [vmem:[%s2007 + $0x70] sm:$0xf]
                %2066 = vst [vmem:[%s2008 + $0xb0] sm:$0xf] %v2065
                %v2067 = vld [vmem:[%s2007 + $0x74] sm:$0xf]
                %2068 = vst [vmem:[%s2008 + $0xb4] sm:$0xf] %v2067
                %v2069 = vld [vmem:[%s2007 + $0x78] sm:$0xf]
                %2070 = vst [vmem:[%s2008 + $0xb8] sm:$0xf] %v2069
                %v2071 = vld [vmem:[%s2007 + $0x7c] sm:$0xf]
                %2072 = vst [vmem:[%s2008 + $0xbc] sm:$0xf] %v2071
                %v2073 = vld [vmem:[%s2007 + $0x80] sm:$0xf]
                %2074 = vst [vmem:[%s2008 + $0x100] sm:$0xf] %v2073
                %v2075 = vld [vmem:[%s2007 + $0x84] sm:$0xf]
                %2076 = vst [vmem:[%s2008 + $0x104] sm:$0xf] %v2075
                %v2077 = vld [vmem:[%s2007 + $0x88] sm:$0xf]
                %2078 = vst [vmem:[%s2008 + $0x108] sm:$0xf] %v2077
                %v2079 = vld [vmem:[%s2007 + $0x8c] sm:$0xf]
                %2080 = vst [vmem:[%s2008 + $0x10c] sm:$0xf] %v2079
                %v2081 = vld [vmem:[%s2007 + $0x90] sm:$0xf]
                %2082 = vst [vmem:[%s2008 + $0x110] sm:$0xf] %v2081
                %v2083 = vld [vmem:[%s2007 + $0x94] sm:$0xf]
                %2084 = vst [vmem:[%s2008 + $0x114] sm:$0xf] %v2083
                %v2085 = vld [vmem:[%s2007 + $0x98] sm:$0xf]
                %2086 = vst [vmem:[%s2008 + $0x118] sm:$0xf] %v2085
                %v2087 = vld [vmem:[%s2007 + $0x9c] sm:$0xf]
                %2088 = vst [vmem:[%s2008 + $0x11c] sm:$0xf] %v2087
                %v2089 = vld [vmem:[%s2007 + $0xa0] sm:$0xf]
                %2090 = vst [vmem:[%s2008 + $0x120] sm:$0xf] %v2089
                %v2091 = vld [vmem:[%s2007 + $0xa4] sm:$0xf]
                %2092 = vst [vmem:[%s2008 + $0x124] sm:$0xf] %v2091
                %v2093 = vld [vmem:[%s2007 + $0xa8] sm:$0xf]
                %2094 = vst [vmem:[%s2008 + $0x128] sm:$0xf] %v2093
                %v2095 = vld [vmem:[%s2007 + $0xac] sm:$0xf]
                %2096 = vst [vmem:[%s2008 + $0x12c] sm:$0xf] %v2095
                %v2097 = vld [vmem:[%s2007 + $0xb0] sm:$0xf]
                %2098 = vst [vmem:[%s2008 + $0x130] sm:$0xf] %v2097
                %v2099 = vld [vmem:[%s2007 + $0xb4] sm:$0xf]
                %2100 = vst [vmem:[%s2008 + $0x134] sm:$0xf] %v2099
                %v2101 = vld [vmem:[%s2007 + $0xb8] sm:$0xf]
                %2102 = vst [vmem:[%s2008 + $0x138] sm:$0xf] %v2101
                %v2103 = vld [vmem:[%s2007 + $0xbc] sm:$0xf]
                %2104 = vst [vmem:[%s2008 + $0x13c] sm:$0xf] %v2103
                %v2105 = vld [vmem:[%s2007 + $0xc0] sm:$0xf]
                %2106 = vst [vmem:[%s2008 + $0x180] sm:$0xf] %v2105
                %v2107 = vld [vmem:[%s2007 + $0xc4] sm:$0xf]
                %2108 = vst [vmem:[%s2008 + $0x184] sm:$0xf] %v2107
                %v2109 = vld [vmem:[%s2007 + $0xc8] sm:$0xf]
                %2110 = vst [vmem:[%s2008 + $0x188] sm:$0xf] %v2109
                %v2111 = vld [vmem:[%s2007 + $0xcc] sm:$0xf]
                %2112 = vst [vmem:[%s2008 + $0x18c] sm:$0xf] %v2111
                %v2113 = vld [vmem:[%s2007 + $0xd0] sm:$0xf]
                %2114 = vst [vmem:[%s2008 + $0x190] sm:$0xf] %v2113
                %v2115 = vld [vmem:[%s2007 + $0xd4] sm:$0xf]
                %2116 = vst [vmem:[%s2008 + $0x194] sm:$0xf] %v2115
                %v2117 = vld [vmem:[%s2007 + $0xd8] sm:$0xf]
                %2118 = vst [vmem:[%s2008 + $0x198] sm:$0xf] %v2117
                %v2119 = vld [vmem:[%s2007 + $0xdc] sm:$0xf]
                %2120 = vst [vmem:[%s2008 + $0x19c] sm:$0xf] %v2119
                %v2121 = vld [vmem:[%s2007 + $0xe0] sm:$0xf]
                %2122 = vst [vmem:[%s2008 + $0x1a0] sm:$0xf] %v2121
                %v2123 = vld [vmem:[%s2007 + $0xe4] sm:$0xf]
                %2124 = vst [vmem:[%s2008 + $0x1a4] sm:$0xf] %v2123
                %v2125 = vld [vmem:[%s2007 + $0xe8] sm:$0xf]
                %2126 = vst [vmem:[%s2008 + $0x1a8] sm:$0xf] %v2125
                %v2127 = vld [vmem:[%s2007 + $0xec] sm:$0xf]
                %2128 = vst [vmem:[%s2008 + $0x1ac] sm:$0xf] %v2127
                %v2129 = vld [vmem:[%s2007 + $0xf0] sm:$0xf]
                %2130 = vst [vmem:[%s2008 + $0x1b0] sm:$0xf] %v2129
                %v2131 = vld [vmem:[%s2007 + $0xf4] sm:$0xf]
                %2132 = vst [vmem:[%s2008 + $0x1b4] sm:$0xf] %v2131
                %v2133 = vld [vmem:[%s2007 + $0xf8] sm:$0xf]
                %2134 = vst [vmem:[%s2008 + $0x1b8] sm:$0xf] %v2133
                %v2135 = vld [vmem:[%s2007 + $0xfc] sm:$0xf]
                %2136 = vst [vmem:[%s2008 + $0x1bc] sm:$0xf] %v2135
              $region110: #{tpu_custom_call.1} parent=104 // loop_footer
                %s2006 = sadd.s32 1, %s2002
              $region111: #{tpu_custom_call.1} parent=104 // loop_footer_branch
                %2001 = sbr.rel target = $region107
              $region112: #{tpu_custom_call.1} parent=104 // loop_exit
                _
            $region105: #{tpu_custom_call.1} parent=96 // pred_fallthru
              _
          $region97: #{tpu_custom_call.1} parent=92 // pred_fallthru
            _
          %2284 = vnop
        $region93: #{tpu_custom_call.1} parent=39 // pred_fallthru
          _
        // Predicated region
        $region131: #{tpu_custom_call.1} parent=39 // pred_check
          %p2285 = pneg %p233
        $region132: #{tpu_custom_call.1} parent=39 // pred_check_branch
          %2287 = sbr.rel (%p2285) target = $region134
        $region133: #{tpu_custom_call.1} parent=39 // pred_region
          %s2288 = smul.u32 16, %s28
          %s2289 = smul.addr %s27, 128
          %s2290 = sadd.s32 %s2288, %s2289
          %s2291 = smul.addr %s2290, 4
          %s2292 = scalar_lea.vmem %s7, %s2291
          // Predicated region
          $region135: #{tpu_custom_call.1} parent=133 // pred_check
            _
          $region136: #{tpu_custom_call.1} parent=133 // pred_check_branch
            %2294 = sbr.rel (0) target = $region138
          $region137: #{tpu_custom_call.1} parent=133 // pred_region
            // Predicated region
            $region139: #{tpu_custom_call.1} parent=137 // pred_check
              _
            $region140: #{tpu_custom_call.1} parent=137 // pred_check_branch
              %2296 = sbr.rel target = $region142
            $region141: #{tpu_custom_call.1} parent=137 // pred_region
              // Predicated region
              $region154: #{tpu_custom_call.1} parent=141 // pred_check
                _
              $region155: #{tpu_custom_call.1} parent=141 // pred_check_branch
                %2437 = sbr.rel (0) target = $region157
              $region156: #{tpu_custom_call.1} parent=141 // pred_region
                loop: start=0, step=1, limit=1
                $region158: #{tpu_custom_call.1} parent=156 // loop_pre_header
                  _
                $region159: #{tpu_custom_call.1} parent=156 // loop_header
                  %s2439 = sphi 0, %s2443
                  %p2440 = scmp.ge.s32.totalorder %s2439, 1
                  %s2444 = sphi %s1686, %s1686
                  %s2445 = sphi %s2292, %s2292
                $region160: #{tpu_custom_call.1} parent=156 // loop_header_branch
                  %2442 = sbr.rel (%p2440) target = $region164
                $region161: #{tpu_custom_call.1} parent=156 // loop_body
                  _
                $region162: #{tpu_custom_call.1} parent=156 // loop_footer
                  %s2443 = sadd.s32 1, %s2439
                $region163: #{tpu_custom_call.1} parent=156 // loop_footer_branch
                  %2438 = sbr.rel target = $region159
                $region164: #{tpu_custom_call.1} parent=156 // loop_exit
                  _
                loop: start=0, step=1, limit=1
                $region165: #{tpu_custom_call.1} parent=156 // loop_pre_header
                  _
                $region166: #{tpu_custom_call.1} parent=156 // loop_header
                  %s2448 = sphi 0, %s2452
                  %p2449 = scmp.ge.s32.totalorder %s2448, 1
                  %s2453 = sphi %s1686, %s1686
                  %s2454 = sphi %s2292, %s2292
                $region167: #{tpu_custom_call.1} parent=156 // loop_header_branch
                  %2451 = sbr.rel (%p2449) target = $region171
                $region168: #{tpu_custom_call.1} parent=156 // loop_body
                  %v2455 = vld [vmem:[%s2453] sm:$0xf]
                  %2456 = vst [vmem:[%s2454] sm:$0xf] %v2455
                  %v2457 = vld [vmem:[%s2453 + $0x4] sm:$0xf]
                  %2458 = vst [vmem:[%s2454 + $0x4] sm:$0xf] %v2457
                  %v2459 = vld [vmem:[%s2453 + $0x8] sm:$0xf]
                  %2460 = vst [vmem:[%s2454 + $0x8] sm:$0xf] %v2459
                  %v2461 = vld [vmem:[%s2453 + $0xc] sm:$0xf]
                  %2462 = vst [vmem:[%s2454 + $0xc] sm:$0xf] %v2461
                  %v2463 = vld [vmem:[%s2453 + $0x10] sm:$0xf]
                  %2464 = vst [vmem:[%s2454 + $0x10] sm:$0xf] %v2463
                  %v2465 = vld [vmem:[%s2453 + $0x14] sm:$0xf]
                  %2466 = vst [vmem:[%s2454 + $0x14] sm:$0xf] %v2465
                  %v2467 = vld [vmem:[%s2453 + $0x18] sm:$0xf]
                  %2468 = vst [vmem:[%s2454 + $0x18] sm:$0xf] %v2467
                  %v2469 = vld [vmem:[%s2453 + $0x1c] sm:$0xf]
                  %2470 = vst [vmem:[%s2454 + $0x1c] sm:$0xf] %v2469
                  %v2471 = vld [vmem:[%s2453 + $0x20] sm:$0xf]
                  %2472 = vst [vmem:[%s2454 + $0x20] sm:$0xf] %v2471
                  %v2473 = vld [vmem:[%s2453 + $0x24] sm:$0xf]
                  %2474 = vst [vmem:[%s2454 + $0x24] sm:$0xf] %v2473
                  %v2475 = vld [vmem:[%s2453 + $0x28] sm:$0xf]
                  %2476 = vst [vmem:[%s2454 + $0x28] sm:$0xf] %v2475
                  %v2477 = vld [vmem:[%s2453 + $0x2c] sm:$0xf]
                  %2478 = vst [vmem:[%s2454 + $0x2c] sm:$0xf] %v2477
                  %v2479 = vld [vmem:[%s2453 + $0x30] sm:$0xf]
                  %2480 = vst [vmem:[%s2454 + $0x30] sm:$0xf] %v2479
                  %v2481 = vld [vmem:[%s2453 + $0x34] sm:$0xf]
                  %2482 = vst [vmem:[%s2454 + $0x34] sm:$0xf] %v2481
                  %v2483 = vld [vmem:[%s2453 + $0x38] sm:$0xf]
                  %2484 = vst [vmem:[%s2454 + $0x38] sm:$0xf] %v2483
                  %v2485 = vld [vmem:[%s2453 + $0x3c] sm:$0xf]
                  %2486 = vst [vmem:[%s2454 + $0x3c] sm:$0xf] %v2485
                  %v2487 = vld [vmem:[%s2453 + $0x40] sm:$0xf]
                  %2488 = vst [vmem:[%s2454 + $0x80] sm:$0xf] %v2487
                  %v2489 = vld [vmem:[%s2453 + $0x44] sm:$0xf]
                  %2490 = vst [vmem:[%s2454 + $0x84] sm:$0xf] %v2489
                  %v2491 = vld [vmem:[%s2453 + $0x48] sm:$0xf]
                  %2492 = vst [vmem:[%s2454 + $0x88] sm:$0xf] %v2491
                  %v2493 = vld [vmem:[%s2453 + $0x4c] sm:$0xf]
                  %2494 = vst [vmem:[%s2454 + $0x8c] sm:$0xf] %v2493
                  %v2495 = vld [vmem:[%s2453 + $0x50] sm:$0xf]
                  %2496 = vst [vmem:[%s2454 + $0x90] sm:$0xf] %v2495
                  %v2497 = vld [vmem:[%s2453 + $0x54] sm:$0xf]
                  %2498 = vst [vmem:[%s2454 + $0x94] sm:$0xf] %v2497
                  %v2499 = vld [vmem:[%s2453 + $0x58] sm:$0xf]
                  %2500 = vst [vmem:[%s2454 + $0x98] sm:$0xf] %v2499
                  %v2501 = vld [vmem:[%s2453 + $0x5c] sm:$0xf]
                  %2502 = vst [vmem:[%s2454 + $0x9c] sm:$0xf] %v2501
                  %v2503 = vld [vmem:[%s2453 + $0x60] sm:$0xf]
                  %2504 = vst [vmem:[%s2454 + $0xa0] sm:$0xf] %v2503
                  %v2505 = vld [vmem:[%s2453 + $0x64] sm:$0xf]
                  %2506 = vst [vmem:[%s2454 + $0xa4] sm:$0xf] %v2505
                  %v2507 = vld [vmem:[%s2453 + $0x68] sm:$0xf]
                  %2508 = vst [vmem:[%s2454 + $0xa8] sm:$0xf] %v2507
                  %v2509 = vld [vmem:[%s2453 + $0x6c] sm:$0xf]
                  %2510 = vst [vmem:[%s2454 + $0xac] sm:$0xf] %v2509
                  %v2511 = vld [vmem:[%s2453 + $0x70] sm:$0xf]
                  %2512 = vst [vmem:[%s2454 + $0xb0] sm:$0xf] %v2511
                  %v2513 = vld [vmem:[%s2453 + $0x74] sm:$0xf]
                  %2514 = vst [vmem:[%s2454 + $0xb4] sm:$0xf] %v2513
                  %v2515 = vld [vmem:[%s2453 + $0x78] sm:$0xf]
                  %2516 = vst [vmem:[%s2454 + $0xb8] sm:$0xf] %v2515
                  %v2517 = vld [vmem:[%s2453 + $0x7c] sm:$0xf]
                  %2518 = vst [vmem:[%s2454 + $0xbc] sm:$0xf] %v2517
                  %v2519 = vld [vmem:[%s2453 + $0x80] sm:$0xf]
                  %2520 = vst [vmem:[%s2454 + $0x100] sm:$0xf] %v2519
                  %v2521 = vld [vmem:[%s2453 + $0x84] sm:$0xf]
                  %2522 = vst [vmem:[%s2454 + $0x104] sm:$0xf] %v2521
                  %v2523 = vld [vmem:[%s2453 + $0x88] sm:$0xf]
                  %2524 = vst [vmem:[%s2454 + $0x108] sm:$0xf] %v2523
                  %v2525 = vld [vmem:[%s2453 + $0x8c] sm:$0xf]
                  %2526 = vst [vmem:[%s2454 + $0x10c] sm:$0xf] %v2525
                  %v2527 = vld [vmem:[%s2453 + $0x90] sm:$0xf]
                  %2528 = vst [vmem:[%s2454 + $0x110] sm:$0xf] %v2527
                  %v2529 = vld [vmem:[%s2453 + $0x94] sm:$0xf]
                  %2530 = vst [vmem:[%s2454 + $0x114] sm:$0xf] %v2529
                  %v2531 = vld [vmem:[%s2453 + $0x98] sm:$0xf]
                  %2532 = vst [vmem:[%s2454 + $0x118] sm:$0xf] %v2531
                  %v2533 = vld [vmem:[%s2453 + $0x9c] sm:$0xf]
                  %2534 = vst [vmem:[%s2454 + $0x11c] sm:$0xf] %v2533
                  %v2535 = vld [vmem:[%s2453 + $0xa0] sm:$0xf]
                  %2536 = vst [vmem:[%s2454 + $0x120] sm:$0xf] %v2535
                  %v2537 = vld [vmem:[%s2453 + $0xa4] sm:$0xf]
                  %2538 = vst [vmem:[%s2454 + $0x124] sm:$0xf] %v2537
                  %v2539 = vld [vmem:[%s2453 + $0xa8] sm:$0xf]
                  %2540 = vst [vmem:[%s2454 + $0x128] sm:$0xf] %v2539
                  %v2541 = vld [vmem:[%s2453 + $0xac] sm:$0xf]
                  %2542 = vst [vmem:[%s2454 + $0x12c] sm:$0xf] %v2541
                  %v2543 = vld [vmem:[%s2453 + $0xb0] sm:$0xf]
                  %2544 = vst [vmem:[%s2454 + $0x130] sm:$0xf] %v2543
                  %v2545 = vld [vmem:[%s2453 + $0xb4] sm:$0xf]
                  %2546 = vst [vmem:[%s2454 + $0x134] sm:$0xf] %v2545
                  %v2547 = vld [vmem:[%s2453 + $0xb8] sm:$0xf]
                  %2548 = vst [vmem:[%s2454 + $0x138] sm:$0xf] %v2547
                  %v2549 = vld [vmem:[%s2453 + $0xbc] sm:$0xf]
                  %2550 = vst [vmem:[%s2454 + $0x13c] sm:$0xf] %v2549
                  %v2551 = vld [vmem:[%s2453 + $0xc0] sm:$0xf]
                  %2552 = vst [vmem:[%s2454 + $0x180] sm:$0xf] %v2551
                  %v2553 = vld [vmem:[%s2453 + $0xc4] sm:$0xf]
                  %2554 = vst [vmem:[%s2454 + $0x184] sm:$0xf] %v2553
                  %v2555 = vld [vmem:[%s2453 + $0xc8] sm:$0xf]
                  %2556 = vst [vmem:[%s2454 + $0x188] sm:$0xf] %v2555
                  %v2557 = vld [vmem:[%s2453 + $0xcc] sm:$0xf]
                  %2558 = vst [vmem:[%s2454 + $0x18c] sm:$0xf] %v2557
                  %v2559 = vld [vmem:[%s2453 + $0xd0] sm:$0xf]
                  %2560 = vst [vmem:[%s2454 + $0x190] sm:$0xf] %v2559
                  %v2561 = vld [vmem:[%s2453 + $0xd4] sm:$0xf]
                  %2562 = vst [vmem:[%s2454 + $0x194] sm:$0xf] %v2561
                  %v2563 = vld [vmem:[%s2453 + $0xd8] sm:$0xf]
                  %2564 = vst [vmem:[%s2454 + $0x198] sm:$0xf] %v2563
                  %v2565 = vld [vmem:[%s2453 + $0xdc] sm:$0xf]
                  %2566 = vst [vmem:[%s2454 + $0x19c] sm:$0xf] %v2565
                  %v2567 = vld [vmem:[%s2453 + $0xe0] sm:$0xf]
                  %2568 = vst [vmem:[%s2454 + $0x1a0] sm:$0xf] %v2567
                  %v2569 = vld [vmem:[%s2453 + $0xe4] sm:$0xf]
                  %2570 = vst [vmem:[%s2454 + $0x1a4] sm:$0xf] %v2569
                  %v2571 = vld [vmem:[%s2453 + $0xe8] sm:$0xf]
                  %2572 = vst [vmem:[%s2454 + $0x1a8] sm:$0xf] %v2571
                  %v2573 = vld [vmem:[%s2453 + $0xec] sm:$0xf]
                  %2574 = vst [vmem:[%s2454 + $0x1ac] sm:$0xf] %v2573
                  %v2575 = vld [vmem:[%s2453 + $0xf0] sm:$0xf]
                  %2576 = vst [vmem:[%s2454 + $0x1b0] sm:$0xf] %v2575
                  %v2577 = vld [vmem:[%s2453 + $0xf4] sm:$0xf]
                  %2578 = vst [vmem:[%s2454 + $0x1b4] sm:$0xf] %v2577
                  %v2579 = vld [vmem:[%s2453 + $0xf8] sm:$0xf]
                  %2580 = vst [vmem:[%s2454 + $0x1b8] sm:$0xf] %v2579
                  %v2581 = vld [vmem:[%s2453 + $0xfc] sm:$0xf]
                  %2582 = vst [vmem:[%s2454 + $0x1bc] sm:$0xf] %v2581
                $region169: #{tpu_custom_call.1} parent=156 // loop_footer
                  %s2452 = sadd.s32 1, %s2448
                $region170: #{tpu_custom_call.1} parent=156 // loop_footer_branch
                  %2447 = sbr.rel target = $region166
                $region171: #{tpu_custom_call.1} parent=156 // loop_exit
                  _
              $region157: #{tpu_custom_call.1} parent=141 // pred_fallthru
                _
            $region142: #{tpu_custom_call.1} parent=137 // pred_fallthru
              _
            // Predicated region
            $region143: #{tpu_custom_call.1} parent=137 // pred_check
              _
            $region144: #{tpu_custom_call.1} parent=137 // pred_check_branch
              %2298 = sbr.rel (0) target = $region146
            $region145: #{tpu_custom_call.1} parent=137 // pred_region
              loop: start=0, step=1, limit=1
              $region147: #{tpu_custom_call.1} parent=145 // loop_pre_header
                _
              $region148: #{tpu_custom_call.1} parent=145 // loop_header
                %s2301 = sphi 0, %s2305
                %p2302 = scmp.ge.s32.totalorder %s2301, 1
                %s2306 = sphi %s1686, %s1686
                %s2307 = sphi %s2292, %s2292
              $region149: #{tpu_custom_call.1} parent=145 // loop_header_branch
                %2304 = sbr.rel (%p2302) target = $region153
              $region150: #{tpu_custom_call.1} parent=145 // loop_body
                %v2308 = vld [vmem:[%s2306] sm:$0xf]
                %2309 = vst [vmem:[%s2307] sm:$0xf] %v2308
                %v2310 = vld [vmem:[%s2306 + $0x4] sm:$0xf]
                %2311 = vst [vmem:[%s2307 + $0x4] sm:$0xf] %v2310
                %v2312 = vld [vmem:[%s2306 + $0x8] sm:$0xf]
                %2313 = vst [vmem:[%s2307 + $0x8] sm:$0xf] %v2312
                %v2314 = vld [vmem:[%s2306 + $0xc] sm:$0xf]
                %2315 = vst [vmem:[%s2307 + $0xc] sm:$0xf] %v2314
                %v2316 = vld [vmem:[%s2306 + $0x10] sm:$0xf]
                %2317 = vst [vmem:[%s2307 + $0x10] sm:$0xf] %v2316
                %v2318 = vld [vmem:[%s2306 + $0x14] sm:$0xf]
                %2319 = vst [vmem:[%s2307 + $0x14] sm:$0xf] %v2318
                %v2320 = vld [vmem:[%s2306 + $0x18] sm:$0xf]
                %2321 = vst [vmem:[%s2307 + $0x18] sm:$0xf] %v2320
                %v2322 = vld [vmem:[%s2306 + $0x1c] sm:$0xf]
                %2323 = vst [vmem:[%s2307 + $0x1c] sm:$0xf] %v2322
                %v2324 = vld [vmem:[%s2306 + $0x20] sm:$0xf]
                %2325 = vst [vmem:[%s2307 + $0x20] sm:$0xf] %v2324
                %v2326 = vld [vmem:[%s2306 + $0x24] sm:$0xf]
                %2327 = vst [vmem:[%s2307 + $0x24] sm:$0xf] %v2326
                %v2328 = vld [vmem:[%s2306 + $0x28] sm:$0xf]
                %2329 = vst [vmem:[%s2307 + $0x28] sm:$0xf] %v2328
                %v2330 = vld [vmem:[%s2306 + $0x2c] sm:$0xf]
                %2331 = vst [vmem:[%s2307 + $0x2c] sm:$0xf] %v2330
                %v2332 = vld [vmem:[%s2306 + $0x30] sm:$0xf]
                %2333 = vst [vmem:[%s2307 + $0x30] sm:$0xf] %v2332
                %v2334 = vld [vmem:[%s2306 + $0x34] sm:$0xf]
                %2335 = vst [vmem:[%s2307 + $0x34] sm:$0xf] %v2334
                %v2336 = vld [vmem:[%s2306 + $0x38] sm:$0xf]
                %2337 = vst [vmem:[%s2307 + $0x38] sm:$0xf] %v2336
                %v2338 = vld [vmem:[%s2306 + $0x3c] sm:$0xf]
                %2339 = vst [vmem:[%s2307 + $0x3c] sm:$0xf] %v2338
                %v2340 = vld [vmem:[%s2306 + $0x40] sm:$0xf]
                %2341 = vst [vmem:[%s2307 + $0x80] sm:$0xf] %v2340
                %v2342 = vld [vmem:[%s2306 + $0x44] sm:$0xf]
                %2343 = vst [vmem:[%s2307 + $0x84] sm:$0xf] %v2342
                %v2344 = vld [vmem:[%s2306 + $0x48] sm:$0xf]
                %2345 = vst [vmem:[%s2307 + $0x88] sm:$0xf] %v2344
                %v2346 = vld [vmem:[%s2306 + $0x4c] sm:$0xf]
                %2347 = vst [vmem:[%s2307 + $0x8c] sm:$0xf] %v2346
                %v2348 = vld [vmem:[%s2306 + $0x50] sm:$0xf]
                %2349 = vst [vmem:[%s2307 + $0x90] sm:$0xf] %v2348
                %v2350 = vld [vmem:[%s2306 + $0x54] sm:$0xf]
                %2351 = vst [vmem:[%s2307 + $0x94] sm:$0xf] %v2350
                %v2352 = vld [vmem:[%s2306 + $0x58] sm:$0xf]
                %2353 = vst [vmem:[%s2307 + $0x98] sm:$0xf] %v2352
                %v2354 = vld [vmem:[%s2306 + $0x5c] sm:$0xf]
                %2355 = vst [vmem:[%s2307 + $0x9c] sm:$0xf] %v2354
                %v2356 = vld [vmem:[%s2306 + $0x60] sm:$0xf]
                %2357 = vst [vmem:[%s2307 + $0xa0] sm:$0xf] %v2356
                %v2358 = vld [vmem:[%s2306 + $0x64] sm:$0xf]
                %2359 = vst [vmem:[%s2307 + $0xa4] sm:$0xf] %v2358
                %v2360 = vld [vmem:[%s2306 + $0x68] sm:$0xf]
                %2361 = vst [vmem:[%s2307 + $0xa8] sm:$0xf] %v2360
                %v2362 = vld [vmem:[%s2306 + $0x6c] sm:$0xf]
                %2363 = vst [vmem:[%s2307 + $0xac] sm:$0xf] %v2362
                %v2364 = vld [vmem:[%s2306 + $0x70] sm:$0xf]
                %2365 = vst [vmem:[%s2307 + $0xb0] sm:$0xf] %v2364
                %v2366 = vld [vmem:[%s2306 + $0x74] sm:$0xf]
                %2367 = vst [vmem:[%s2307 + $0xb4] sm:$0xf] %v2366
                %v2368 = vld [vmem:[%s2306 + $0x78] sm:$0xf]
                %2369 = vst [vmem:[%s2307 + $0xb8] sm:$0xf] %v2368
                %v2370 = vld [vmem:[%s2306 + $0x7c] sm:$0xf]
                %2371 = vst [vmem:[%s2307 + $0xbc] sm:$0xf] %v2370
                %v2372 = vld [vmem:[%s2306 + $0x80] sm:$0xf]
                %2373 = vst [vmem:[%s2307 + $0x100] sm:$0xf] %v2372
                %v2374 = vld [vmem:[%s2306 + $0x84] sm:$0xf]
                %2375 = vst [vmem:[%s2307 + $0x104] sm:$0xf] %v2374
                %v2376 = vld [vmem:[%s2306 + $0x88] sm:$0xf]
                %2377 = vst [vmem:[%s2307 + $0x108] sm:$0xf] %v2376
                %v2378 = vld [vmem:[%s2306 + $0x8c] sm:$0xf]
                %2379 = vst [vmem:[%s2307 + $0x10c] sm:$0xf] %v2378
                %v2380 = vld [vmem:[%s2306 + $0x90] sm:$0xf]
                %2381 = vst [vmem:[%s2307 + $0x110] sm:$0xf] %v2380
                %v2382 = vld [vmem:[%s2306 + $0x94] sm:$0xf]
                %2383 = vst [vmem:[%s2307 + $0x114] sm:$0xf] %v2382
                %v2384 = vld [vmem:[%s2306 + $0x98] sm:$0xf]
                %2385 = vst [vmem:[%s2307 + $0x118] sm:$0xf] %v2384
                %v2386 = vld [vmem:[%s2306 + $0x9c] sm:$0xf]
                %2387 = vst [vmem:[%s2307 + $0x11c] sm:$0xf] %v2386
                %v2388 = vld [vmem:[%s2306 + $0xa0] sm:$0xf]
                %2389 = vst [vmem:[%s2307 + $0x120] sm:$0xf] %v2388
                %v2390 = vld [vmem:[%s2306 + $0xa4] sm:$0xf]
                %2391 = vst [vmem:[%s2307 + $0x124] sm:$0xf] %v2390
                %v2392 = vld [vmem:[%s2306 + $0xa8] sm:$0xf]
                %2393 = vst [vmem:[%s2307 + $0x128] sm:$0xf] %v2392
                %v2394 = vld [vmem:[%s2306 + $0xac] sm:$0xf]
                %2395 = vst [vmem:[%s2307 + $0x12c] sm:$0xf] %v2394
                %v2396 = vld [vmem:[%s2306 + $0xb0] sm:$0xf]
                %2397 = vst [vmem:[%s2307 + $0x130] sm:$0xf] %v2396
                %v2398 = vld [vmem:[%s2306 + $0xb4] sm:$0xf]
                %2399 = vst [vmem:[%s2307 + $0x134] sm:$0xf] %v2398
                %v2400 = vld [vmem:[%s2306 + $0xb8] sm:$0xf]
                %2401 = vst [vmem:[%s2307 + $0x138] sm:$0xf] %v2400
                %v2402 = vld [vmem:[%s2306 + $0xbc] sm:$0xf]
                %2403 = vst [vmem:[%s2307 + $0x13c] sm:$0xf] %v2402
                %v2404 = vld [vmem:[%s2306 + $0xc0] sm:$0xf]
                %2405 = vst [vmem:[%s2307 + $0x180] sm:$0xf] %v2404
                %v2406 = vld [vmem:[%s2306 + $0xc4] sm:$0xf]
                %2407 = vst [vmem:[%s2307 + $0x184] sm:$0xf] %v2406
                %v2408 = vld [vmem:[%s2306 + $0xc8] sm:$0xf]
                %2409 = vst [vmem:[%s2307 + $0x188] sm:$0xf] %v2408
                %v2410 = vld [vmem:[%s2306 + $0xcc] sm:$0xf]
                %2411 = vst [vmem:[%s2307 + $0x18c] sm:$0xf] %v2410
                %v2412 = vld [vmem:[%s2306 + $0xd0] sm:$0xf]
                %2413 = vst [vmem:[%s2307 + $0x190] sm:$0xf] %v2412
                %v2414 = vld [vmem:[%s2306 + $0xd4] sm:$0xf]
                %2415 = vst [vmem:[%s2307 + $0x194] sm:$0xf] %v2414
                %v2416 = vld [vmem:[%s2306 + $0xd8] sm:$0xf]
                %2417 = vst [vmem:[%s2307 + $0x198] sm:$0xf] %v2416
                %v2418 = vld [vmem:[%s2306 + $0xdc] sm:$0xf]
                %2419 = vst [vmem:[%s2307 + $0x19c] sm:$0xf] %v2418
                %v2420 = vld [vmem:[%s2306 + $0xe0] sm:$0xf]
                %2421 = vst [vmem:[%s2307 + $0x1a0] sm:$0xf] %v2420
                %v2422 = vld [vmem:[%s2306 + $0xe4] sm:$0xf]
                %2423 = vst [vmem:[%s2307 + $0x1a4] sm:$0xf] %v2422
                %v2424 = vld [vmem:[%s2306 + $0xe8] sm:$0xf]
                %2425 = vst [vmem:[%s2307 + $0x1a8] sm:$0xf] %v2424
                %v2426 = vld [vmem:[%s2306 + $0xec] sm:$0xf]
                %2427 = vst [vmem:[%s2307 + $0x1ac] sm:$0xf] %v2426
                %v2428 = vld [vmem:[%s2306 + $0xf0] sm:$0xf]
                %2429 = vst [vmem:[%s2307 + $0x1b0] sm:$0xf] %v2428
                %v2430 = vld [vmem:[%s2306 + $0xf4] sm:$0xf]
                %2431 = vst [vmem:[%s2307 + $0x1b4] sm:$0xf] %v2430
                %v2432 = vld [vmem:[%s2306 + $0xf8] sm:$0xf]
                %2433 = vst [vmem:[%s2307 + $0x1b8] sm:$0xf] %v2432
                %v2434 = vld [vmem:[%s2306 + $0xfc] sm:$0xf]
                %2435 = vst [vmem:[%s2307 + $0x1bc] sm:$0xf] %v2434
              $region151: #{tpu_custom_call.1} parent=145 // loop_footer
                %s2305 = sadd.s32 1, %s2301
              $region152: #{tpu_custom_call.1} parent=145 // loop_footer_branch
                %2300 = sbr.rel target = $region148
              $region153: #{tpu_custom_call.1} parent=145 // loop_exit
                _
            $region146: #{tpu_custom_call.1} parent=137 // pred_fallthru
              _
          $region138: #{tpu_custom_call.1} parent=133 // pred_fallthru
            _
          %2583 = vnop
        $region134: #{tpu_custom_call.1} parent=39 // pred_fallthru
          _
      $region40: #{tpu_custom_call.1} parent=5 // pred_fallthru
        _
      %p2584 = scmp.le.s32.totalorder 2, %s18
      // Predicated region
      $region172: #{tpu_custom_call.1} parent=5 // pred_check
        %p2585 = pneg %p2584
      $region173: #{tpu_custom_call.1} parent=5 // pred_check_branch
        %2587 = sbr.rel (%p2585) target = $region175
      $region174: #{tpu_custom_call.1} parent=5 // pred_region
        %s2588 = ssub.s32 %s18, 2
        // Predicated region
        $region176: #{tpu_custom_call.1} parent=174 // pred_check
          %p2589 = pneg %p183
        $region177: #{tpu_custom_call.1} parent=174 // pred_check_branch
          %2591 = sbr.rel (%p2589) target = $region179
        $region178: #{tpu_custom_call.1} parent=174 // pred_region
          %s2592 = sand.u32 %s168, 1
          %s2593 = sand.u32 %s168, 1
          %s2594 = smul.addr %s2593, 256
          %s2595 = scalar_lea.vmem [#allocation6], %s2594
        $region179: #{tpu_custom_call.1} parent=174 // pred_fallthru
          _
        // Predicated region
        $region180: #{tpu_custom_call.1} parent=174 // pred_check
          %p2596 = pneg %p211
        $region181: #{tpu_custom_call.1} parent=174 // pred_check_branch
          %2598 = sbr.rel (%p2596) target = $region183
        $region182: #{tpu_custom_call.1} parent=174 // pred_region
          %s2599 = sand.u32 %s196, 1
          %s2600 = sand.u32 %s196, 1
          %s2601 = smul.addr %s2600, 256
          %s2602 = scalar_lea.vmem [#allocation7], %s2601
        $region183: #{tpu_custom_call.1} parent=174 // pred_fallthru
          _
        // Predicated region
        $region184: #{tpu_custom_call.1} parent=174 // pred_check
          %p2603 = pneg %p239
        $region185: #{tpu_custom_call.1} parent=174 // pred_check_branch
          %2605 = sbr.rel (%p2603) target = $region187
        $region186: #{tpu_custom_call.1} parent=174 // pred_region
          %s2606 = sand.u32 %s224, 1
          %s2607 = sand.u32 %s224, 1
          %s2608 = smul.addr %s2607, 256
          %s2609 = scalar_lea.vmem [#allocation8], %s2608
        $region187: #{tpu_custom_call.1} parent=174 // pred_fallthru
          _
      $region175: #{tpu_custom_call.1} parent=5 // pred_fallthru
        _
    $region6: #{tpu_custom_call.1} parent=1 // loop_footer
      %s22 = sadd.s32 1, %s18
    $region7: #{tpu_custom_call.1} parent=1 // loop_footer_branch
      %17 = sbr.rel target = $region3
    $region8: #{tpu_custom_call.1} parent=1 // loop_exit
      _
    %2610 = vsyncpa [#allocation3], 1
    %s2611 = scalar_lea.sflag [#allocation3], 1
    %2612 = vsyncpa %s2611, 1
    %2613 = vsyncpa [#allocation5], 1

</llo_original>
